<compile_context>
chip_gen: v7x
topology: tpu7x:2x2x1
jax: 0.10.0
libtpu: 0.0.40
codegen_flags: <defaults>
</compile_context>

<pallas_src>
import functools

import jax
import jax.numpy as jnp
import numpy as np
from jax import lax
from jax.experimental import pallas as pl
from jax.experimental.pallas import tpu as pltpu

BN_EPS = 1e-5
NEG_SLOPE = 0.01  # F.leaky_relu default negative_slope
LANE = 128


def _round_up(x, m):
    return (x + m - 1) // m * m


def _pick_row_tile(rows, row_width, target_m):
    """Largest divisor of `rows` whose tile has at most ~target_m GEMM rows."""
    best = 1
    for tm in range(1, rows + 1):
        if rows % tm == 0 and tm * row_width <= target_m:
            best = tm
    return best


def _vmem_limit_bytes(est_bytes):
    """Generation-aware scoped-VMEM limit (v5e/v6e: 128 MiB, v7x: 64 MiB)."""
    try:
        cap = int(pltpu.get_tpu_info().vmem_capacity_bytes)
    except Exception:  # no TPU info available -> conservative default
        cap = 64 * 1024 * 1024
    ceiling = cap - cap // 8                  # ~12.5% headroom for Mosaic
    want = max(est_bytes + (4 << 20), 16 << 20)
    return int(max(min(ceiling, want), 1 << 20))


# ----------------------------- Pallas kernel --------------------------------

def _make_resnet_conv_kernel(Ho, Wo, Kp, Fb, tm_a, tm_b, neg_slope):
    """Fused: [conv1||conv3] (tap-packed K) -> conv2 + residual + leaky_relu.

    Refs per grid step (one batch element):
      x_ref      : (1, Ho, PW, Kp)  tap-packed patches (W padded by the conv2 halo)
      w13_ref    : (Kp, 2*Fb)       scale-folded [shortcut | branch] weights
      shift13_ref: (1, 2*Fb) f32    folded BN shifts
      w2_ref     : (9, Fb, Fb)      scale-folded conv2 weights (per tap)
      shift2_ref : (1, Fb) f32
      o_ref      : (1, Ho, Wo, Fb)  f32 output
      br_ref     : (Ho+2, PW, Fb)   bf16 branch scratch with zero halo
      sc_ref     : (Ho, PW, Fb)     f32 shortcut scratch
    """
    PW = Wo + 2
    n_a = Ho // tm_a
    n_b = Ho // tm_b

    def kernel(x_ref, w13_ref, shift13_ref, w2_ref, shift2_ref,
               o_ref, br_ref, sc_ref):
        # Zero the top/bottom halo rows of the branch scratch (cheap; done on
        # every grid step so it is megacore / grid-partition safe).
        zrow = jnp.zeros((1, PW, Fb), br_ref.dtype)
        br_ref[0:1, :, :] = zrow
        br_ref[Ho + 1:Ho + 2, :, :] = zrow

        w13 = w13_ref[...]                        # (Kp, 2*Fb) bf16, hoisted
        shift13 = shift13_ref[...]                # (1, 2*Fb)  f32
        # Mask that zeroes the left/right halo columns of the branch tile.
        col = lax.broadcasted_iota(jnp.int32, (tm_a, PW, Fb), 1)
        keep = (col > 0) & (col <= Wo)

        # ---------- phase A: fused conv1 || conv3 (one GEMM, N = 2*Fb) -------
        def phase_a(t, carry):
            r0 = pl.multiple_of(t * tm_a, tm_a)
            xt = x_ref[0, pl.ds(r0, tm_a), :, :].reshape(tm_a * PW, Kp)
            y = jnp.dot(xt, w13, preferred_element_type=jnp.float32) + shift13
            # shortcut = bn3(conv3(x)): stays f32, no activation.
            sc_ref[pl.ds(r0, tm_a), :, :] = y[:, :Fb].reshape(tm_a, PW, Fb)
            # branch = lrelu(bn1(conv1(x))): bf16, halo columns forced to 0.
            br = y[:, Fb:]
            br = jnp.where(br > 0, br, neg_slope * br)
            br = jnp.where(keep, br.reshape(tm_a, PW, Fb), 0.0)
            br_ref[pl.ds(1 + r0, tm_a), :, :] = br.astype(br_ref.dtype)
            return carry

        lax.fori_loop(0, n_a, phase_a, 0, unroll=n_a <= 4)

        shift2 = shift2_ref[...]                  # (1, Fb) f32

        # ---------- phase B: conv2 + bn2 + shortcut add + leaky_relu ---------
        def phase_b(t, carry):
            r0 = pl.multiple_of(t * tm_b, tm_b)
            acc = jnp.zeros((tm_b * Wo, Fb), jnp.float32)
            for dh in range(3):
                for dw in range(3):
                    slab = br_ref[pl.ds(r0 + dh, tm_b), dw:dw + Wo, :]
                    acc = acc + jnp.dot(slab.reshape(tm_b * Wo, Fb),
                                        w2_ref[3 * dh + dw],
                                        preferred_element_type=jnp.float32)
            res = sc_ref[pl.ds(r0, tm_b), 1:1 + Wo, :].reshape(tm_b * Wo, Fb)
            y = acc + shift2 + res
            y = jnp.where(y > 0, y, neg_slope * y)
            o_ref[0, pl.ds(r0, tm_b), :, :] = (
                y.reshape(tm_b, Wo, Fb).astype(o_ref.dtype))
            return carry

        lax.fori_loop(0, n_b, phase_b, 0, unroll=n_b <= 4)

    return kernel


# ------------------------------- JAX glue ------------------------------------

def _fold_bn(conv_bias, gamma, beta, mean, var):
    """Fold conv bias + inference-mode BN into per-channel (scale, shift)."""
    s = gamma / jnp.sqrt(var + BN_EPS)
    t = beta + (conv_bias - mean) * s
    return s, t


def _pack_taps_w(w_oihw, scale):
    """[F, Cin, 3, 3] -> tap-packed (9*Cin, F), BN scale folded in.
    K index = (3*dh + dw)*Cin + c  (must match the im2col channel order)."""
    F, Cin = w_oihw.shape[:2]
    w = jnp.transpose(w_oihw, (2, 3, 1, 0)).reshape(9 * Cin, F)
    return w * scale[None, :]


def resnet_conv_forward(x_nchw, p, stride=2, mxu_dtype=jnp.bfloat16):
    """Pallas implementation of ResNetConv.forward. Input/output are NCHW f32."""
    N, Cin, H, W = x_nchw.shape
    F = p["w1"].shape[0]
    Fb = _round_up(F, LANE)
    K = 9 * Cin
    Kp = _round_up(K, LANE)
    Ho = (H - 1) // stride + 1
    Wo = (W - 1) // stride + 1
    PW = Wo + 2

    # NHWC + bf16 BEFORE padding; spatial zero-pad of 1 for the 3x3 / pad=1 convs.
    x = jnp.transpose(x_nchw, (0, 2, 3, 1)).astype(mxu_dtype)
    xp = jnp.pad(x, ((0, 0), (1, 1), (1, 1), (0, 0)))
    # Tap-packed ("small-Cin im2col") patches; channel index = (3*dh+dw)*Cin + c.
    wins = [xp[:, dh:dh + (Ho - 1) * stride + 1:stride,
               dw:dw + (Wo - 1) * stride + 1:stride, :]
            for dh in range(3) for dw in range(3)]
    xcol = jnp.concatenate(wins, axis=-1)                  # (N, Ho, Wo, 9*Cin)
    # Pad W by the conv2 halo (so every in-kernel store is full-width/aligned)
    # and pad K once up to the lane width.
    xcol = jnp.pad(xcol, ((0, 0), (0, 0), (1, 1), (0, Kp - K)))

    s1, t1 = _fold_bn(p["b1"], *p["bn1"])
    s2, t2 = _fold_bn(p["b2"], *p["bn2"])
    s3, t3 = _fold_bn(p["b3"], *p["bn3"])

    # Fused conv3(shortcut) || conv1(branch): cols [0,Fb)=shortcut, [Fb,2Fb)=branch.
    def pad_kf(w):
        return jnp.pad(w, ((0, Kp - K), (0, Fb - F)))
    w13 = jnp.concatenate([pad_kf(_pack_taps_w(p["w3"], s3)),
                           pad_kf(_pack_taps_w(p["w1"], s1))],
                          axis=-1).astype(mxu_dtype)       # (Kp, 2*Fb)
    shift13 = jnp.concatenate([jnp.pad(t3, (0, Fb - F)),
                               jnp.pad(t1, (0, Fb - F))]).astype(jnp.float32)
    shift13 = shift13.reshape(1, 2 * Fb)

    # conv2 weights in per-tap layout (9, Fb, Fb): K rows >= F are zero, so the
    # padded branch columns can never leak into conv2 (keep this invariant!).
    w2 = (jnp.transpose(p["w2"], (2, 3, 1, 0)) * s2).reshape(9, F, F)
    w2p = jnp.zeros((9, Fb, Fb), jnp.float32).at[:, :F, :F].set(w2)
    w2p = w2p.astype(mxu_dtype)
    shift2 = jnp.pad(t2, (0, Fb - F)).astype(jnp.float32).reshape(1, Fb)

    # Row tiles: keep each GEMM tile's f32 accumulator ~<= 128 KiB.
    tm_a = _pick_row_tile(Ho, PW, (128 << 10) // (4 * 2 * Fb))
    tm_b = _pick_row_tile(Ho, Wo, (128 << 10) // (4 * Fb))

    bpe = jnp.dtype(mxu_dtype).itemsize
    est = (2 * Ho * PW * Kp * bpe               # im2col input blocks (x2 buf)
           + 2 * Kp * (2 * Fb) * bpe            # w13 (constant, x2 buf)
           + 2 * 9 * Fb * Fb * bpe              # w2  (constant, x2 buf)
           + 2 * Ho * Wo * Fb * 4               # f32 output blocks (x2 buf)
           + (Ho + 2) * PW * Fb * bpe           # padded branch scratch
           + Ho * PW * Fb * 4                   # f32 shortcut scratch
           + 8 * Fb * 4                         # shifts
           + 8 * max(tm_a * PW * 2 * Fb, tm_b * Wo * Fb) * 4)  # live GEMM tiles
    vmem_limit = _vmem_limit_bytes(int(est))

    out = pl.pallas_call(
        _make_resnet_conv_kernel(Ho, Wo, Kp, Fb, tm_a, tm_b, NEG_SLOPE),
        out_shape=jax.ShapeDtypeStruct((N, Ho, Wo, Fb), jnp.float32),
        grid=(N,),
        in_specs=[
            pl.BlockSpec((1, Ho, PW, Kp), lambda n: (n, 0, 0, 0)),
            pl.BlockSpec((Kp, 2 * Fb), lambda n: (0, 0)),
            pl.BlockSpec((1, 2 * Fb), lambda n: (0, 0)),
            pl.BlockSpec((9, Fb, Fb), lambda n: (0, 0, 0)),
            pl.BlockSpec((1, Fb), lambda n: (0, 0)),
        ],
        out_specs=pl.BlockSpec((1, Ho, Wo, Fb), lambda n: (n, 0, 0, 0)),
        scratch_shapes=[
            pltpu.VMEM((Ho + 2, PW, Fb), mxu_dtype),   # branch, zero halo
            pltpu.VMEM((Ho, PW, Fb), jnp.float32),     # f32 shortcut
        ],
        compiler_params=pltpu.CompilerParams(
            dimension_semantics=("parallel",),
            vmem_limit_bytes=vmem_limit),
    )(xcol, w13, shift13, w2p, shift2)

    return jnp.transpose(out[..., :F], (0, 3, 1, 2))       # back to NCHW


# ------------------------- pure-JAX reference (check) ------------------------

def ref_forward(x, p, stride=2):
    def conv(x, w, b, s):
        y = lax.conv_general_dilated(
            x, w, (s, s), ((1, 1), (1, 1)),
            dimension_numbers=("NCHW", "OIHW", "NCHW"),
            precision=lax.Precision.HIGHEST)
        return y + b[None, :, None, None]

    def bn(x, g, be, m, v):
        return ((x - m[None, :, None, None])
                / jnp.sqrt(v[None, :, None, None] + BN_EPS)
                * g[None, :, None, None] + be[None, :, None, None])

    def lrelu(z):
        return jnp.where(z > 0, z, NEG_SLOPE * z)

    h = lrelu(bn(conv(x, p["w1"], p["b1"], stride), *p["bn1"]))
    h = bn(conv(h, p["w2"], p["b2"], 1), *p["bn2"])
    sc = bn(conv(x, p["w3"], p["b3"], stride), *p["bn3"])
    return lrelu(h + sc)


# ---------------------------------- main -------------------------------------

if __name__ == "__main__":
    key = jax.random.PRNGKey(0)
    N, Cin, H, W = 2, 4, 16, 16
    F, stride = 8, 2

    ks = jax.random.split(key, 16)
    x = jax.random.normal(ks[0], (N, Cin, H, W), jnp.float32)

    def bn_params(k):
        kg, kb, km, kv = jax.random.split(k, 4)
        return (1.0 + 0.1 * jax.random.normal(kg, (F,), jnp.float32),           # gamma
                0.1 * jax.random.normal(kb, (F,), jnp.float32),                 # beta
                0.1 * jax.random.normal(km, (F,), jnp.float32),                 # running_mean
                1.0 + 0.1 * jnp.abs(jax.random.normal(kv, (F,), jnp.float32)))  # running_var

    params = {
        "w1": 0.1 * jax.random.normal(ks[1], (F, Cin, 3, 3), jnp.float32),
        "b1": 0.1 * jax.random.normal(ks[2], (F,), jnp.float32),
        "w2": 0.1 * jax.random.normal(ks[3], (F, F, 3, 3), jnp.float32),
        "b2": 0.1 * jax.random.normal(ks[4], (F,), jnp.float32),
        "w3": 0.1 * jax.random.normal(ks[5], (F, Cin, 3, 3), jnp.float32),
        "b3": 0.1 * jax.random.normal(ks[6], (F,), jnp.float32),
        "bn1": bn_params(ks[7]),
        "bn2": bn_params(ks[8]),
        "bn3": bn_params(ks[9]),
    }

    fwd = jax.jit(functools.partial(resnet_conv_forward, stride=stride))
    out = jax.block_until_ready(fwd(x, params))
    ref = jax.block_until_ready(ref_forward(x, params, stride))

    assert out.shape == (N, F, H // stride, W // stride), out.shape
    # bf16 MXU operands + one bf16 hop on the branch activation vs. a full-f32
    # HIGHEST-precision reference -> bf16-appropriate tolerance (structural /
    # semantic errors would show up as O(0.1..1) deviations).
    np.testing.assert_allclose(np.asarray(out), np.asarray(ref),
                               rtol=5e-2, atol=5e-2)
    print("KERNEL_OK")
</pallas_src>

<mosaic_0001>
module attributes {stable_mosaic.version = 11 : i64} {
  func.func @kernel(%arg0: i32, %arg1: memref<1x8x10x128xbf16, #tpu.memory_space<vmem>>, %arg2: memref<128x256xbf16, #tpu.memory_space<vmem>>, %arg3: memref<1x256xf32, #tpu.memory_space<vmem>>, %arg4: memref<9x128x128xbf16, #tpu.memory_space<vmem>>, %arg5: memref<1x128xf32, #tpu.memory_space<vmem>>, %arg6: memref<1x8x8x128xf32, #tpu.memory_space<vmem>>, %arg7: memref<10x10x128xbf16, #tpu.memory_space<vmem>>, %arg8: memref<8x10x128xf32, #tpu.memory_space<vmem>>) attributes {dimension_semantics = [#tpu.dimension_semantics<parallel>], iteration_bounds = array<i64: 2>, scalar_prefetch = 0 : i64, scratch_operands = 2 : i64, tpu.core_type = #tpu.core_type<tc>, window_params = [{transform_indices = @transform_0, window_bounds = array<i64: 1, 8, 10, 128>}, {pipeline_mode = #tpu.pipeline_mode<synchronous>, transform_indices = @transform_1, window_bounds = array<i64: 128, 256>}, {pipeline_mode = #tpu.pipeline_mode<synchronous>, transform_indices = @transform_2, window_bounds = array<i64: 1, 256>}, {pipeline_mode = #tpu.pipeline_mode<synchronous>, transform_indices = @transform_3, window_bounds = array<i64: 9, 128, 128>}, {pipeline_mode = #tpu.pipeline_mode<synchronous>, transform_indices = @transform_4, window_bounds = array<i64: 1, 128>}, {transform_indices = @transform_5, window_bounds = array<i64: 1, 8, 8, 128>}]} {
    %cst = arith.constant 0.000000e+00 : bf16
    %0 = vector.broadcast %cst : bf16 to vector<1x10x128xbf16>
    %c0 = arith.constant 0 : index
    %c0_0 = arith.constant 0 : index
    %c0_1 = arith.constant 0 : index
    %1 = vector.load %arg7[%c0, %c0_0, %c0_1] : memref<10x10x128xbf16, #tpu.memory_space<vmem>>, vector<1x10x128xbf16>
    tpu.vector_store %arg7[%c0, %c0_0, %c0_1], %0 {strides = array<i32>} : memref<10x10x128xbf16, #tpu.memory_space<vmem>>, vector<1x10x128xbf16>,
    %c9 = arith.constant 9 : index
    %c0_2 = arith.constant 0 : index
    %c0_3 = arith.constant 0 : index
    %2 = vector.load %arg7[%c9, %c0_2, %c0_3] : memref<10x10x128xbf16, #tpu.memory_space<vmem>>, vector<1x10x128xbf16>
    tpu.vector_store %arg7[%c9, %c0_2, %c0_3], %0 {strides = array<i32>} : memref<10x10x128xbf16, #tpu.memory_space<vmem>>, vector<1x10x128xbf16>,
    %c0_4 = arith.constant 0 : index
    %c0_5 = arith.constant 0 : index
    %3 = vector.load %arg2[%c0_4, %c0_5] : memref<128x256xbf16, #tpu.memory_space<vmem>>, vector<128x256xbf16>
    %c0_6 = arith.constant 0 : index
    %c0_7 = arith.constant 0 : index
    %4 = vector.load %arg3[%c0_6, %c0_7] : memref<1x256xf32, #tpu.memory_space<vmem>>, vector<1x256xf32>
    %5 = tpu.iota {dimensions = array<i32: 1>} : vector<8x10x128xi32>
    %c0_i32 = arith.constant 0 : i32
    %6 = vector.broadcast %c0_i32 : i32 to vector<8x10x128xi32>
    %7 = arith.cmpi sgt, %5, %6 : vector<8x10x128xi32>
    %c8_i32 = arith.constant 8 : i32
    %8 = vector.broadcast %c8_i32 : i32 to vector<8x10x128xi32>
    %9 = arith.cmpi sle, %5, %8 : vector<8x10x128xi32>
    %10 = arith.andi %7, %9 : vector<8x10x128xi1>
    %c0_i32_8 = arith.constant 0 : i32
    %c8_i32_9 = arith.constant 8 : i32
    %11 = arith.muli %c0_i32_8, %c8_i32_9 : i32
    %12 = tpu.assume_multiple %11, 8 : i32
    %c0_10 = arith.constant 0 : index
    %13 = arith.index_cast %12 : i32 to index
    %c0_11 = arith.constant 0 : index
    %c0_12 = arith.constant 0 : index
    %14 = vector.load %arg1[%c0_10, %13, %c0_11, %c0_12] : memref<1x8x10x128xbf16, #tpu.memory_space<vmem>>, vector<1x8x10x128xbf16>
    %15 = vector.shape_cast %14 : vector<1x8x10x128xbf16> to vector<8x10x128xbf16>
    %16 = vector.shape_cast %15 : vector<8x10x128xbf16> to vector<80x128xbf16>
    %cst_13 = arith.constant dense<0.000000e+00> : vector<80x256xf32>
    %17 = tpu.matmul %16, %3, %cst_13 {dimension_numbers = #tpu.dot_dimension_numbers<[1], [0], [0], [1], [0, 0, 1, 1], [], []>} : vector<80x128xbf16>, vector<128x256xbf16>, vector<80x256xf32> -> vector<80x256xf32>
    %18 = vector.broadcast %4 : vector<1x256xf32> to vector<80x256xf32>
    %19 = arith.addf %17, %18 : vector<80x256xf32>
    %20 = vector.extract_strided_slice %19 {offsets = [0, 0], sizes = [80, 128], strides = [1, 1]} : vector<80x256xf32> to vector<80x128xf32>
    %21 = vector.shape_cast %20 : vector<80x128xf32> to vector<8x10x128xf32>
    %22 = arith.index_cast %12 : i32 to index
    %c0_14 = arith.constant 0 : index
    %c0_15 = arith.constant 0 : index
    %23 = vector.load %arg8[%22, %c0_14, %c0_15] : memref<8x10x128xf32, #tpu.memory_space<vmem>>, vector<8x10x128xf32>
    tpu.vector_store %arg8[%22, %c0_14, %c0_15], %21 {strides = array<i32>} : memref<8x10x128xf32, #tpu.memory_space<vmem>>, vector<8x10x128xf32>,
    %24 = vector.extract_strided_slice %19 {offsets = [0, 128], sizes = [80, 128], strides = [1, 1]} : vector<80x256xf32> to vector<80x128xf32>
    %cst_16 = arith.constant 0.000000e+00 : f32
    %25 = vector.broadcast %cst_16 : f32 to vector<80x128xf32>
    %26 = arith.cmpf ogt, %24, %25 : vector<80x128xf32>
    %cst_17 = arith.constant 0.00999999977 : f32
    %27 = vector.broadcast %cst_17 : f32 to vector<80x128xf32>
    %28 = arith.mulf %27, %24 : vector<80x128xf32>
    %29 = arith.select %26, %24, %28 : vector<80x128xi1>, vector<80x128xf32>
    %30 = vector.shape_cast %29 : vector<80x128xf32> to vector<8x10x128xf32>
    %cst_18 = arith.constant 0.000000e+00 : f32
    %31 = vector.broadcast %cst_18 : f32 to vector<8x10x128xf32>
    %32 = arith.select %10, %30, %31 : vector<8x10x128xi1>, vector<8x10x128xf32>
    %33 = arith.truncf %32 : vector<8x10x128xf32> to vector<8x10x128xbf16>
    %c1_i32 = arith.constant 1 : i32
    %34 = arith.addi %c1_i32, %12 : i32
    %35 = arith.index_cast %34 : i32 to index
    %c0_19 = arith.constant 0 : index
    %c0_20 = arith.constant 0 : index
    %36 = vector.load %arg7[%35, %c0_19, %c0_20] : memref<10x10x128xbf16, #tpu.memory_space<vmem>>, vector<8x10x128xbf16>
    tpu.vector_store %arg7[%35, %c0_19, %c0_20], %33 {strides = array<i32>} : memref<10x10x128xbf16, #tpu.memory_space<vmem>>, vector<8x10x128xbf16>,
    %c1_i32_21 = arith.constant 1 : i32
    %c0_22 = arith.constant 0 : index
    %c0_23 = arith.constant 0 : index
    %37 = vector.load %arg5[%c0_22, %c0_23] : memref<1x128xf32, #tpu.memory_space<vmem>>, vector<1x128xf32>
    %c0_i32_24 = arith.constant 0 : i32
    %c8_i32_25 = arith.constant 8 : i32
    %38 = arith.muli %c0_i32_24, %c8_i32_25 : i32
    %39 = tpu.assume_multiple %38, 8 : i32
    %cst_26 = arith.constant 0.000000e+00 : f32
    %40 = vector.broadcast %cst_26 : f32 to vector<64x128xf32>
    %c0_i32_27 = arith.constant 0 : i32
    %41 = arith.addi %39, %c0_i32_27 : i32
    %42 = arith.index_cast %41 : i32 to index
    %c0_28 = arith.constant 0 : index
    %c0_29 = arith.constant 0 : index
    %43 = vector.load %arg7[%42, %c0_28, %c0_29] : memref<10x10x128xbf16, #tpu.memory_space<vmem>>, vector<8x8x128xbf16>
    %44 = vector.shape_cast %43 : vector<8x8x128xbf16> to vector<64x128xbf16>
    %c0_30 = arith.constant 0 : index
    %c0_31 = arith.constant 0 : index
    %c0_32 = arith.constant 0 : index
    %45 = vector.load %arg4[%c0_30, %c0_31, %c0_32] : memref<9x128x128xbf16, #tpu.memory_space<vmem>>, vector<1x128x128xbf16>
    %46 = vector.shape_cast %45 : vector<1x128x128xbf16> to vector<128x128xbf16>
    %cst_33 = arith.constant dense<0.000000e+00> : vector<64x128xf32>
    %47 = tpu.matmul %44, %46, %cst_33 {dimension_numbers = #tpu.dot_dimension_numbers<[1], [0], [0], [1], [0, 0, 1, 1], [], []>} : vector<64x128xbf16>, vector<128x128xbf16>, vector<64x128xf32> -> vector<64x128xf32>
    %48 = arith.addf %40, %47 : vector<64x128xf32>
    %c0_i32_34 = arith.constant 0 : i32
    %49 = arith.addi %39, %c0_i32_34 : i32
    %50 = arith.index_cast %49 : i32 to index
    %c1 = arith.constant 1 : index
    %c0_35 = arith.constant 0 : index
    %51 = vector.load %arg7[%50, %c1, %c0_35] : memref<10x10x128xbf16, #tpu.memory_space<vmem>>, vector<8x8x128xbf16>
    %52 = vector.shape_cast %51 : vector<8x8x128xbf16> to vector<64x128xbf16>
    %c1_36 = arith.constant 1 : index
    %c0_37 = arith.constant 0 : index
    %c0_38 = arith.constant 0 : index
    %53 = vector.load %arg4[%c1_36, %c0_37, %c0_38] : memref<9x128x128xbf16, #tpu.memory_space<vmem>>, vector<1x128x128xbf16>
    %54 = vector.shape_cast %53 : vector<1x128x128xbf16> to vector<128x128xbf16>
    %cst_39 = arith.constant dense<0.000000e+00> : vector<64x128xf32>
    %55 = tpu.matmul %52, %54, %cst_39 {dimension_numbers = #tpu.dot_dimension_numbers<[1], [0], [0], [1], [0, 0, 1, 1], [], []>} : vector<64x128xbf16>, vector<128x128xbf16>, vector<64x128xf32> -> vector<64x128xf32>
    %56 = arith.addf %48, %55 : vector<64x128xf32>
    %c0_i32_40 = arith.constant 0 : i32
    %57 = arith.addi %39, %c0_i32_40 : i32
    %58 = arith.index_cast %57 : i32 to index
    %c2 = arith.constant 2 : index
    %c0_41 = arith.constant 0 : index
    %59 = vector.load %arg7[%58, %c2, %c0_41] : memref<10x10x128xbf16, #tpu.memory_space<vmem>>, vector<8x8x128xbf16>
    %60 = vector.shape_cast %59 : vector<8x8x128xbf16> to vector<64x128xbf16>
    %c2_42 = arith.constant 2 : index
    %c0_43 = arith.constant 0 : index
    %c0_44 = arith.constant 0 : index
    %61 = vector.load %arg4[%c2_42, %c0_43, %c0_44] : memref<9x128x128xbf16, #tpu.memory_space<vmem>>, vector<1x128x128xbf16>
    %62 = vector.shape_cast %61 : vector<1x128x128xbf16> to vector<128x128xbf16>
    %cst_45 = arith.constant dense<0.000000e+00> : vector<64x128xf32>
    %63 = tpu.matmul %60, %62, %cst_45 {dimension_numbers = #tpu.dot_dimension_numbers<[1], [0], [0], [1], [0, 0, 1, 1], [], []>} : vector<64x128xbf16>, vector<128x128xbf16>, vector<64x128xf32> -> vector<64x128xf32>
    %64 = arith.addf %56, %63 : vector<64x128xf32>
    %c1_i32_46 = arith.constant 1 : i32
    %65 = arith.addi %39, %c1_i32_46 : i32
    %66 = arith.index_cast %65 : i32 to index
    %c0_47 = arith.constant 0 : index
    %c0_48 = arith.constant 0 : index
    %67 = vector.load %arg7[%66, %c0_47, %c0_48] : memref<10x10x128xbf16, #tpu.memory_space<vmem>>, vector<8x8x128xbf16>
    %68 = vector.shape_cast %67 : vector<8x8x128xbf16> to vector<64x128xbf16>
    %c3 = arith.constant 3 : index
    %c0_49 = arith.constant 0 : index
    %c0_50 = arith.constant 0 : index
    %69 = vector.load %arg4[%c3, %c0_49, %c0_50] : memref<9x128x128xbf16, #tpu.memory_space<vmem>>, vector<1x128x128xbf16>
    %70 = vector.shape_cast %69 : vector<1x128x128xbf16> to vector<128x128xbf16>
    %cst_51 = arith.constant dense<0.000000e+00> : vector<64x128xf32>
    %71 = tpu.matmul %68, %70, %cst_51 {dimension_numbers = #tpu.dot_dimension_numbers<[1], [0], [0], [1], [0, 0, 1, 1], [], []>} : vector<64x128xbf16>, vector<128x128xbf16>, vector<64x128xf32> -> vector<64x128xf32>
    %72 = arith.addf %64, %71 : vector<64x128xf32>
    %c1_i32_52 = arith.constant 1 : i32
    %73 = arith.addi %39, %c1_i32_52 : i32
    %74 = arith.index_cast %73 : i32 to index
    %c1_53 = arith.constant 1 : index
    %c0_54 = arith.constant 0 : index
    %75 = vector.load %arg7[%74, %c1_53, %c0_54] : memref<10x10x128xbf16, #tpu.memory_space<vmem>>, vector<8x8x128xbf16>
    %76 = vector.shape_cast %75 : vector<8x8x128xbf16> to vector<64x128xbf16>
    %c4 = arith.constant 4 : index
    %c0_55 = arith.constant 0 : index
    %c0_56 = arith.constant 0 : index
    %77 = vector.load %arg4[%c4, %c0_55, %c0_56] : memref<9x128x128xbf16, #tpu.memory_space<vmem>>, vector<1x128x128xbf16>
    %78 = vector.shape_cast %77 : vector<1x128x128xbf16> to vector<128x128xbf16>
    %cst_57 = arith.constant dense<0.000000e+00> : vector<64x128xf32>
    %79 = tpu.matmul %76, %78, %cst_57 {dimension_numbers = #tpu.dot_dimension_numbers<[1], [0], [0], [1], [0, 0, 1, 1], [], []>} : vector<64x128xbf16>, vector<128x128xbf16>, vector<64x128xf32> -> vector<64x128xf32>
    %80 = arith.addf %72, %79 : vector<64x128xf32>
    %c1_i32_58 = arith.constant 1 : i32
    %81 = arith.addi %39, %c1_i32_58 : i32
    %82 = arith.index_cast %81 : i32 to index
    %c2_59 = arith.constant 2 : index
    %c0_60 = arith.constant 0 : index
    %83 = vector.load %arg7[%82, %c2_59, %c0_60] : memref<10x10x128xbf16, #tpu.memory_space<vmem>>, vector<8x8x128xbf16>
    %84 = vector.shape_cast %83 : vector<8x8x128xbf16> to vector<64x128xbf16>
    %c5 = arith.constant 5 : index
    %c0_61 = arith.constant 0 : index
    %c0_62 = arith.constant 0 : index
    %85 = vector.load %arg4[%c5, %c0_61, %c0_62] : memref<9x128x128xbf16, #tpu.memory_space<vmem>>, vector<1x128x128xbf16>
    %86 = vector.shape_cast %85 : vector<1x128x128xbf16> to vector<128x128xbf16>
    %cst_63 = arith.constant dense<0.000000e+00> : vector<64x128xf32>
    %87 = tpu.matmul %84, %86, %cst_63 {dimension_numbers = #tpu.dot_dimension_numbers<[1], [0], [0], [1], [0, 0, 1, 1], [], []>} : vector<64x128xbf16>, vector<128x128xbf16>, vector<64x128xf32> -> vector<64x128xf32>
    %88 = arith.addf %80, %87 : vector<64x128xf32>
    %c2_i32 = arith.constant 2 : i32
    %89 = arith.addi %39, %c2_i32 : i32
    %90 = arith.index_cast %89 : i32 to index
    %c0_64 = arith.constant 0 : index
    %c0_65 = arith.constant 0 : index
    %91 = vector.load %arg7[%90, %c0_64, %c0_65] : memref<10x10x128xbf16, #tpu.memory_space<vmem>>, vector<8x8x128xbf16>
    %92 = vector.shape_cast %91 : vector<8x8x128xbf16> to vector<64x128xbf16>
    %c6 = arith.constant 6 : index
    %c0_66 = arith.constant 0 : index
    %c0_67 = arith.constant 0 : index
    %93 = vector.load %arg4[%c6, %c0_66, %c0_67] : memref<9x128x128xbf16, #tpu.memory_space<vmem>>, vector<1x128x128xbf16>
    %94 = vector.shape_cast %93 : vector<1x128x128xbf16> to vector<128x128xbf16>
    %cst_68 = arith.constant dense<0.000000e+00> : vector<64x128xf32>
    %95 = tpu.matmul %92, %94, %cst_68 {dimension_numbers = #tpu.dot_dimension_numbers<[1], [0], [0], [1], [0, 0, 1, 1], [], []>} : vector<64x128xbf16>, vector<128x128xbf16>, vector<64x128xf32> -> vector<64x128xf32>
    %96 = arith.addf %88, %95 : vector<64x128xf32>
    %c2_i32_69 = arith.constant 2 : i32
    %97 = arith.addi %39, %c2_i32_69 : i32
    %98 = arith.index_cast %97 : i32 to index
    %c1_70 = arith.constant 1 : index
    %c0_71 = arith.constant 0 : index
    %99 = vector.load %arg7[%98, %c1_70, %c0_71] : memref<10x10x128xbf16, #tpu.memory_space<vmem>>, vector<8x8x128xbf16>
    %100 = vector.shape_cast %99 : vector<8x8x128xbf16> to vector<64x128xbf16>
    %c7 = arith.constant 7 : index
    %c0_72 = arith.constant 0 : index
    %c0_73 = arith.constant 0 : index
    %101 = vector.load %arg4[%c7, %c0_72, %c0_73] : memref<9x128x128xbf16, #tpu.memory_space<vmem>>, vector<1x128x128xbf16>
    %102 = vector.shape_cast %101 : vector<1x128x128xbf16> to vector<128x128xbf16>
    %cst_74 = arith.constant dense<0.000000e+00> : vector<64x128xf32>
    %103 = tpu.matmul %100, %102, %cst_74 {dimension_numbers = #tpu.dot_dimension_numbers<[1], [0], [0], [1], [0, 0, 1, 1], [], []>} : vector<64x128xbf16>, vector<128x128xbf16>, vector<64x128xf32> -> vector<64x128xf32>
    %104 = arith.addf %96, %103 : vector<64x128xf32>
    %c2_i32_75 = arith.constant 2 : i32
    %105 = arith.addi %39, %c2_i32_75 : i32
    %106 = arith.index_cast %105 : i32 to index
    %c2_76 = arith.constant 2 : index
    %c0_77 = arith.constant 0 : index
    %107 = vector.load %arg7[%106, %c2_76, %c0_77] : memref<10x10x128xbf16, #tpu.memory_space<vmem>>, vector<8x8x128xbf16>
    %108 = vector.shape_cast %107 : vector<8x8x128xbf16> to vector<64x128xbf16>
    %c8 = arith.constant 8 : index
    %c0_78 = arith.constant 0 : index
    %c0_79 = arith.constant 0 : index
    %109 = vector.load %arg4[%c8, %c0_78, %c0_79] : memref<9x128x128xbf16, #tpu.memory_space<vmem>>, vector<1x128x128xbf16>
    %110 = vector.shape_cast %109 : vector<1x128x128xbf16> to vector<128x128xbf16>
    %cst_80 = arith.constant dense<0.000000e+00> : vector<64x128xf32>
    %111 = tpu.matmul %108, %110, %cst_80 {dimension_numbers = #tpu.dot_dimension_numbers<[1], [0], [0], [1], [0, 0, 1, 1], [], []>} : vector<64x128xbf16>, vector<128x128xbf16>, vector<64x128xf32> -> vector<64x128xf32>
    %112 = arith.addf %104, %111 : vector<64x128xf32>
    %113 = arith.index_cast %39 : i32 to index
    %c1_81 = arith.constant 1 : index
    %c0_82 = arith.constant 0 : index
    %114 = vector.load %arg8[%113, %c1_81, %c0_82] : memref<8x10x128xf32, #tpu.memory_space<vmem>>, vector<8x8x128xf32>
    %115 = vector.shape_cast %114 : vector<8x8x128xf32> to vector<64x128xf32>
    %116 = vector.broadcast %37 : vector<1x128xf32> to vector<64x128xf32>
    %117 = arith.addf %112, %116 : vector<64x128xf32>
    %118 = arith.addf %117, %115 : vector<64x128xf32>
    %cst_83 = arith.constant 0.000000e+00 : f32
    %119 = vector.broadcast %cst_83 : f32 to vector<64x128xf32>
    %120 = arith.cmpf ogt, %118, %119 : vector<64x128xf32>
    %cst_84 = arith.constant 0.00999999977 : f32
    %121 = vector.broadcast %cst_84 : f32 to vector<64x128xf32>
    %122 = arith.mulf %121, %118 : vector<64x128xf32>
    %123 = arith.select %120, %118, %122 : vector<64x128xi1>, vector<64x128xf32>
    %124 = vector.shape_cast %123 : vector<64x128xf32> to vector<8x8x128xf32>
    %c0_85 = arith.constant 0 : index
    %125 = arith.index_cast %39 : i32 to index
    %c0_86 = arith.constant 0 : index
    %c0_87 = arith.constant 0 : index
    %126 = vector.load %arg6[%c0_85, %125, %c0_86, %c0_87] : memref<1x8x8x128xf32, #tpu.memory_space<vmem>>, vector<1x8x8x128xf32>
    %127 = vector.shape_cast %126 : vector<1x8x8x128xf32> to vector<8x8x128xf32>
    %128 = vector.shape_cast %124 : vector<8x8x128xf32> to vector<1x8x8x128xf32>
    tpu.vector_store %arg6[%c0_85, %125, %c0_86, %c0_87], %128 {strides = array<i32>} : memref<1x8x8x128xf32, #tpu.memory_space<vmem>>, vector<1x8x8x128xf32>,
    %c1_i32_88 = arith.constant 1 : i32
    return
  }
  func.func @transform_0(%arg0: i32) -> (i32, i32, i32, i32) {
    %c0_i32 = arith.constant 0 : i32
    %c0_i32_0 = arith.constant 0 : i32
    %c0_i32_1 = arith.constant 0 : i32
    %c0_i32_2 = arith.constant 0 : i32
    return %arg0, %c0_i32, %c0_i32_0, %c0_i32_1 : i32, i32, i32, i32
  }
  func.func @transform_1(%arg0: i32) -> (i32, i32) {
    %c0_i32 = arith.constant 0 : i32
    %c0_i32_0 = arith.constant 0 : i32
    %c0_i32_1 = arith.constant 0 : i32
    return %c0_i32, %c0_i32_0 : i32, i32
  }
  func.func @transform_2(%arg0: i32) -> (i32, i32) {
    %c0_i32 = arith.constant 0 : i32
    %c0_i32_0 = arith.constant 0 : i32
    %c0_i32_1 = arith.constant 0 : i32
    return %c0_i32, %c0_i32_0 : i32, i32
  }
  func.func @transform_3(%arg0: i32) -> (i32, i32, i32) {
    %c0_i32 = arith.constant 0 : i32
    %c0_i32_0 = arith.constant 0 : i32
    %c0_i32_1 = arith.constant 0 : i32
    %c0_i32_2 = arith.constant 0 : i32
    return %c0_i32, %c0_i32_0, %c0_i32_1 : i32, i32, i32
  }
  func.func @transform_4(%arg0: i32) -> (i32, i32) {
    %c0_i32 = arith.constant 0 : i32
    %c0_i32_0 = arith.constant 0 : i32
    %c0_i32_1 = arith.constant 0 : i32
    return %c0_i32, %c0_i32_0 : i32, i32
  }
  func.func @transform_5(%arg0: i32) -> (i32, i32, i32, i32) {
    %c0_i32 = arith.constant 0 : i32
    %c0_i32_0 = arith.constant 0 : i32
    %c0_i32_1 = arith.constant 0 : i32
    %c0_i32_2 = arith.constant 0 : i32
    return %arg0, %c0_i32, %c0_i32_0, %c0_i32_1 : i32, i32, i32, i32
  }
}

</mosaic_0001>

<llo_original>
// kernel: resnet_conv_forward.1
$region0: #{resnet_conv_forward.1}
  #allocation0 [shape = 'u32[]', space=smem, size = 0x4, offset = 0x4, fixed_abs, tag = 'smem constant byte address 0x4 - core index']
  #allocation1 [shape = 'u32[144,128]{1,0:T(1,128)}', space=vmem, size = 0x12000, scoped, tag = 'internal scratch']
  #allocation2 [shape = 'bf16[10,10,128]{2,1,0:T(8,128)(2,1)}', space=vmem, size = 0xa000, scoped, tag = 'scratch operand']
  #allocation3 [shape = 'f32[8,10,128]{2,1,0:T(8,128)}', space=vmem, size = 0x10000, scoped, tag = 'scratch operand']
  %s0 = inlined_call_operand.vmem [shape: bf16[2,8,10,128], index: 0, kind: input, shape index: {}]
  %s1 = inlined_call_operand.vmem [shape: bf16[128,256], index: 1, kind: input, shape index: {}]
  %s2 = inlined_call_operand.vmem [shape: f32[1,256], index: 2, kind: input, shape index: {}]
  %s3 = inlined_call_operand.vmem [shape: bf16[9,128,128], index: 3, kind: input, shape index: {}]
  %s4 = inlined_call_operand.vmem [shape: f32[1,128], index: 4, kind: input, shape index: {}]
  %s5 = inlined_call_operand.vmem [shape: f32[2,8,8,128], index: 5, kind: output, shape index: {}]
  %s6 = sld [smem:[#allocation0]]
  $region53: #{resnet_conv_forward.1} parent=0
    _
  %s8 = ssub.s32 1, %s6
  %s9 = scalar_select 0, %s8, %s6
  loop: start=0, step=1, limit=4
  $region2: #{resnet_conv_forward.1} parent=0 // loop_pre_header
    _
  $region3: #{resnet_conv_forward.1} parent=0 // loop_header
    %s11 = sphi 0, %s15
    %p12 = scmp.ge.s32.totalorder %s11, 4
    %s21 = sphi 0, %s23
    %s24 = sphi 0, %s21
    %s25 = sphi 0, %s24
    %s41 = sphi 0, %s25
    %s45 = sphi 0, %s45
    %s47 = sphi 0, %s45
    %s48 = sphi 0, %s47
    %s62 = sphi 0, %s48
    %s66 = sphi 0, %s66
    %s68 = sphi 0, %s66
    %s69 = sphi 0, %s68
    %s83 = sphi 0, %s69
    %s87 = sphi 0, %s87
    %s89 = sphi 0, %s87
    %s90 = sphi 0, %s89
    %s104 = sphi 0, %s90
    %s108 = sphi 0, %s108
    %s110 = sphi 0, %s108
    %s111 = sphi 0, %s110
    %s125 = sphi 0, %s111
    %s131 = sphi 0, %s133
    %s134 = sphi 0, %s131
    %s135 = sphi 0, %s134
    %s151 = sphi 0, %s135
  $region4: #{resnet_conv_forward.1} parent=0 // loop_header_branch
    %14 = sbr.rel (%p12) target = $region8
  $region5: #{resnet_conv_forward.1} parent=0 // loop_body
    %s16 = ssub.s32 %s11, 1
    %s17 = ssub.s32 %s11, 2
    %s18 = sadd.s32 %s11, 1
    %s19 = ssub.s32 %s11, %s18
    %p20 = scmp.eq.s32.totalorder %s19, 0
    %s22 = sadd.s32 %s21, 1
    %s23 = scalar_select %p20, %s21, %s22
    %p26 = pneg %p20
    %p27 = scmp.eq.s32.totalorder %s11, 1
    %p28 = por %p26, %p27
    %p29 = scmp.ne.s32.totalorder %s21, %s24
    %p30 = scmp.eq.s32.totalorder %s11, 0
    %p31 = por %p29, %p30
    %p32 = scmp.ne.s32.totalorder %s21, %s24
    %p33 = scmp.eq.s32.totalorder %s16, 1
    %p34 = por %p32, %p33
    %p35 = scmp.ne.s32.totalorder %s24, %s25
    %p36 = scmp.eq.s32.totalorder %s16, 0
    %p37 = por %p35, %p36
    %p38 = scmp.ne.s32.totalorder %s24, %s25
    %p39 = scmp.eq.s32.totalorder %s17, 1
    %p40 = por %p38, %p39
    %p42 = scmp.ne.s32.totalorder %s25, %s41
    %p43 = scmp.eq.s32.totalorder %s17, 0
    %p44 = por %p42, %p43
    %s46 = sadd.s32 %s45, 1
    %p49 = scmp.eq.s32.totalorder %s11, 1
    %p50 = scmp.ne.s32.totalorder %s45, %s47
    %p51 = scmp.eq.s32.totalorder %s11, 0
    %p52 = por %p50, %p51
    %p53 = scmp.ne.s32.totalorder %s45, %s47
    %p54 = scmp.eq.s32.totalorder %s16, 1
    %p55 = por %p53, %p54
    %p56 = scmp.ne.s32.totalorder %s47, %s48
    %p57 = scmp.eq.s32.totalorder %s16, 0
    %p58 = por %p56, %p57
    %p59 = scmp.ne.s32.totalorder %s47, %s48
    %p60 = scmp.eq.s32.totalorder %s17, 1
    %p61 = por %p59, %p60
    %p63 = scmp.ne.s32.totalorder %s48, %s62
    %p64 = scmp.eq.s32.totalorder %s17, 0
    %p65 = por %p63, %p64
    %s67 = sadd.s32 %s66, 1
    %p70 = scmp.eq.s32.totalorder %s11, 1
    %p71 = scmp.ne.s32.totalorder %s66, %s68
    %p72 = scmp.eq.s32.totalorder %s11, 0
    %p73 = por %p71, %p72
    %p74 = scmp.ne.s32.totalorder %s66, %s68
    %p75 = scmp.eq.s32.totalorder %s16, 1
    %p76 = por %p74, %p75
    %p77 = scmp.ne.s32.totalorder %s68, %s69
    %p78 = scmp.eq.s32.totalorder %s16, 0
    %p79 = por %p77, %p78
    %p80 = scmp.ne.s32.totalorder %s68, %s69
    %p81 = scmp.eq.s32.totalorder %s17, 1
    %p82 = por %p80, %p81
    %p84 = scmp.ne.s32.totalorder %s69, %s83
    %p85 = scmp.eq.s32.totalorder %s17, 0
    %p86 = por %p84, %p85
    %s88 = sadd.s32 %s87, 1
    %p91 = scmp.eq.s32.totalorder %s11, 1
    %p92 = scmp.ne.s32.totalorder %s87, %s89
    %p93 = scmp.eq.s32.totalorder %s11, 0
    %p94 = por %p92, %p93
    %p95 = scmp.ne.s32.totalorder %s87, %s89
    %p96 = scmp.eq.s32.totalorder %s16, 1
    %p97 = por %p95, %p96
    %p98 = scmp.ne.s32.totalorder %s89, %s90
    %p99 = scmp.eq.s32.totalorder %s16, 0
    %p100 = por %p98, %p99
    %p101 = scmp.ne.s32.totalorder %s89, %s90
    %p102 = scmp.eq.s32.totalorder %s17, 1
    %p103 = por %p101, %p102
    %p105 = scmp.ne.s32.totalorder %s90, %s104
    %p106 = scmp.eq.s32.totalorder %s17, 0
    %p107 = por %p105, %p106
    %s109 = sadd.s32 %s108, 1
    %p112 = scmp.eq.s32.totalorder %s11, 1
    %p113 = scmp.ne.s32.totalorder %s108, %s110
    %p114 = scmp.eq.s32.totalorder %s11, 0
    %p115 = por %p113, %p114
    %p116 = scmp.ne.s32.totalorder %s108, %s110
    %p117 = scmp.eq.s32.totalorder %s16, 1
    %p118 = por %p116, %p117
    %p119 = scmp.ne.s32.totalorder %s110, %s111
    %p120 = scmp.eq.s32.totalorder %s16, 0
    %p121 = por %p119, %p120
    %p122 = scmp.ne.s32.totalorder %s110, %s111
    %p123 = scmp.eq.s32.totalorder %s17, 1
    %p124 = por %p122, %p123
    %p126 = scmp.ne.s32.totalorder %s111, %s125
    %p127 = scmp.eq.s32.totalorder %s17, 0
    %p128 = por %p126, %p127
    %s129 = ssub.s32 %s11, %s18
    %p130 = scmp.eq.s32.totalorder %s129, 0
    %s132 = sadd.s32 %s131, 1
    %s133 = scalar_select %p130, %s131, %s132
    %p136 = pneg %p130
    %p137 = scmp.eq.s32.totalorder %s11, 1
    %p138 = por %p136, %p137
    %p139 = scmp.ne.s32.totalorder %s131, %s134
    %p140 = scmp.eq.s32.totalorder %s11, 0
    %p141 = por %p139, %p140
    %p142 = scmp.ne.s32.totalorder %s131, %s134
    %p143 = scmp.eq.s32.totalorder %s16, 1
    %p144 = por %p142, %p143
    %p145 = scmp.ne.s32.totalorder %s134, %s135
    %p146 = scmp.eq.s32.totalorder %s16, 0
    %p147 = por %p145, %p146
    %p148 = scmp.ne.s32.totalorder %s134, %s135
    %p149 = scmp.eq.s32.totalorder %s17, 1
    %p150 = por %p148, %p149
    %p152 = scmp.ne.s32.totalorder %s135, %s151
    %p153 = scmp.eq.s32.totalorder %s17, 0
    %p154 = por %p152, %p153
    %p155 = scmp.le.s32.totalorder 1, %s11
    %p156 = scmp.lt.s32.totalorder %s11, 3
    %p157 = pnand %p155, %p156
    %p158 = pneg %p157
    // Predicated region
    $region9: #{resnet_conv_forward.1} parent=5 // pred_check
      _
    $region10: #{resnet_conv_forward.1} parent=5 // pred_check_branch
      %160 = sbr.rel (%p157) target = $region12
    $region11: #{resnet_conv_forward.1} parent=5 // pred_region
      %s161 = ssub.s32 %s11, 1
      // Predicated region
      $region13: #{resnet_conv_forward.1} parent=11 // pred_check
        %p162 = pneg %p58
      $region14: #{resnet_conv_forward.1} parent=11 // pred_check_branch
        %164 = sbr.rel (%p162) target = $region16
      $region15: #{resnet_conv_forward.1} parent=11 // pred_region
        _
      $region16: #{resnet_conv_forward.1} parent=11 // pred_fallthru
        _
      // Predicated region
      $region17: #{resnet_conv_forward.1} parent=11 // pred_check
        %p165 = pneg %p79
      $region18: #{resnet_conv_forward.1} parent=11 // pred_check_branch
        %167 = sbr.rel (%p165) target = $region20
      $region19: #{resnet_conv_forward.1} parent=11 // pred_region
        _
      $region20: #{resnet_conv_forward.1} parent=11 // pred_fallthru
        _
      // Predicated region
      $region21: #{resnet_conv_forward.1} parent=11 // pred_check
        %p168 = pneg %p100
      $region22: #{resnet_conv_forward.1} parent=11 // pred_check_branch
        %170 = sbr.rel (%p168) target = $region24
      $region23: #{resnet_conv_forward.1} parent=11 // pred_region
        _
      $region24: #{resnet_conv_forward.1} parent=11 // pred_fallthru
        _
      // Predicated region
      $region25: #{resnet_conv_forward.1} parent=11 // pred_check
        %p171 = pneg %p121
      $region26: #{resnet_conv_forward.1} parent=11 // pred_check_branch
        %173 = sbr.rel (%p171) target = $region28
      $region27: #{resnet_conv_forward.1} parent=11 // pred_region
        _
      $region28: #{resnet_conv_forward.1} parent=11 // pred_fallthru
        _
    $region12: #{resnet_conv_forward.1} parent=5 // pred_fallthru
      _
    %p174 = scmp.lt.s32.totalorder %s11, 2
    // Predicated region
    $region29: #{resnet_conv_forward.1} parent=5 // pred_check
      %p175 = pneg %p174
    $region30: #{resnet_conv_forward.1} parent=5 // pred_check_branch
      %177 = sbr.rel (%p175) target = $region32
    $region31: #{resnet_conv_forward.1} parent=5 // pred_region
      // Predicated region
      $region33: #{resnet_conv_forward.1} parent=31 // pred_check
        %p178 = pneg %p31
      $region34: #{resnet_conv_forward.1} parent=31 // pred_check_branch
        %180 = sbr.rel (%p178) target = $region36
      $region35: #{resnet_conv_forward.1} parent=31 // pred_region
        %p181 = scmp.lt.s32.totalorder %s11, 1
        %s182 = scalar_select %p181, %s11, 1
        %s183 = smul.addr %s182, 16
        %s184 = smul.addr %s183, 4
        %s185 = scalar_lea.vmem %s0, %s184
      $region36: #{resnet_conv_forward.1} parent=31 // pred_fallthru
        _
    $region32: #{resnet_conv_forward.1} parent=5 // pred_fallthru
      _
    %p186 = scmp.le.s32.totalorder 1, %s11
    %p187 = scmp.lt.s32.totalorder %s11, 3
    %p188 = pnand %p186, %p187
    %p189 = pneg %p188
    // Predicated region
    $region37: #{resnet_conv_forward.1} parent=5 // pred_check
      _
    $region38: #{resnet_conv_forward.1} parent=5 // pred_check_branch
      %191 = sbr.rel (%p188) target = $region40
    $region39: #{resnet_conv_forward.1} parent=5 // pred_region
      %s192 = ssub.s32 %s11, 1
      %p193 = scmp.lt.s32.totalorder %s16, 1
      %s194 = scalar_select %p193, %s16, 1
      %s195 = smul.addr %s194, 16
      %s196 = smul.addr %s195, 4
      %s197 = scalar_lea.vmem %s0, %s196
      %p198 = pneg %p37
      %p199 = pneg %p34
      %p200 = pneg %p58
      %p201 = pneg %p55
      %p202 = pneg %p79
      %p203 = pneg %p76
      %p204 = pneg %p100
      %p205 = pneg %p97
      %p206 = pneg %p121
      %p207 = pneg %p118
      %p208 = pneg %p147
      %p209 = pneg %p144
      %p210 = scmp.lt.s32.totalorder %s16, 1
      %s211 = scalar_select %p210, %s16, 1
      %s212 = smul.addr %s211, 8
      %s213 = smul.addr %s212, 8
      %s214 = scalar_lea.vmem %s5, %s213
      %p215 = scmp.lt.s32.totalorder %s16, 1
      %s216 = scalar_select %p215, %s16, 1
      %s217 = smul.addr %s216, 16
      %s218 = smul.addr %s217, 4
      %s219 = scalar_lea.vmem %s0, %s218
      %p220 = scmp.lt.s32.totalorder %s16, 1
      %s221 = scalar_select %p220, %s16, 1
      %s222 = smul.addr %s221, 8
      %s223 = smul.addr %s222, 8
      %s224 = scalar_lea.vmem %s5, %s223
      %226 = vst [vmem:[#allocation2] sm:$0xf] 0
      %227 = vst [vmem:[#allocation2 + $0x4] sm:$0x1] 0
      %s228 = scalar_lea.vmem [#allocation2], 72
      %229 = vst [vmem:[%s228] sm:$0xf] 0
      %230 = vst [vmem:[%s228 + $0x4] sm:$0x1] 0
      %v231 = vld [vmem:[%s1] sm:$0xff]
      %v232 = vld [vmem:[%s1 + $0x8] sm:$0xff]
      %v233 = vld [vmem:[%s1 + $0x10] sm:$0xff]
      %v234 = vld [vmem:[%s1 + $0x18] sm:$0xff]
      %v235 = vld [vmem:[%s1 + $0x20] sm:$0xff]
      %v236 = vld [vmem:[%s1 + $0x28] sm:$0xff]
      %v237 = vld [vmem:[%s1 + $0x30] sm:$0xff]
      %v238 = vld [vmem:[%s1 + $0x38] sm:$0xff]
      %v239 = vld [vmem:[%s1 + $0x40] sm:$0xff]
      %v240 = vld [vmem:[%s1 + $0x48] sm:$0xff]
      %v241 = vld [vmem:[%s1 + $0x50] sm:$0xff]
      %v242 = vld [vmem:[%s1 + $0x58] sm:$0xff]
      %v243 = vld [vmem:[%s1 + $0x60] sm:$0xff]
      %v244 = vld [vmem:[%s1 + $0x68] sm:$0xff]
      %v245 = vld [vmem:[%s1 + $0x70] sm:$0xff]
      %v246 = vld [vmem:[%s1 + $0x78] sm:$0xff]
      %v247 = vld [vmem:[%s2] sm:$0x3]
      %v248 = vlaneseq
      %v249 = vshrl.u32 %v248, 7
      %v250 = vadd.s32 %v249, 8
      %vm251 = vcmp.gt.s32.totalorder %v249, 0
      %vm252 = vcmp.gt.s32.totalorder %v250, 0
      %vm253 = vcmp.le.s32.totalorder %v249, 8
      %vm254 = vcmp.le.s32.totalorder %v250, 8
      %vm255 = vmand %vm251, %vm253
      %vm256 = vmand %vm252, %vm254
      %s257 = smul.u32 0, 2
      %s258 = smul.addr %s257, 4
      %s259 = scalar_lea.vmem %s219, %s258
      %v260 = vld [vmem:[%s259] sm:$0xf]
      %v261 = vld [vmem:[%s259 + $0x4] sm:$0x1]
      %v262 = vld [vmem:[%s259 + $0x8] sm:$0xf]
      %v263 = vld [vmem:[%s259 + $0xc] sm:$0x1]
      %v264 = vld [vmem:[%s259 + $0x10] sm:$0xf]
      %v265 = vld [vmem:[%s259 + $0x14] sm:$0x1]
      %v266 = vld [vmem:[%s259 + $0x18] sm:$0xf]
      %v267 = vld [vmem:[%s259 + $0x1c] sm:$0x1]
      %v268 = vld [vmem:[%s259 + $0x20] sm:$0xf]
      %v269 = vld [vmem:[%s259 + $0x24] sm:$0x1]
      %v270 = vld [vmem:[%s259 + $0x28] sm:$0xf]
      %v271 = vld [vmem:[%s259 + $0x2c] sm:$0x1]
      %v272 = vld [vmem:[%s259 + $0x30] sm:$0xf]
      %v273 = vld [vmem:[%s259 + $0x34] sm:$0x1]
      %v274 = vld [vmem:[%s259 + $0x38] sm:$0xf]
      %v275 = vld [vmem:[%s259 + $0x3c] sm:$0x1]
      %v293 = vunpack.c.l.s4 1966171168
      %v294 = vunpack.c.0.s8 %v293
      %v295 = vlaneseq
      %v296 = vshrl.u32 %v295, 7
      %v297 = vsub.s32 %v294, %v296
      %v298 = vrot.slane %v260, %v297
      %v299 = vcombine.high %v298, %v298
      %v301 = vunpack.c.l.s4 1966171168
      %v302 = vunpack.c.0.s8 %v301
      %v303 = vlaneseq
      %v304 = vshrl.u32 %v303, 7
      %v305 = vsub.s32 %v302, %v304
      %v306 = vrot.slane %v298, %v305
      %v308 = vunpack.c.l.s4 1966171168
      %v309 = vunpack.c.0.s8 %v308
      %v310 = vlaneseq
      %v311 = vshrl.u32 %v310, 7
      %v312 = vsub.s32 %v309, %v311
      %v313 = vrot.slane %v299, %v312
      %v314 = vcombine.high %v306, %v306
      %v315 = vcombine.high %v313, %v313
      %v317 = vunpack.c.l.s4 1966171168
      %v318 = vunpack.c.0.s8 %v317
      %v319 = vlaneseq
      %v320 = vshrl.u32 %v319, 7
      %v321 = vsub.s32 %v318, %v320
      %v322 = vrot.slane %v261, %v321
      %v324 = vunpack.c.l.s4 1966171168
      %v325 = vunpack.c.0.s8 %v324
      %v326 = vlaneseq
      %v327 = vshrl.u32 %v326, 7
      %v328 = vsub.s32 %v325, %v327
      %v329 = vrot.slane %v322, %v328
      %v331 = vunpack.c.l.s4 1966171168
      %v332 = vunpack.c.0.s8 %v331
      %v333 = vlaneseq
      %v334 = vshrl.u32 %v333, 7
      %v335 = vsub.s32 %v332, %v334
      %v336 = vrot.slane %v262, %v335
      %v337 = vcombine.high %v336, %v336
      %v339 = vunpack.c.l.s4 1966171168
      %v340 = vunpack.c.0.s8 %v339
      %v341 = vlaneseq
      %v342 = vshrl.u32 %v341, 7
      %v343 = vsub.s32 %v340, %v342
      %v344 = vrot.slane %v336, %v343
      %v346 = vunpack.c.l.s4 1966171168
      %v347 = vunpack.c.0.s8 %v346
      %v348 = vlaneseq
      %v349 = vshrl.u32 %v348, 7
      %v350 = vsub.s32 %v347, %v349
      %v351 = vrot.slane %v337, %v350
      %v352 = vcombine.high %v344, %v344
      %v353 = vcombine.high %v351, %v351
      %v355 = vunpack.c.l.s4 1966171168
      %v356 = vunpack.c.0.s8 %v355
      %v357 = vlaneseq
      %v358 = vshrl.u32 %v357, 7
      %v359 = vsub.s32 %v356, %v358
      %v360 = vrot.slane %v263, %v359
      %v362 = vunpack.c.l.s4 1966171168
      %v363 = vunpack.c.0.s8 %v362
      %v364 = vlaneseq
      %v365 = vshrl.u32 %v364, 7
      %v366 = vsub.s32 %v363, %v365
      %v367 = vrot.slane %v360, %v366
      %v369 = vunpack.c.l.s4 1966171168
      %v370 = vunpack.c.0.s8 %v369
      %v371 = vlaneseq
      %v372 = vshrl.u32 %v371, 7
      %v373 = vsub.s32 %v370, %v372
      %v374 = vrot.slane %v264, %v373
      %v375 = vcombine.high %v374, %v374
      %v377 = vunpack.c.l.s4 1966171168
      %v378 = vunpack.c.0.s8 %v377
      %v379 = vlaneseq
      %v380 = vshrl.u32 %v379, 7
      %v381 = vsub.s32 %v378, %v380
      %v382 = vrot.slane %v374, %v381
      %v384 = vunpack.c.l.s4 1966171168
      %v385 = vunpack.c.0.s8 %v384
      %v386 = vlaneseq
      %v387 = vshrl.u32 %v386, 7
      %v388 = vsub.s32 %v385, %v387
      %v389 = vrot.slane %v375, %v388
      %v390 = vcombine.high %v382, %v382
      %v391 = vcombine.high %v389, %v389
      %v393 = vunpack.c.l.s4 1966171168
      %v394 = vunpack.c.0.s8 %v393
      %v395 = vlaneseq
      %v396 = vshrl.u32 %v395, 7
      %v397 = vsub.s32 %v394, %v396
      %v398 = vrot.slane %v265, %v397
      %v400 = vunpack.c.l.s4 1966171168
      %v401 = vunpack.c.0.s8 %v400
      %v402 = vlaneseq
      %v403 = vshrl.u32 %v402, 7
      %v404 = vsub.s32 %v401, %v403
      %v405 = vrot.slane %v398, %v404
      %v407 = vunpack.c.l.s4 1966171168
      %v408 = vunpack.c.0.s8 %v407
      %v409 = vlaneseq
      %v410 = vshrl.u32 %v409, 7
      %v411 = vsub.s32 %v408, %v410
      %v412 = vrot.slane %v266, %v411
      %v413 = vcombine.high %v412, %v412
      %v415 = vunpack.c.l.s4 1966171168
      %v416 = vunpack.c.0.s8 %v415
      %v417 = vlaneseq
      %v418 = vshrl.u32 %v417, 7
      %v419 = vsub.s32 %v416, %v418
      %v420 = vrot.slane %v412, %v419
      %v422 = vunpack.c.l.s4 1966171168
      %v423 = vunpack.c.0.s8 %v422
      %v424 = vlaneseq
      %v425 = vshrl.u32 %v424, 7
      %v426 = vsub.s32 %v423, %v425
      %v427 = vrot.slane %v413, %v426
      %v428 = vcombine.high %v420, %v420
      %v429 = vcombine.high %v427, %v427
      %v431 = vunpack.c.l.s4 1966171168
      %v432 = vunpack.c.0.s8 %v431
      %v433 = vlaneseq
      %v434 = vshrl.u32 %v433, 7
      %v435 = vsub.s32 %v432, %v434
      %v436 = vrot.slane %v267, %v435
      %v438 = vunpack.c.l.s4 1966171168
      %v439 = vunpack.c.0.s8 %v438
      %v440 = vlaneseq
      %v441 = vshrl.u32 %v440, 7
      %v442 = vsub.s32 %v439, %v441
      %v443 = vrot.slane %v436, %v442
      %v445 = vunpack.c.l.s4 1966171168
      %v446 = vunpack.c.0.s8 %v445
      %v447 = vlaneseq
      %v448 = vshrl.u32 %v447, 7
      %v449 = vsub.s32 %v446, %v448
      %v450 = vrot.slane %v268, %v449
      %v451 = vcombine.high %v450, %v450
      %v453 = vunpack.c.l.s4 1966171168
      %v454 = vunpack.c.0.s8 %v453
      %v455 = vlaneseq
      %v456 = vshrl.u32 %v455, 7
      %v457 = vsub.s32 %v454, %v456
      %v458 = vrot.slane %v450, %v457
      %v460 = vunpack.c.l.s4 1966171168
      %v461 = vunpack.c.0.s8 %v460
      %v462 = vlaneseq
      %v463 = vshrl.u32 %v462, 7
      %v464 = vsub.s32 %v461, %v463
      %v465 = vrot.slane %v451, %v464
      %v466 = vcombine.high %v458, %v458
      %v467 = vcombine.high %v465, %v465
      %v469 = vunpack.c.l.s4 1966171168
      %v470 = vunpack.c.0.s8 %v469
      %v471 = vlaneseq
      %v472 = vshrl.u32 %v471, 7
      %v473 = vsub.s32 %v470, %v472
      %v474 = vrot.slane %v269, %v473
      %v476 = vunpack.c.l.s4 1966171168
      %v477 = vunpack.c.0.s8 %v476
      %v478 = vlaneseq
      %v479 = vshrl.u32 %v478, 7
      %v480 = vsub.s32 %v477, %v479
      %v481 = vrot.slane %v474, %v480
      %v483 = vunpack.c.l.s4 1966171168
      %v484 = vunpack.c.0.s8 %v483
      %v485 = vlaneseq
      %v486 = vshrl.u32 %v485, 7
      %v487 = vsub.s32 %v484, %v486
      %v488 = vrot.slane %v270, %v487
      %v489 = vcombine.high %v488, %v488
      %v491 = vunpack.c.l.s4 1966171168
      %v492 = vunpack.c.0.s8 %v491
      %v493 = vlaneseq
      %v494 = vshrl.u32 %v493, 7
      %v495 = vsub.s32 %v492, %v494
      %v496 = vrot.slane %v488, %v495
      %v498 = vunpack.c.l.s4 1966171168
      %v499 = vunpack.c.0.s8 %v498
      %v500 = vlaneseq
      %v501 = vshrl.u32 %v500, 7
      %v502 = vsub.s32 %v499, %v501
      %v503 = vrot.slane %v489, %v502
      %v504 = vcombine.high %v496, %v496
      %v505 = vcombine.high %v503, %v503
      %v507 = vunpack.c.l.s4 1966171168
      %v508 = vunpack.c.0.s8 %v507
      %v509 = vlaneseq
      %v510 = vshrl.u32 %v509, 7
      %v511 = vsub.s32 %v508, %v510
      %v512 = vrot.slane %v271, %v511
      %v514 = vunpack.c.l.s4 1966171168
      %v515 = vunpack.c.0.s8 %v514
      %v516 = vlaneseq
      %v517 = vshrl.u32 %v516, 7
      %v518 = vsub.s32 %v515, %v517
      %v519 = vrot.slane %v512, %v518
      %v521 = vunpack.c.l.s4 1966171168
      %v522 = vunpack.c.0.s8 %v521
      %v523 = vlaneseq
      %v524 = vshrl.u32 %v523, 7
      %v525 = vsub.s32 %v522, %v524
      %v526 = vrot.slane %v272, %v525
      %v527 = vcombine.high %v526, %v526
      %v529 = vunpack.c.l.s4 1966171168
      %v530 = vunpack.c.0.s8 %v529
      %v531 = vlaneseq
      %v532 = vshrl.u32 %v531, 7
      %v533 = vsub.s32 %v530, %v532
      %v534 = vrot.slane %v526, %v533
      %v536 = vunpack.c.l.s4 1966171168
      %v537 = vunpack.c.0.s8 %v536
      %v538 = vlaneseq
      %v539 = vshrl.u32 %v538, 7
      %v540 = vsub.s32 %v537, %v539
      %v541 = vrot.slane %v527, %v540
      %v542 = vcombine.high %v534, %v534
      %v543 = vcombine.high %v541, %v541
      %v545 = vunpack.c.l.s4 1966171168
      %v546 = vunpack.c.0.s8 %v545
      %v547 = vlaneseq
      %v548 = vshrl.u32 %v547, 7
      %v549 = vsub.s32 %v546, %v548
      %v550 = vrot.slane %v273, %v549
      %v552 = vunpack.c.l.s4 1966171168
      %v553 = vunpack.c.0.s8 %v552
      %v554 = vlaneseq
      %v555 = vshrl.u32 %v554, 7
      %v556 = vsub.s32 %v553, %v555
      %v557 = vrot.slane %v550, %v556
      %v559 = vunpack.c.l.s4 1966171168
      %v560 = vunpack.c.0.s8 %v559
      %v561 = vlaneseq
      %v562 = vshrl.u32 %v561, 7
      %v563 = vsub.s32 %v560, %v562
      %v564 = vrot.slane %v274, %v563
      %v565 = vcombine.high %v564, %v564
      %v567 = vunpack.c.l.s4 1966171168
      %v568 = vunpack.c.0.s8 %v567
      %v569 = vlaneseq
      %v570 = vshrl.u32 %v569, 7
      %v571 = vsub.s32 %v568, %v570
      %v572 = vrot.slane %v564, %v571
      %v574 = vunpack.c.l.s4 1966171168
      %v575 = vunpack.c.0.s8 %v574
      %v576 = vlaneseq
      %v577 = vshrl.u32 %v576, 7
      %v578 = vsub.s32 %v575, %v577
      %v579 = vrot.slane %v565, %v578
      %v580 = vcombine.high %v572, %v572
      %v581 = vcombine.high %v579, %v579
      %v583 = vunpack.c.l.s4 1966171168
      %v584 = vunpack.c.0.s8 %v583
      %v585 = vlaneseq
      %v586 = vshrl.u32 %v585, 7
      %v587 = vsub.s32 %v584, %v586
      %v588 = vrot.slane %v275, %v587
      %v590 = vunpack.c.l.s4 1966171168
      %v591 = vunpack.c.0.s8 %v590
      %v592 = vlaneseq
      %v593 = vshrl.u32 %v592, 7
      %v594 = vsub.s32 %v591, %v593
      %v595 = vrot.slane %v588, %v594
      %v597 = vlaneseq
      %v598 = vshrl.u32 %v597, 7
      %v599 = vsub.s32 0, %v598
      %v600 = vrot.slane %v247, %v599
      %v601 = vlaneseq
      %v602 = vshrl.u32 %v601, 7
      %v603 = vsub.s32 1, %v602
      %v604 = vrot.slane %v247, %v603
      %v607 = vcombine.low %v306, %v313
      %v608 = vcombine.low %v314, %v315
      %v609 = vcombine.low %v329, %v344
      %v610 = vcombine.low %v351, %v352
      %v612 = vunpack.c.l.s4 1966171168
      %v613 = vunpack.c.0.s8 %v612
      %v614 = vlaneseq
      %v615 = vshrl.u32 %v614, 7
      %v616 = vsub.s32 %v613, %v615
      %v617 = vrot.slane %v607, %v616
      %v619 = vunpack.c.l.s4 1966171168
      %v620 = vunpack.c.0.s8 %v619
      %v621 = vlaneseq
      %v622 = vshrl.u32 %v621, 7
      %v623 = vsub.s32 %v620, %v622
      %v624 = vrot.slane %v608, %v623
      %v626 = vunpack.c.l.s4 1966171168
      %v627 = vunpack.c.0.s8 %v626
      %v628 = vlaneseq
      %v629 = vshrl.u32 %v628, 7
      %v630 = vsub.s32 %v627, %v629
      %v631 = vrot.slane %v609, %v630
      %v633 = vunpack.c.l.s4 1966171168
      %v634 = vunpack.c.0.s8 %v633
      %v635 = vlaneseq
      %v636 = vshrl.u32 %v635, 7
      %v637 = vsub.s32 %v634, %v636
      %v638 = vrot.slane %v610, %v637
      %v639 = vcombine.low %v617, %v624
      %v640 = vcombine.low %v631, %v638
      %v642 = vunpack.c.l.s4 1966171168
      %v643 = vunpack.c.0.s8 %v642
      %v644 = vlaneseq
      %v645 = vshrl.u32 %v644, 7
      %v646 = vsub.s32 %v643, %v645
      %v647 = vrot.slane %v639, %v646
      %v649 = vunpack.c.l.s4 1966171168
      %v650 = vunpack.c.0.s8 %v649
      %v651 = vlaneseq
      %v652 = vshrl.u32 %v651, 7
      %v653 = vsub.s32 %v650, %v652
      %v654 = vrot.slane %v640, %v653
      %v655 = vcombine.low %v647, %v654
      %v656 = vcombine.low %v353, %v367
      %v657 = vcombine.low %v382, %v389
      %v658 = vcombine.low %v390, %v391
      %v659 = vcombine.low %v405, %v420
      %v661 = vunpack.c.l.s4 1966171168
      %v662 = vunpack.c.0.s8 %v661
      %v663 = vlaneseq
      %v664 = vshrl.u32 %v663, 7
      %v665 = vsub.s32 %v662, %v664
      %v666 = vrot.slane %v656, %v665
      %v668 = vunpack.c.l.s4 1966171168
      %v669 = vunpack.c.0.s8 %v668
      %v670 = vlaneseq
      %v671 = vshrl.u32 %v670, 7
      %v672 = vsub.s32 %v669, %v671
      %v673 = vrot.slane %v657, %v672
      %v675 = vunpack.c.l.s4 1966171168
      %v676 = vunpack.c.0.s8 %v675
      %v677 = vlaneseq
      %v678 = vshrl.u32 %v677, 7
      %v679 = vsub.s32 %v676, %v678
      %v680 = vrot.slane %v658, %v679
      %v682 = vunpack.c.l.s4 1966171168
      %v683 = vunpack.c.0.s8 %v682
      %v684 = vlaneseq
      %v685 = vshrl.u32 %v684, 7
      %v686 = vsub.s32 %v683, %v685
      %v687 = vrot.slane %v659, %v686
      %v688 = vcombine.low %v666, %v673
      %v689 = vcombine.low %v680, %v687
      %v691 = vunpack.c.l.s4 1966171168
      %v692 = vunpack.c.0.s8 %v691
      %v693 = vlaneseq
      %v694 = vshrl.u32 %v693, 7
      %v695 = vsub.s32 %v692, %v694
      %v696 = vrot.slane %v688, %v695
      %v698 = vunpack.c.l.s4 1966171168
      %v699 = vunpack.c.0.s8 %v698
      %v700 = vlaneseq
      %v701 = vshrl.u32 %v700, 7
      %v702 = vsub.s32 %v699, %v701
      %v703 = vrot.slane %v689, %v702
      %v704 = vcombine.low %v696, %v703
      %v705 = vcombine.low %v427, %v428
      %v706 = vcombine.low %v429, %v443
      %v707 = vcombine.low %v458, %v465
      %v708 = vcombine.low %v466, %v467
      %v710 = vunpack.c.l.s4 1966171168
      %v711 = vunpack.c.0.s8 %v710
      %v712 = vlaneseq
      %v713 = vshrl.u32 %v712, 7
      %v714 = vsub.s32 %v711, %v713
      %v715 = vrot.slane %v705, %v714
      %v717 = vunpack.c.l.s4 1966171168
      %v718 = vunpack.c.0.s8 %v717
      %v719 = vlaneseq
      %v720 = vshrl.u32 %v719, 7
      %v721 = vsub.s32 %v718, %v720
      %v722 = vrot.slane %v706, %v721
      %v724 = vunpack.c.l.s4 1966171168
      %v725 = vunpack.c.0.s8 %v724
      %v726 = vlaneseq
      %v727 = vshrl.u32 %v726, 7
      %v728 = vsub.s32 %v725, %v727
      %v729 = vrot.slane %v707, %v728
      %v731 = vunpack.c.l.s4 1966171168
      %v732 = vunpack.c.0.s8 %v731
      %v733 = vlaneseq
      %v734 = vshrl.u32 %v733, 7
      %v735 = vsub.s32 %v732, %v734
      %v736 = vrot.slane %v708, %v735
      %v737 = vcombine.low %v715, %v722
      %v738 = vcombine.low %v729, %v736
      %v740 = vunpack.c.l.s4 1966171168
      %v741 = vunpack.c.0.s8 %v740
      %v742 = vlaneseq
      %v743 = vshrl.u32 %v742, 7
      %v744 = vsub.s32 %v741, %v743
      %v745 = vrot.slane %v737, %v744
      %v747 = vunpack.c.l.s4 1966171168
      %v748 = vunpack.c.0.s8 %v747
      %v749 = vlaneseq
      %v750 = vshrl.u32 %v749, 7
      %v751 = vsub.s32 %v748, %v750
      %v752 = vrot.slane %v738, %v751
      %v753 = vcombine.low %v745, %v752
      %v754 = vcombine.low %v481, %v496
      %v755 = vcombine.low %v503, %v504
      %v756 = vcombine.low %v505, %v519
      %v757 = vcombine.low %v534, %v541
      %v759 = vunpack.c.l.s4 1966171168
      %v760 = vunpack.c.0.s8 %v759
      %v761 = vlaneseq
      %v762 = vshrl.u32 %v761, 7
      %v763 = vsub.s32 %v760, %v762
      %v764 = vrot.slane %v754, %v763
      %v766 = vunpack.c.l.s4 1966171168
      %v767 = vunpack.c.0.s8 %v766
      %v768 = vlaneseq
      %v769 = vshrl.u32 %v768, 7
      %v770 = vsub.s32 %v767, %v769
      %v771 = vrot.slane %v755, %v770
      %v773 = vunpack.c.l.s4 1966171168
      %v774 = vunpack.c.0.s8 %v773
      %v775 = vlaneseq
      %v776 = vshrl.u32 %v775, 7
      %v777 = vsub.s32 %v774, %v776
      %v778 = vrot.slane %v756, %v777
      %v780 = vunpack.c.l.s4 1966171168
      %v781 = vunpack.c.0.s8 %v780
      %v782 = vlaneseq
      %v783 = vshrl.u32 %v782, 7
      %v784 = vsub.s32 %v781, %v783
      %v785 = vrot.slane %v757, %v784
      %v786 = vcombine.low %v764, %v771
      %v787 = vcombine.low %v778, %v785
      %v789 = vunpack.c.l.s4 1966171168
      %v790 = vunpack.c.0.s8 %v789
      %v791 = vlaneseq
      %v792 = vshrl.u32 %v791, 7
      %v793 = vsub.s32 %v790, %v792
      %v794 = vrot.slane %v786, %v793
      %v796 = vunpack.c.l.s4 1966171168
      %v797 = vunpack.c.0.s8 %v796
      %v798 = vlaneseq
      %v799 = vshrl.u32 %v798, 7
      %v800 = vsub.s32 %v797, %v799
      %v801 = vrot.slane %v787, %v800
      %v802 = vcombine.low %v794, %v801
      %v803 = vcombine.low %v542, %v543
      %v804 = vcombine.low %v557, %v572
      %v805 = vcombine.low %v579, %v580
      %v806 = vcombine.low %v581, %v595
      %v808 = vunpack.c.l.s4 1966171168
      %v809 = vunpack.c.0.s8 %v808
      %v810 = vlaneseq
      %v811 = vshrl.u32 %v810, 7
      %v812 = vsub.s32 %v809, %v811
      %v813 = vrot.slane %v803, %v812
      %v815 = vunpack.c.l.s4 1966171168
      %v816 = vunpack.c.0.s8 %v815
      %v817 = vlaneseq
      %v818 = vshrl.u32 %v817, 7
      %v819 = vsub.s32 %v816, %v818
      %v820 = vrot.slane %v804, %v819
      %v822 = vunpack.c.l.s4 1966171168
      %v823 = vunpack.c.0.s8 %v822
      %v824 = vlaneseq
      %v825 = vshrl.u32 %v824, 7
      %v826 = vsub.s32 %v823, %v825
      %v827 = vrot.slane %v805, %v826
      %v829 = vunpack.c.l.s4 1966171168
      %v830 = vunpack.c.0.s8 %v829
      %v831 = vlaneseq
      %v832 = vshrl.u32 %v831, 7
      %v833 = vsub.s32 %v830, %v832
      %v834 = vrot.slane %v806, %v833
      %v835 = vcombine.low %v813, %v820
      %v836 = vcombine.low %v827, %v834
      %v838 = vunpack.c.l.s4 1966171168
      %v839 = vunpack.c.0.s8 %v838
      %v840 = vlaneseq
      %v841 = vshrl.u32 %v840, 7
      %v842 = vsub.s32 %v839, %v841
      %v843 = vrot.slane %v835, %v842
      %v845 = vunpack.c.l.s4 1966171168
      %v846 = vunpack.c.0.s8 %v845
      %v847 = vlaneseq
      %v848 = vshrl.u32 %v847, 7
      %v849 = vsub.s32 %v846, %v848
      %v850 = vrot.slane %v836, %v849
      %v851 = vcombine.low %v843, %v850
      %v873 = vunpack.c.l.b16 %v231
      %v874 = vunpack.c.h.b16 %v231
      %v875 = vunpack.c.l.b16 %v232
      %v876 = vunpack.c.h.b16 %v232
      %v877 = vunpack.c.l.b16 %v233
      %v878 = vunpack.c.h.b16 %v233
      %v879 = vunpack.c.l.b16 %v234
      %v880 = vunpack.c.h.b16 %v234
      %v881 = vunpack.c.l.b16 %v235
      %v882 = vunpack.c.h.b16 %v235
      %v883 = vunpack.c.l.b16 %v236
      %v884 = vunpack.c.h.b16 %v236
      %v885 = vunpack.c.l.b16 %v237
      %v886 = vunpack.c.h.b16 %v237
      %v887 = vunpack.c.l.b16 %v238
      %v888 = vunpack.c.h.b16 %v238
      %v889 = vunpack.c.l.b16 %v239
      %v890 = vunpack.c.h.b16 %v239
      %v891 = vunpack.c.l.b16 %v240
      %v892 = vunpack.c.h.b16 %v240
      %v893 = vunpack.c.l.b16 %v241
      %v894 = vunpack.c.h.b16 %v241
      %v895 = vunpack.c.l.b16 %v242
      %v896 = vunpack.c.h.b16 %v242
      %v897 = vunpack.c.l.b16 %v243
      %v898 = vunpack.c.h.b16 %v243
      %v899 = vunpack.c.l.b16 %v244
      %v900 = vunpack.c.h.b16 %v244
      %v901 = vunpack.c.l.b16 %v245
      %v902 = vunpack.c.h.b16 %v245
      %v903 = vunpack.c.l.b16 %v246
      %v904 = vunpack.c.h.b16 %v246
      %v905 = vpack.c.b16 %v875, %v873
      %v906 = vpack.c.b16 %v876, %v874
      %v907 = vpack.c.b16 %v879, %v877
      %v908 = vpack.c.b16 %v880, %v878
      %v909 = vpack.c.b16 %v883, %v881
      %v910 = vpack.c.b16 %v884, %v882
      %v911 = vpack.c.b16 %v887, %v885
      %v912 = vpack.c.b16 %v888, %v886
      %v913 = vpack.c.b16 %v891, %v889
      %v914 = vpack.c.b16 %v892, %v890
      %v915 = vpack.c.b16 %v895, %v893
      %v916 = vpack.c.b16 %v896, %v894
      %v917 = vpack.c.b16 %v899, %v897
      %v918 = vpack.c.b16 %v900, %v898
      %v919 = vpack.c.b16 %v903, %v901
      %v920 = vpack.c.b16 %v904, %v902
      %937 = vmatprep.subr.bf16.mxu0 %v906
      %938 = vmatpush1.bf16.msra.mxu0 %v905
      %939 = vmatprep.subr.bf16.mxu0 %v908
      %940 = vmatpush1.bf16.msra.mxu0 %v907
      %941 = vmatprep.subr.bf16.mxu0 %v910
      %942 = vmatpush1.bf16.msra.mxu0 %v909
      %943 = vmatprep.subr.bf16.mxu0 %v912
      %944 = vmatpush1.bf16.msra.mxu0 %v911
      %945 = vmatprep.subr.bf16.mxu0 %v914
      %946 = vmatpush1.bf16.msra.mxu0 %v913
      %947 = vmatprep.subr.bf16.mxu0 %v916
      %948 = vmatpush1.bf16.msra.mxu0 %v915
      %949 = vmatprep.subr.bf16.mxu0 %v918
      %950 = vmatpush1.bf16.msra.mxu0 %v917
      %951 = vmatprep.subr.bf16.mxu0 %v920
      %952 = vmatpush1.bf16.msra.mxu0 %v919
      %953 = vmatprep.subr.bf16.mxu0 0
      %954 = vmatpush1.bf16.msra.mxu0 0
      %955 = vmatprep.subr.bf16.mxu0 0
      %956 = vmatpush1.bf16.msra.mxu0 0
      %957 = vmatprep.subr.bf16.mxu0 0
      %958 = vmatpush1.bf16.msra.mxu0 0
      %959 = vmatprep.subr.bf16.mxu0 0
      %960 = vmatpush1.bf16.msra.mxu0 0
      %961 = vmatprep.subr.bf16.mxu0 0
      %962 = vmatpush1.bf16.msra.mxu0 0
      %963 = vmatprep.subr.bf16.mxu0 0
      %964 = vmatpush1.bf16.msra.mxu0 0
      %965 = vmatprep.subr.bf16.mxu0 0
      %966 = vmatpush1.bf16.msra.mxu0 0
      %967 = vmatprep.subr.bf16.mxu0 0
      %968 = vmatpush1.bf16.msra.mxu0 0
      %969 = vmatprep.mubr.bf16.mxu0 0
      %970 = vmatmul.mubr.bf16.gmra.mrb[0].mxu0 %v655
      %v971 = vpop.f32.mrb[0].mxu0
      %v972 = vadd.f32 %v600, %v971
      %v973 = vpop.f32.mrb[0].mxu0
      %v974 = vadd.f32 %v604, %v973
      %v975 = vpop.f32.mrb[0].mxu0
      %v976 = vadd.f32 %v600, %v975
      %v977 = vpop.f32.mrb[0].mxu0
      %v978 = vadd.f32 %v604, %v977
      %979 = vmatprep.mubr.bf16.mxu0 0
      %980 = vmatmul.mubr.bf16.gmra.mrb[0].mxu0 %v704
      %v981 = vpop.f32.mrb[0].mxu0
      %v982 = vadd.f32 %v600, %v981
      %v983 = vpop.f32.mrb[0].mxu0
      %v984 = vadd.f32 %v604, %v983
      %v985 = vpop.f32.mrb[0].mxu0
      %v986 = vadd.f32 %v600, %v985
      %v987 = vpop.f32.mrb[0].mxu0
      %v988 = vadd.f32 %v604, %v987
      %989 = vmatprep.mubr.bf16.mxu0 0
      %990 = vmatmul.mubr.bf16.gmra.mrb[0].mxu0 %v753
      %v991 = vpop.f32.mrb[0].mxu0
      %v992 = vadd.f32 %v600, %v991
      %v993 = vpop.f32.mrb[0].mxu0
      %v994 = vadd.f32 %v604, %v993
      %v995 = vpop.f32.mrb[0].mxu0
      %v996 = vadd.f32 %v600, %v995
      %v997 = vpop.f32.mrb[0].mxu0
      %v998 = vadd.f32 %v604, %v997
      %999 = vmatprep.mubr.bf16.mxu0 0
      %1000 = vmatmul.mubr.bf16.gmra.mrb[0].mxu0 %v802
      %v1001 = vpop.f32.mrb[0].mxu0
      %v1002 = vadd.f32 %v600, %v1001
      %v1003 = vpop.f32.mrb[0].mxu0
      %v1004 = vadd.f32 %v604, %v1003
      %v1005 = vpop.f32.mrb[0].mxu0
      %v1006 = vadd.f32 %v600, %v1005
      %v1007 = vpop.f32.mrb[0].mxu0
      %v1008 = vadd.f32 %v604, %v1007
      %1009 = vmatprep.mubr.bf16.mxu0 0
      %1010 = vmatmul.mubr.bf16.gmra.mrb[0].mxu0 %v851
      %v1011 = vpop.f32.mrb[0].mxu0
      %v1012 = vadd.f32 %v600, %v1011
      %v1013 = vpop.f32.mrb[0].mxu0
      %v1014 = vadd.f32 %v604, %v1013
      %v1015 = vpop.f32.mrb[0].mxu0
      %v1016 = vadd.f32 %v600, %v1015
      %v1017 = vpop.f32.mrb[0].mxu0
      %v1018 = vadd.f32 %v604, %v1017
      %1019 = vdwg.mxu0
      %v1030 = vcombine.high %v972, %v972
      %v1032 = vunpack.c.l.s4 1983009808
      %v1033 = vunpack.c.0.s8 %v1032
      %v1034 = vlaneseq
      %v1035 = vshrl.u32 %v1034, 7
      %v1036 = vsub.s32 %v1033, %v1035
      %v1037 = vrot.slane %v972, %v1036
      %v1039 = vunpack.c.l.s4 1983009808
      %v1040 = vunpack.c.0.s8 %v1039
      %v1041 = vlaneseq
      %v1042 = vshrl.u32 %v1041, 7
      %v1043 = vsub.s32 %v1040, %v1042
      %v1044 = vrot.slane %v1030, %v1043
      %v1045 = vcombine.high %v1037, %v1037
      %v1046 = vcombine.high %v1044, %v1044
      %v1047 = vcombine.high %v976, %v976
      %v1049 = vunpack.c.l.s4 1983009808
      %v1050 = vunpack.c.0.s8 %v1049
      %v1051 = vlaneseq
      %v1052 = vshrl.u32 %v1051, 7
      %v1053 = vsub.s32 %v1050, %v1052
      %v1054 = vrot.slane %v976, %v1053
      %v1056 = vunpack.c.l.s4 1983009808
      %v1057 = vunpack.c.0.s8 %v1056
      %v1058 = vlaneseq
      %v1059 = vshrl.u32 %v1058, 7
      %v1060 = vsub.s32 %v1057, %v1059
      %v1061 = vrot.slane %v1047, %v1060
      %v1062 = vcombine.high %v1054, %v1054
      %v1063 = vcombine.high %v1061, %v1061
      %v1064 = vcombine.high %v982, %v982
      %v1066 = vunpack.c.l.s4 1983009808
      %v1067 = vunpack.c.0.s8 %v1066
      %v1068 = vlaneseq
      %v1069 = vshrl.u32 %v1068, 7
      %v1070 = vsub.s32 %v1067, %v1069
      %v1071 = vrot.slane %v982, %v1070
      %v1073 = vunpack.c.l.s4 1983009808
      %v1074 = vunpack.c.0.s8 %v1073
      %v1075 = vlaneseq
      %v1076 = vshrl.u32 %v1075, 7
      %v1077 = vsub.s32 %v1074, %v1076
      %v1078 = vrot.slane %v1064, %v1077
      %v1079 = vcombine.high %v1071, %v1071
      %v1080 = vcombine.high %v1078, %v1078
      %v1081 = vcombine.high %v986, %v986
      %v1083 = vunpack.c.l.s4 1983009808
      %v1084 = vunpack.c.0.s8 %v1083
      %v1085 = vlaneseq
      %v1086 = vshrl.u32 %v1085, 7
      %v1087 = vsub.s32 %v1084, %v1086
      %v1088 = vrot.slane %v986, %v1087
      %v1090 = vunpack.c.l.s4 1983009808
      %v1091 = vunpack.c.0.s8 %v1090
      %v1092 = vlaneseq
      %v1093 = vshrl.u32 %v1092, 7
      %v1094 = vsub.s32 %v1091, %v1093
      %v1095 = vrot.slane %v1081, %v1094
      %v1096 = vcombine.high %v1088, %v1088
      %v1097 = vcombine.high %v1095, %v1095
      %v1098 = vcombine.high %v992, %v992
      %v1100 = vunpack.c.l.s4 1983009808
      %v1101 = vunpack.c.0.s8 %v1100
      %v1102 = vlaneseq
      %v1103 = vshrl.u32 %v1102, 7
      %v1104 = vsub.s32 %v1101, %v1103
      %v1105 = vrot.slane %v992, %v1104
      %v1107 = vunpack.c.l.s4 1983009808
      %v1108 = vunpack.c.0.s8 %v1107
      %v1109 = vlaneseq
      %v1110 = vshrl.u32 %v1109, 7
      %v1111 = vsub.s32 %v1108, %v1110
      %v1112 = vrot.slane %v1098, %v1111
      %v1113 = vcombine.high %v1105, %v1105
      %v1114 = vcombine.high %v1112, %v1112
      %v1115 = vcombine.high %v996, %v996
      %v1117 = vunpack.c.l.s4 1983009808
      %v1118 = vunpack.c.0.s8 %v1117
      %v1119 = vlaneseq
      %v1120 = vshrl.u32 %v1119, 7
      %v1121 = vsub.s32 %v1118, %v1120
      %v1122 = vrot.slane %v996, %v1121
      %v1124 = vunpack.c.l.s4 1983009808
      %v1125 = vunpack.c.0.s8 %v1124
      %v1126 = vlaneseq
      %v1127 = vshrl.u32 %v1126, 7
      %v1128 = vsub.s32 %v1125, %v1127
      %v1129 = vrot.slane %v1115, %v1128
      %v1130 = vcombine.high %v1122, %v1122
      %v1131 = vcombine.high %v1129, %v1129
      %v1132 = vcombine.high %v1002, %v1002
      %v1134 = vunpack.c.l.s4 1983009808
      %v1135 = vunpack.c.0.s8 %v1134
      %v1136 = vlaneseq
      %v1137 = vshrl.u32 %v1136, 7
      %v1138 = vsub.s32 %v1135, %v1137
      %v1139 = vrot.slane %v1002, %v1138
      %v1141 = vunpack.c.l.s4 1983009808
      %v1142 = vunpack.c.0.s8 %v1141
      %v1143 = vlaneseq
      %v1144 = vshrl.u32 %v1143, 7
      %v1145 = vsub.s32 %v1142, %v1144
      %v1146 = vrot.slane %v1132, %v1145
      %v1147 = vcombine.high %v1139, %v1139
      %v1148 = vcombine.high %v1146, %v1146
      %v1149 = vcombine.high %v1006, %v1006
      %v1151 = vunpack.c.l.s4 1983009808
      %v1152 = vunpack.c.0.s8 %v1151
      %v1153 = vlaneseq
      %v1154 = vshrl.u32 %v1153, 7
      %v1155 = vsub.s32 %v1152, %v1154
      %v1156 = vrot.slane %v1006, %v1155
      %v1158 = vunpack.c.l.s4 1983009808
      %v1159 = vunpack.c.0.s8 %v1158
      %v1160 = vlaneseq
      %v1161 = vshrl.u32 %v1160, 7
      %v1162 = vsub.s32 %v1159, %v1161
      %v1163 = vrot.slane %v1149, %v1162
      %v1164 = vcombine.high %v1156, %v1156
      %v1165 = vcombine.high %v1163, %v1163
      %v1166 = vcombine.high %v1012, %v1012
      %v1168 = vunpack.c.l.s4 1983009808
      %v1169 = vunpack.c.0.s8 %v1168
      %v1170 = vlaneseq
      %v1171 = vshrl.u32 %v1170, 7
      %v1172 = vsub.s32 %v1169, %v1171
      %v1173 = vrot.slane %v1012, %v1172
      %v1175 = vunpack.c.l.s4 1983009808
      %v1176 = vunpack.c.0.s8 %v1175
      %v1177 = vlaneseq
      %v1178 = vshrl.u32 %v1177, 7
      %v1179 = vsub.s32 %v1176, %v1178
      %v1180 = vrot.slane %v1166, %v1179
      %v1181 = vcombine.high %v1173, %v1173
      %v1182 = vcombine.high %v1180, %v1180
      %v1183 = vcombine.high %v1016, %v1016
      %v1185 = vunpack.c.l.s4 1983009808
      %v1186 = vunpack.c.0.s8 %v1185
      %v1187 = vlaneseq
      %v1188 = vshrl.u32 %v1187, 7
      %v1189 = vsub.s32 %v1186, %v1188
      %v1190 = vrot.slane %v1016, %v1189
      %v1192 = vunpack.c.l.s4 1983009808
      %v1193 = vunpack.c.0.s8 %v1192
      %v1194 = vlaneseq
      %v1195 = vshrl.u32 %v1194, 7
      %v1196 = vsub.s32 %v1193, %v1195
      %v1197 = vrot.slane %v1183, %v1196
      %v1198 = vcombine.high %v1190, %v1190
      %v1199 = vcombine.high %v1197, %v1197
      %v1200 = vcombine.low %v1037, %v1045
      %v1201 = vcombine.low %v1044, %v1046
      %v1203 = vunpack.c.l.s4 1983009808
      %v1204 = vunpack.c.0.s8 %v1203
      %v1205 = vlaneseq
      %v1206 = vshrl.u32 %v1205, 7
      %v1207 = vsub.s32 %v1204, %v1206
      %v1208 = vrot.slane %v1200, %v1207
      %v1210 = vunpack.c.l.s4 1983009808
      %v1211 = vunpack.c.0.s8 %v1210
      %v1212 = vlaneseq
      %v1213 = vshrl.u32 %v1212, 7
      %v1214 = vsub.s32 %v1211, %v1213
      %v1215 = vrot.slane %v1201, %v1214
      %v1216 = vcombine.low %v1208, %v1215
      %v1218 = vunpack.c.l.s4 1983009808
      %v1219 = vunpack.c.0.s8 %v1218
      %v1220 = vlaneseq
      %v1221 = vshrl.u32 %v1220, 7
      %v1222 = vsub.s32 %v1219, %v1221
      %v1223 = vrot.slane %v1054, %v1222
      %v1224 = vcombine.low %v1062, %v1061
      %v1225 = vcombine.low %v1063, %v1071
      %v1227 = vunpack.c.l.s4 1983009808
      %v1228 = vunpack.c.0.s8 %v1227
      %v1229 = vlaneseq
      %v1230 = vshrl.u32 %v1229, 7
      %v1231 = vsub.s32 %v1228, %v1230
      %v1232 = vrot.slane %v1224, %v1231
      %v1234 = vunpack.c.l.s4 1983009808
      %v1235 = vunpack.c.0.s8 %v1234
      %v1236 = vlaneseq
      %v1237 = vshrl.u32 %v1236, 7
      %v1238 = vsub.s32 %v1235, %v1237
      %v1239 = vrot.slane %v1225, %v1238
      %v1240 = vcombine.low %v1232, %v1239
      %v1242 = vunpack.c.l.s4 1983009808
      %v1243 = vunpack.c.0.s8 %v1242
      %v1244 = vlaneseq
      %v1245 = vshrl.u32 %v1244, 7
      %v1246 = vsub.s32 %v1243, %v1245
      %v1247 = vrot.slane %v1079, %v1246
      %v1248 = vcombine.low %v1078, %v1080
      %v1249 = vcombine.low %v1088, %v1096
      %v1251 = vunpack.c.l.s4 1983009808
      %v1252 = vunpack.c.0.s8 %v1251
      %v1253 = vlaneseq
      %v1254 = vshrl.u32 %v1253, 7
      %v1255 = vsub.s32 %v1252, %v1254
      %v1256 = vrot.slane %v1248, %v1255
      %v1258 = vunpack.c.l.s4 1983009808
      %v1259 = vunpack.c.0.s8 %v1258
      %v1260 = vlaneseq
      %v1261 = vshrl.u32 %v1260, 7
      %v1262 = vsub.s32 %v1259, %v1261
      %v1263 = vrot.slane %v1249, %v1262
      %v1264 = vcombine.low %v1256, %v1263
      %v1266 = vunpack.c.l.s4 1983009808
      %v1267 = vunpack.c.0.s8 %v1266
      %v1268 = vlaneseq
      %v1269 = vshrl.u32 %v1268, 7
      %v1270 = vsub.s32 %v1267, %v1269
      %v1271 = vrot.slane %v1095, %v1270
      %v1272 = vcombine.low %v1097, %v1105
      %v1273 = vcombine.low %v1113, %v1112
      %v1275 = vunpack.c.l.s4 1983009808
      %v1276 = vunpack.c.0.s8 %v1275
      %v1277 = vlaneseq
      %v1278 = vshrl.u32 %v1277, 7
      %v1279 = vsub.s32 %v1276, %v1278
      %v1280 = vrot.slane %v1272, %v1279
      %v1282 = vunpack.c.l.s4 1983009808
      %v1283 = vunpack.c.0.s8 %v1282
      %v1284 = vlaneseq
      %v1285 = vshrl.u32 %v1284, 7
      %v1286 = vsub.s32 %v1283, %v1285
      %v1287 = vrot.slane %v1273, %v1286
      %v1288 = vcombine.low %v1280, %v1287
      %v1290 = vunpack.c.l.s4 1983009808
      %v1291 = vunpack.c.0.s8 %v1290
      %v1292 = vlaneseq
      %v1293 = vshrl.u32 %v1292, 7
      %v1294 = vsub.s32 %v1291, %v1293
      %v1295 = vrot.slane %v1114, %v1294
      %v1296 = vcombine.low %v1122, %v1130
      %v1297 = vcombine.low %v1129, %v1131
      %v1299 = vunpack.c.l.s4 1983009808
      %v1300 = vunpack.c.0.s8 %v1299
      %v1301 = vlaneseq
      %v1302 = vshrl.u32 %v1301, 7
      %v1303 = vsub.s32 %v1300, %v1302
      %v1304 = vrot.slane %v1296, %v1303
      %v1306 = vunpack.c.l.s4 1983009808
      %v1307 = vunpack.c.0.s8 %v1306
      %v1308 = vlaneseq
      %v1309 = vshrl.u32 %v1308, 7
      %v1310 = vsub.s32 %v1307, %v1309
      %v1311 = vrot.slane %v1297, %v1310
      %v1312 = vcombine.low %v1304, %v1311
      %v1314 = vunpack.c.l.s4 1983009808
      %v1315 = vunpack.c.0.s8 %v1314
      %v1316 = vlaneseq
      %v1317 = vshrl.u32 %v1316, 7
      %v1318 = vsub.s32 %v1315, %v1317
      %v1319 = vrot.slane %v1139, %v1318
      %v1320 = vcombine.low %v1147, %v1146
      %v1321 = vcombine.low %v1148, %v1156
      %v1323 = vunpack.c.l.s4 1983009808
      %v1324 = vunpack.c.0.s8 %v1323
      %v1325 = vlaneseq
      %v1326 = vshrl.u32 %v1325, 7
      %v1327 = vsub.s32 %v1324, %v1326
      %v1328 = vrot.slane %v1320, %v1327
      %v1330 = vunpack.c.l.s4 1983009808
      %v1331 = vunpack.c.0.s8 %v1330
      %v1332 = vlaneseq
      %v1333 = vshrl.u32 %v1332, 7
      %v1334 = vsub.s32 %v1331, %v1333
      %v1335 = vrot.slane %v1321, %v1334
      %v1336 = vcombine.low %v1328, %v1335
      %v1338 = vunpack.c.l.s4 1983009808
      %v1339 = vunpack.c.0.s8 %v1338
      %v1340 = vlaneseq
      %v1341 = vshrl.u32 %v1340, 7
      %v1342 = vsub.s32 %v1339, %v1341
      %v1343 = vrot.slane %v1164, %v1342
      %v1344 = vcombine.low %v1163, %v1165
      %v1345 = vcombine.low %v1173, %v1181
      %v1347 = vunpack.c.l.s4 1983009808
      %v1348 = vunpack.c.0.s8 %v1347
      %v1349 = vlaneseq
      %v1350 = vshrl.u32 %v1349, 7
      %v1351 = vsub.s32 %v1348, %v1350
      %v1352 = vrot.slane %v1344, %v1351
      %v1354 = vunpack.c.l.s4 1983009808
      %v1355 = vunpack.c.0.s8 %v1354
      %v1356 = vlaneseq
      %v1357 = vshrl.u32 %v1356, 7
      %v1358 = vsub.s32 %v1355, %v1357
      %v1359 = vrot.slane %v1345, %v1358
      %v1360 = vcombine.low %v1352, %v1359
      %v1362 = vunpack.c.l.s4 1983009808
      %v1363 = vunpack.c.0.s8 %v1362
      %v1364 = vlaneseq
      %v1365 = vshrl.u32 %v1364, 7
      %v1366 = vsub.s32 %v1363, %v1365
      %v1367 = vrot.slane %v1180, %v1366
      %v1368 = vcombine.low %v1182, %v1190
      %v1369 = vcombine.low %v1198, %v1197
      %v1371 = vunpack.c.l.s4 1983009808
      %v1372 = vunpack.c.0.s8 %v1371
      %v1373 = vlaneseq
      %v1374 = vshrl.u32 %v1373, 7
      %v1375 = vsub.s32 %v1372, %v1374
      %v1376 = vrot.slane %v1368, %v1375
      %v1378 = vunpack.c.l.s4 1983009808
      %v1379 = vunpack.c.0.s8 %v1378
      %v1380 = vlaneseq
      %v1381 = vshrl.u32 %v1380, 7
      %v1382 = vsub.s32 %v1379, %v1381
      %v1383 = vrot.slane %v1369, %v1382
      %v1384 = vcombine.low %v1376, %v1383
      %v1386 = vunpack.c.l.s4 1983009808
      %v1387 = vunpack.c.0.s8 %v1386
      %v1388 = vlaneseq
      %v1389 = vshrl.u32 %v1388, 7
      %v1390 = vsub.s32 %v1387, %v1389
      %v1391 = vrot.slane %v1199, %v1390
      %s1408 = smul.u32 0, 16
      %s1409 = scalar_lea.vmem [#allocation3], %s1408
      %1410 = vst [vmem:[%s1409] sm:$0xff] %v1216
      %1411 = vst [vmem:[%s1409 + $0x8] sm:$0x3] %v1223
      %1412 = vst [vmem:[%s1409 + $0x10] sm:$0xff] %v1240
      %1413 = vst [vmem:[%s1409 + $0x18] sm:$0x3] %v1247
      %1414 = vst [vmem:[%s1409 + $0x20] sm:$0xff] %v1264
      %1415 = vst [vmem:[%s1409 + $0x28] sm:$0x3] %v1271
      %1416 = vst [vmem:[%s1409 + $0x30] sm:$0xff] %v1288
      %1417 = vst [vmem:[%s1409 + $0x38] sm:$0x3] %v1295
      %1418 = vst [vmem:[%s1409 + $0x40] sm:$0xff] %v1312
      %1419 = vst [vmem:[%s1409 + $0x48] sm:$0x3] %v1319
      %1420 = vst [vmem:[%s1409 + $0x50] sm:$0xff] %v1336
      %1421 = vst [vmem:[%s1409 + $0x58] sm:$0x3] %v1343
      %1422 = vst [vmem:[%s1409 + $0x60] sm:$0xff] %v1360
      %1423 = vst [vmem:[%s1409 + $0x68] sm:$0x3] %v1367
      %1424 = vst [vmem:[%s1409 + $0x70] sm:$0xff] %v1384
      %1425 = vst [vmem:[%s1409 + $0x78] sm:$0x3] %v1391
      %vm1426 = vcmp.gt.f32.partialorder %v974, 0.0
      %vm1427 = vcmp.gt.f32.partialorder %v978, 0.0
      %vm1428 = vcmp.gt.f32.partialorder %v984, 0.0
      %vm1429 = vcmp.gt.f32.partialorder %v988, 0.0
      %vm1430 = vcmp.gt.f32.partialorder %v994, 0.0
      %vm1431 = vcmp.gt.f32.partialorder %v998, 0.0
      %vm1432 = vcmp.gt.f32.partialorder %v1004, 0.0
      %vm1433 = vcmp.gt.f32.partialorder %v1008, 0.0
      %vm1434 = vcmp.gt.f32.partialorder %v1014, 0.0
      %vm1435 = vcmp.gt.f32.partialorder %v1018, 0.0
      %v1436 = vmul.f32 %v974, 0.01
      %v1437 = vmul.f32 %v978, 0.01
      %v1438 = vmul.f32 %v984, 0.01
      %v1439 = vmul.f32 %v988, 0.01
      %v1440 = vmul.f32 %v994, 0.01
      %v1441 = vmul.f32 %v998, 0.01
      %v1442 = vmul.f32 %v1004, 0.01
      %v1443 = vmul.f32 %v1008, 0.01
      %v1444 = vmul.f32 %v1014, 0.01
      %v1445 = vmul.f32 %v1018, 0.01
      %v1446 = vsel %vm1426, %v974, %v1436
      %v1447 = vsel %vm1427, %v978, %v1437
      %v1448 = vsel %vm1428, %v984, %v1438
      %v1449 = vsel %vm1429, %v988, %v1439
      %v1450 = vsel %vm1430, %v994, %v1440
      %v1451 = vsel %vm1431, %v998, %v1441
      %v1452 = vsel %vm1432, %v1004, %v1442
      %v1453 = vsel %vm1433, %v1008, %v1443
      %v1454 = vsel %vm1434, %v1014, %v1444
      %v1455 = vsel %vm1435, %v1018, %v1445
      %v1466 = vcombine.high %v1446, %v1446
      %v1468 = vunpack.c.l.s4 1983009808
      %v1469 = vunpack.c.0.s8 %v1468
      %v1470 = vlaneseq
      %v1471 = vshrl.u32 %v1470, 7
      %v1472 = vsub.s32 %v1469, %v1471
      %v1473 = vrot.slane %v1446, %v1472
      %v1475 = vunpack.c.l.s4 1983009808
      %v1476 = vunpack.c.0.s8 %v1475
      %v1477 = vlaneseq
      %v1478 = vshrl.u32 %v1477, 7
      %v1479 = vsub.s32 %v1476, %v1478
      %v1480 = vrot.slane %v1466, %v1479
      %v1481 = vcombine.high %v1473, %v1473
      %v1482 = vcombine.high %v1480, %v1480
      %v1483 = vcombine.high %v1447, %v1447
      %v1485 = vunpack.c.l.s4 1983009808
      %v1486 = vunpack.c.0.s8 %v1485
      %v1487 = vlaneseq
      %v1488 = vshrl.u32 %v1487, 7
      %v1489 = vsub.s32 %v1486, %v1488
      %v1490 = vrot.slane %v1447, %v1489
      %v1492 = vunpack.c.l.s4 1983009808
      %v1493 = vunpack.c.0.s8 %v1492
      %v1494 = vlaneseq
      %v1495 = vshrl.u32 %v1494, 7
      %v1496 = vsub.s32 %v1493, %v1495
      %v1497 = vrot.slane %v1483, %v1496
      %v1498 = vcombine.high %v1490, %v1490
      %v1499 = vcombine.high %v1497, %v1497
      %v1500 = vcombine.high %v1448, %v1448
      %v1502 = vunpack.c.l.s4 1983009808
      %v1503 = vunpack.c.0.s8 %v1502
      %v1504 = vlaneseq
      %v1505 = vshrl.u32 %v1504, 7
      %v1506 = vsub.s32 %v1503, %v1505
      %v1507 = vrot.slane %v1448, %v1506
      %v1509 = vunpack.c.l.s4 1983009808
      %v1510 = vunpack.c.0.s8 %v1509
      %v1511 = vlaneseq
      %v1512 = vshrl.u32 %v1511, 7
      %v1513 = vsub.s32 %v1510, %v1512
      %v1514 = vrot.slane %v1500, %v1513
      %v1515 = vcombine.high %v1507, %v1507
      %v1516 = vcombine.high %v1514, %v1514
      %v1517 = vcombine.high %v1449, %v1449
      %v1519 = vunpack.c.l.s4 1983009808
      %v1520 = vunpack.c.0.s8 %v1519
      %v1521 = vlaneseq
      %v1522 = vshrl.u32 %v1521, 7
      %v1523 = vsub.s32 %v1520, %v1522
      %v1524 = vrot.slane %v1449, %v1523
      %v1526 = vunpack.c.l.s4 1983009808
      %v1527 = vunpack.c.0.s8 %v1526
      %v1528 = vlaneseq
      %v1529 = vshrl.u32 %v1528, 7
      %v1530 = vsub.s32 %v1527, %v1529
      %v1531 = vrot.slane %v1517, %v1530
      %v1532 = vcombine.high %v1524, %v1524
      %v1533 = vcombine.high %v1531, %v1531
      %v1534 = vcombine.high %v1450, %v1450
      %v1536 = vunpack.c.l.s4 1983009808
      %v1537 = vunpack.c.0.s8 %v1536
      %v1538 = vlaneseq
      %v1539 = vshrl.u32 %v1538, 7
      %v1540 = vsub.s32 %v1537, %v1539
      %v1541 = vrot.slane %v1450, %v1540
      %v1543 = vunpack.c.l.s4 1983009808
      %v1544 = vunpack.c.0.s8 %v1543
      %v1545 = vlaneseq
      %v1546 = vshrl.u32 %v1545, 7
      %v1547 = vsub.s32 %v1544, %v1546
      %v1548 = vrot.slane %v1534, %v1547
      %v1549 = vcombine.high %v1541, %v1541
      %v1550 = vcombine.high %v1548, %v1548
      %v1551 = vcombine.high %v1451, %v1451
      %v1553 = vunpack.c.l.s4 1983009808
      %v1554 = vunpack.c.0.s8 %v1553
      %v1555 = vlaneseq
      %v1556 = vshrl.u32 %v1555, 7
      %v1557 = vsub.s32 %v1554, %v1556
      %v1558 = vrot.slane %v1451, %v1557
      %v1560 = vunpack.c.l.s4 1983009808
      %v1561 = vunpack.c.0.s8 %v1560
      %v1562 = vlaneseq
      %v1563 = vshrl.u32 %v1562, 7
      %v1564 = vsub.s32 %v1561, %v1563
      %v1565 = vrot.slane %v1551, %v1564
      %v1566 = vcombine.high %v1558, %v1558
      %v1567 = vcombine.high %v1565, %v1565
      %v1568 = vcombine.high %v1452, %v1452
      %v1570 = vunpack.c.l.s4 1983009808
      %v1571 = vunpack.c.0.s8 %v1570
      %v1572 = vlaneseq
      %v1573 = vshrl.u32 %v1572, 7
      %v1574 = vsub.s32 %v1571, %v1573
      %v1575 = vrot.slane %v1452, %v1574
      %v1577 = vunpack.c.l.s4 1983009808
      %v1578 = vunpack.c.0.s8 %v1577
      %v1579 = vlaneseq
      %v1580 = vshrl.u32 %v1579, 7
      %v1581 = vsub.s32 %v1578, %v1580
      %v1582 = vrot.slane %v1568, %v1581
      %v1583 = vcombine.high %v1575, %v1575
      %v1584 = vcombine.high %v1582, %v1582
      %v1585 = vcombine.high %v1453, %v1453
      %v1587 = vunpack.c.l.s4 1983009808
      %v1588 = vunpack.c.0.s8 %v1587
      %v1589 = vlaneseq
      %v1590 = vshrl.u32 %v1589, 7
      %v1591 = vsub.s32 %v1588, %v1590
      %v1592 = vrot.slane %v1453, %v1591
      %v1594 = vunpack.c.l.s4 1983009808
      %v1595 = vunpack.c.0.s8 %v1594
      %v1596 = vlaneseq
      %v1597 = vshrl.u32 %v1596, 7
      %v1598 = vsub.s32 %v1595, %v1597
      %v1599 = vrot.slane %v1585, %v1598
      %v1600 = vcombine.high %v1592, %v1592
      %v1601 = vcombine.high %v1599, %v1599
      %v1602 = vcombine.high %v1454, %v1454
      %v1604 = vunpack.c.l.s4 1983009808
      %v1605 = vunpack.c.0.s8 %v1604
      %v1606 = vlaneseq
      %v1607 = vshrl.u32 %v1606, 7
      %v1608 = vsub.s32 %v1605, %v1607
      %v1609 = vrot.slane %v1454, %v1608
      %v1611 = vunpack.c.l.s4 1983009808
      %v1612 = vunpack.c.0.s8 %v1611
      %v1613 = vlaneseq
      %v1614 = vshrl.u32 %v1613, 7
      %v1615 = vsub.s32 %v1612, %v1614
      %v1616 = vrot.slane %v1602, %v1615
      %v1617 = vcombine.high %v1609, %v1609
      %v1618 = vcombine.high %v1616, %v1616
      %v1619 = vcombine.high %v1455, %v1455
      %v1621 = vunpack.c.l.s4 1983009808
      %v1622 = vunpack.c.0.s8 %v1621
      %v1623 = vlaneseq
      %v1624 = vshrl.u32 %v1623, 7
      %v1625 = vsub.s32 %v1622, %v1624
      %v1626 = vrot.slane %v1455, %v1625
      %v1628 = vunpack.c.l.s4 1983009808
      %v1629 = vunpack.c.0.s8 %v1628
      %v1630 = vlaneseq
      %v1631 = vshrl.u32 %v1630, 7
      %v1632 = vsub.s32 %v1629, %v1631
      %v1633 = vrot.slane %v1619, %v1632
      %v1634 = vcombine.high %v1626, %v1626
      %v1635 = vcombine.high %v1633, %v1633
      %v1636 = vcombine.low %v1473, %v1481
      %v1637 = vcombine.low %v1480, %v1482
      %v1639 = vunpack.c.l.s4 1983009808
      %v1640 = vunpack.c.0.s8 %v1639
      %v1641 = vlaneseq
      %v1642 = vshrl.u32 %v1641, 7
      %v1643 = vsub.s32 %v1640, %v1642
      %v1644 = vrot.slane %v1636, %v1643
      %v1646 = vunpack.c.l.s4 1983009808
      %v1647 = vunpack.c.0.s8 %v1646
      %v1648 = vlaneseq
      %v1649 = vshrl.u32 %v1648, 7
      %v1650 = vsub.s32 %v1647, %v1649
      %v1651 = vrot.slane %v1637, %v1650
      %v1652 = vcombine.low %v1644, %v1651
      %v1654 = vunpack.c.l.s4 1983009808
      %v1655 = vunpack.c.0.s8 %v1654
      %v1656 = vlaneseq
      %v1657 = vshrl.u32 %v1656, 7
      %v1658 = vsub.s32 %v1655, %v1657
      %v1659 = vrot.slane %v1490, %v1658
      %v1660 = vcombine.low %v1498, %v1497
      %v1661 = vcombine.low %v1499, %v1507
      %v1663 = vunpack.c.l.s4 1983009808
      %v1664 = vunpack.c.0.s8 %v1663
      %v1665 = vlaneseq
      %v1666 = vshrl.u32 %v1665, 7
      %v1667 = vsub.s32 %v1664, %v1666
      %v1668 = vrot.slane %v1660, %v1667
      %v1670 = vunpack.c.l.s4 1983009808
      %v1671 = vunpack.c.0.s8 %v1670
      %v1672 = vlaneseq
      %v1673 = vshrl.u32 %v1672, 7
      %v1674 = vsub.s32 %v1671, %v1673
      %v1675 = vrot.slane %v1661, %v1674
      %v1676 = vcombine.low %v1668, %v1675
      %v1678 = vunpack.c.l.s4 1983009808
      %v1679 = vunpack.c.0.s8 %v1678
      %v1680 = vlaneseq
      %v1681 = vshrl.u32 %v1680, 7
      %v1682 = vsub.s32 %v1679, %v1681
      %v1683 = vrot.slane %v1515, %v1682
      %v1684 = vcombine.low %v1514, %v1516
      %v1685 = vcombine.low %v1524, %v1532
      %v1687 = vunpack.c.l.s4 1983009808
      %v1688 = vunpack.c.0.s8 %v1687
      %v1689 = vlaneseq
      %v1690 = vshrl.u32 %v1689, 7
      %v1691 = vsub.s32 %v1688, %v1690
      %v1692 = vrot.slane %v1684, %v1691
      %v1694 = vunpack.c.l.s4 1983009808
      %v1695 = vunpack.c.0.s8 %v1694
      %v1696 = vlaneseq
      %v1697 = vshrl.u32 %v1696, 7
      %v1698 = vsub.s32 %v1695, %v1697
      %v1699 = vrot.slane %v1685, %v1698
      %v1700 = vcombine.low %v1692, %v1699
      %v1702 = vunpack.c.l.s4 1983009808
      %v1703 = vunpack.c.0.s8 %v1702
      %v1704 = vlaneseq
      %v1705 = vshrl.u32 %v1704, 7
      %v1706 = vsub.s32 %v1703, %v1705
      %v1707 = vrot.slane %v1531, %v1706
      %v1708 = vcombine.low %v1533, %v1541
      %v1709 = vcombine.low %v1549, %v1548
      %v1711 = vunpack.c.l.s4 1983009808
      %v1712 = vunpack.c.0.s8 %v1711
      %v1713 = vlaneseq
      %v1714 = vshrl.u32 %v1713, 7
      %v1715 = vsub.s32 %v1712, %v1714
      %v1716 = vrot.slane %v1708, %v1715
      %v1718 = vunpack.c.l.s4 1983009808
      %v1719 = vunpack.c.0.s8 %v1718
      %v1720 = vlaneseq
      %v1721 = vshrl.u32 %v1720, 7
      %v1722 = vsub.s32 %v1719, %v1721
      %v1723 = vrot.slane %v1709, %v1722
      %v1724 = vcombine.low %v1716, %v1723
      %v1726 = vunpack.c.l.s4 1983009808
      %v1727 = vunpack.c.0.s8 %v1726
      %v1728 = vlaneseq
      %v1729 = vshrl.u32 %v1728, 7
      %v1730 = vsub.s32 %v1727, %v1729
      %v1731 = vrot.slane %v1550, %v1730
      %v1732 = vcombine.low %v1558, %v1566
      %v1733 = vcombine.low %v1565, %v1567
      %v1735 = vunpack.c.l.s4 1983009808
      %v1736 = vunpack.c.0.s8 %v1735
      %v1737 = vlaneseq
      %v1738 = vshrl.u32 %v1737, 7
      %v1739 = vsub.s32 %v1736, %v1738
      %v1740 = vrot.slane %v1732, %v1739
      %v1742 = vunpack.c.l.s4 1983009808
      %v1743 = vunpack.c.0.s8 %v1742
      %v1744 = vlaneseq
      %v1745 = vshrl.u32 %v1744, 7
      %v1746 = vsub.s32 %v1743, %v1745
      %v1747 = vrot.slane %v1733, %v1746
      %v1748 = vcombine.low %v1740, %v1747
      %v1750 = vunpack.c.l.s4 1983009808
      %v1751 = vunpack.c.0.s8 %v1750
      %v1752 = vlaneseq
      %v1753 = vshrl.u32 %v1752, 7
      %v1754 = vsub.s32 %v1751, %v1753
      %v1755 = vrot.slane %v1575, %v1754
      %v1756 = vcombine.low %v1583, %v1582
      %v1757 = vcombine.low %v1584, %v1592
      %v1759 = vunpack.c.l.s4 1983009808
      %v1760 = vunpack.c.0.s8 %v1759
      %v1761 = vlaneseq
      %v1762 = vshrl.u32 %v1761, 7
      %v1763 = vsub.s32 %v1760, %v1762
      %v1764 = vrot.slane %v1756, %v1763
      %v1766 = vunpack.c.l.s4 1983009808
      %v1767 = vunpack.c.0.s8 %v1766
      %v1768 = vlaneseq
      %v1769 = vshrl.u32 %v1768, 7
      %v1770 = vsub.s32 %v1767, %v1769
      %v1771 = vrot.slane %v1757, %v1770
      %v1772 = vcombine.low %v1764, %v1771
      %v1774 = vunpack.c.l.s4 1983009808
      %v1775 = vunpack.c.0.s8 %v1774
      %v1776 = vlaneseq
      %v1777 = vshrl.u32 %v1776, 7
      %v1778 = vsub.s32 %v1775, %v1777
      %v1779 = vrot.slane %v1600, %v1778
      %v1780 = vcombine.low %v1599, %v1601
      %v1781 = vcombine.low %v1609, %v1617
      %v1783 = vunpack.c.l.s4 1983009808
      %v1784 = vunpack.c.0.s8 %v1783
      %v1785 = vlaneseq
      %v1786 = vshrl.u32 %v1785, 7
      %v1787 = vsub.s32 %v1784, %v1786
      %v1788 = vrot.slane %v1780, %v1787
      %v1790 = vunpack.c.l.s4 1983009808
      %v1791 = vunpack.c.0.s8 %v1790
      %v1792 = vlaneseq
      %v1793 = vshrl.u32 %v1792, 7
      %v1794 = vsub.s32 %v1791, %v1793
      %v1795 = vrot.slane %v1781, %v1794
      %v1796 = vcombine.low %v1788, %v1795
      %v1798 = vunpack.c.l.s4 1983009808
      %v1799 = vunpack.c.0.s8 %v1798
      %v1800 = vlaneseq
      %v1801 = vshrl.u32 %v1800, 7
      %v1802 = vsub.s32 %v1799, %v1801
      %v1803 = vrot.slane %v1616, %v1802
      %v1804 = vcombine.low %v1618, %v1626
      %v1805 = vcombine.low %v1634, %v1633
      %v1807 = vunpack.c.l.s4 1983009808
      %v1808 = vunpack.c.0.s8 %v1807
      %v1809 = vlaneseq
      %v1810 = vshrl.u32 %v1809, 7
      %v1811 = vsub.s32 %v1808, %v1810
      %v1812 = vrot.slane %v1804, %v1811
      %v1814 = vunpack.c.l.s4 1983009808
      %v1815 = vunpack.c.0.s8 %v1814
      %v1816 = vlaneseq
      %v1817 = vshrl.u32 %v1816, 7
      %v1818 = vsub.s32 %v1815, %v1817
      %v1819 = vrot.slane %v1805, %v1818
      %v1820 = vcombine.low %v1812, %v1819
      %v1822 = vunpack.c.l.s4 1983009808
      %v1823 = vunpack.c.0.s8 %v1822
      %v1824 = vlaneseq
      %v1825 = vshrl.u32 %v1824, 7
      %v1826 = vsub.s32 %v1823, %v1825
      %v1827 = vrot.slane %v1635, %v1826
      %v1844 = vsel %vm255, %v1652, 0.0
      %v1845 = vsel %vm256, %v1659, 0.0
      %v1846 = vsel %vm255, %v1676, 0.0
      %v1847 = vsel %vm256, %v1683, 0.0
      %v1848 = vsel %vm255, %v1700, 0.0
      %v1849 = vsel %vm256, %v1707, 0.0
      %v1850 = vsel %vm255, %v1724, 0.0
      %v1851 = vsel %vm256, %v1731, 0.0
      %v1852 = vsel %vm255, %v1748, 0.0
      %v1853 = vsel %vm256, %v1755, 0.0
      %v1854 = vsel %vm255, %v1772, 0.0
      %v1855 = vsel %vm256, %v1779, 0.0
      %v1856 = vsel %vm255, %v1796, 0.0
      %v1857 = vsel %vm256, %v1803, 0.0
      %v1858 = vsel %vm255, %v1820, 0.0
      %v1859 = vsel %vm256, %v1827, 0.0
      %v1860 = vpack.c.bf16 %v1845, %v1844
      %v1861 = vpack.c.bf16 %v1847, %v1846
      %v1862 = vpack.c.bf16 %v1849, %v1848
      %v1863 = vpack.c.bf16 %v1851, %v1850
      %v1864 = vpack.c.bf16 %v1853, %v1852
      %v1865 = vpack.c.bf16 %v1855, %v1854
      %v1866 = vpack.c.bf16 %v1857, %v1856
      %v1867 = vpack.c.bf16 %v1859, %v1858
      %s1868 = sadd.s32 0, 1
      %v1877 = vunpack.c.l.b16 %v1860
      %v1878 = vunpack.c.h.b16 %v1860
      %v1879 = vunpack.c.l.b16 %v1861
      %v1880 = vunpack.c.h.b16 %v1861
      %v1881 = vunpack.c.l.b16 %v1862
      %v1882 = vunpack.c.h.b16 %v1862
      %v1883 = vunpack.c.l.b16 %v1863
      %v1884 = vunpack.c.h.b16 %v1863
      %v1885 = vunpack.c.l.b16 %v1864
      %v1886 = vunpack.c.h.b16 %v1864
      %v1887 = vunpack.c.l.b16 %v1865
      %v1888 = vunpack.c.h.b16 %v1865
      %v1889 = vunpack.c.l.b16 %v1866
      %v1890 = vunpack.c.h.b16 %v1866
      %v1891 = vunpack.c.l.b16 %v1867
      %v1892 = vunpack.c.h.b16 %v1867
      %v1893 = vpack.c.b16 %v1877, %v1877
      %v1894 = vpack.c.b16 %v1878, %v1878
      %v1895 = vpack.c.b16 %v1879, %v1879
      %v1896 = vpack.c.b16 %v1880, %v1880
      %v1897 = vpack.c.b16 %v1881, %v1881
      %v1898 = vpack.c.b16 %v1882, %v1882
      %v1899 = vpack.c.b16 %v1883, %v1883
      %v1900 = vpack.c.b16 %v1884, %v1884
      %v1901 = vpack.c.b16 %v1885, %v1885
      %v1902 = vpack.c.b16 %v1886, %v1886
      %v1903 = vpack.c.b16 %v1887, %v1887
      %v1904 = vpack.c.b16 %v1888, %v1888
      %v1905 = vpack.c.b16 %v1889, %v1889
      %v1906 = vpack.c.b16 %v1890, %v1890
      %v1907 = vpack.c.b16 %v1891, %v1891
      %v1908 = vpack.c.b16 %v1892, %v1892
      %s1925 = smul.u32 %s1868, 2
      %s1926 = smul.addr %s1925, 4
      %s1927 = scalar_lea.vmem [#allocation2], %s1926
      %1928 = vst [vmem:[%s1927] sm:$0xf] %v1893
      %1929 = vst [vmem:[%s1927 + $0x4] sm:$0x1] %v1894
      %1930 = vst [vmem:[%s1927 + $0x8] sm:$0xf] %v1895
      %1931 = vst [vmem:[%s1927 + $0xc] sm:$0x1] %v1896
      %1932 = vst [vmem:[%s1927 + $0x10] sm:$0xf] %v1897
      %1933 = vst [vmem:[%s1927 + $0x14] sm:$0x1] %v1898
      %1934 = vst [vmem:[%s1927 + $0x18] sm:$0xf] %v1899
      %1935 = vst [vmem:[%s1927 + $0x1c] sm:$0x1] %v1900
      %1936 = vst [vmem:[%s1927 + $0x20] sm:$0xf] %v1901
      %1937 = vst [vmem:[%s1927 + $0x24] sm:$0x1] %v1902
      %1938 = vst [vmem:[%s1927 + $0x28] sm:$0xf] %v1903
      %1939 = vst [vmem:[%s1927 + $0x2c] sm:$0x1] %v1904
      %1940 = vst [vmem:[%s1927 + $0x30] sm:$0xf] %v1905
      %1941 = vst [vmem:[%s1927 + $0x34] sm:$0x1] %v1906
      %1942 = vst [vmem:[%s1927 + $0x38] sm:$0xf] %v1907
      %1943 = vst [vmem:[%s1927 + $0x3c] sm:$0x1] %v1908
      %v1944 = vld [vmem:[%s4] sm:$0x1]
      %s1945 = smul.addr %s257, 4
      %s1946 = scalar_lea.vmem [#allocation2], %s1945
      %v1947 = vld [vmem:[%s1946] sm:$0xf]
      %v1948 = vld [vmem:[%s1946 + $0x8] sm:$0xf]
      %v1949 = vld [vmem:[%s1946 + $0x10] sm:$0xf]
      %v1950 = vld [vmem:[%s1946 + $0x18] sm:$0xf]
      %v1951 = vld [vmem:[%s1946 + $0x20] sm:$0xf]
      %v1952 = vld [vmem:[%s1946 + $0x28] sm:$0xf]
      %v1953 = vld [vmem:[%s1946 + $0x30] sm:$0xf]
      %v1954 = vld [vmem:[%s1946 + $0x38] sm:$0xf]
      %v1955 = vld [vmem:[%s3] sm:$0xf]
      %v1956 = vld [vmem:[%s3 + $0x4] sm:$0xf]
      %v1957 = vld [vmem:[%s3 + $0x8] sm:$0xf]
      %v1958 = vld [vmem:[%s3 + $0xc] sm:$0xf]
      %v1959 = vld [vmem:[%s3 + $0x10] sm:$0xf]
      %v1960 = vld [vmem:[%s3 + $0x14] sm:$0xf]
      %v1961 = vld [vmem:[%s3 + $0x18] sm:$0xf]
      %v1962 = vld [vmem:[%s3 + $0x1c] sm:$0xf]
      %v1963 = vld [vmem:[%s3 + $0x20] sm:$0xf]
      %v1964 = vld [vmem:[%s3 + $0x24] sm:$0xf]
      %v1965 = vld [vmem:[%s3 + $0x28] sm:$0xf]
      %v1966 = vld [vmem:[%s3 + $0x2c] sm:$0xf]
      %v1967 = vld [vmem:[%s3 + $0x30] sm:$0xf]
      %v1968 = vld [vmem:[%s3 + $0x34] sm:$0xf]
      %v1969 = vld [vmem:[%s3 + $0x38] sm:$0xf]
      %v1970 = vld [vmem:[%s3 + $0x3c] sm:$0xf]
      %v1971 = vld [vmem:[%s1946 + $0x4] sm:$0x1]
      %v1972 = vld [vmem:[%s1946 + $0xc] sm:$0x1]
      %v1973 = vld [vmem:[%s1946 + $0x14] sm:$0x1]
      %v1974 = vld [vmem:[%s1946 + $0x1c] sm:$0x1]
      %v1975 = vld [vmem:[%s1946 + $0x24] sm:$0x1]
      %v1976 = vld [vmem:[%s1946 + $0x2c] sm:$0x1]
      %v1977 = vld [vmem:[%s1946 + $0x34] sm:$0x1]
      %v1978 = vld [vmem:[%s1946 + $0x3c] sm:$0x1]
      %vm1979 = vsmask.f32 3328
      %vm1980 = vsmask.f32 7440
      %vm1981 = vmor %vm1979, %vm1980
      %v1983 = vshrl.u32 %v1947, 16
      %v1985 = vrot.slane %v1983, 4
      %v1986 = vshll.u32 %v1947, 16
      %v1988 = vrot.slane %v1986, 5
      %v1989 = vor.u32 %v1985, %v1988
      %v1990 = vrot.slane %v1989, 4
      %v1992 = vshll.u32 %v1971, 16
      %v1994 = vrot.slane %v1992, 5
      %v1995 = vsel %vm1981, %v1990, %v1994
      %v1997 = vshrl.u32 %v1948, 16
      %v1999 = vrot.slane %v1997, 4
      %v2000 = vshll.u32 %v1948, 16
      %v2002 = vrot.slane %v2000, 5
      %v2003 = vor.u32 %v1999, %v2002
      %v2004 = vrot.slane %v2003, 4
      %v2006 = vshll.u32 %v1972, 16
      %v2008 = vrot.slane %v2006, 5
      %v2009 = vsel %vm1981, %v2004, %v2008
      %v2011 = vshrl.u32 %v1949, 16
      %v2013 = vrot.slane %v2011, 4
      %v2014 = vshll.u32 %v1949, 16
      %v2016 = vrot.slane %v2014, 5
      %v2017 = vor.u32 %v2013, %v2016
      %v2018 = vrot.slane %v2017, 4
      %v2020 = vshll.u32 %v1973, 16
      %v2022 = vrot.slane %v2020, 5
      %v2023 = vsel %vm1981, %v2018, %v2022
      %v2025 = vshrl.u32 %v1950, 16
      %v2027 = vrot.slane %v2025, 4
      %v2028 = vshll.u32 %v1950, 16
      %v2030 = vrot.slane %v2028, 5
      %v2031 = vor.u32 %v2027, %v2030
      %v2032 = vrot.slane %v2031, 4
      %v2034 = vshll.u32 %v1974, 16
      %v2036 = vrot.slane %v2034, 5
      %v2037 = vsel %vm1981, %v2032, %v2036
      %v2039 = vshrl.u32 %v1951, 16
      %v2041 = vrot.slane %v2039, 4
      %v2042 = vshll.u32 %v1951, 16
      %v2044 = vrot.slane %v2042, 5
      %v2045 = vor.u32 %v2041, %v2044
      %v2046 = vrot.slane %v2045, 4
      %v2048 = vshll.u32 %v1975, 16
      %v2050 = vrot.slane %v2048, 5
      %v2051 = vsel %vm1981, %v2046, %v2050
      %v2053 = vshrl.u32 %v1952, 16
      %v2055 = vrot.slane %v2053, 4
      %v2056 = vshll.u32 %v1952, 16
      %v2058 = vrot.slane %v2056, 5
      %v2059 = vor.u32 %v2055, %v2058
      %v2060 = vrot.slane %v2059, 4
      %v2062 = vshll.u32 %v1976, 16
      %v2064 = vrot.slane %v2062, 5
      %v2065 = vsel %vm1981, %v2060, %v2064
      %v2067 = vshrl.u32 %v1953, 16
      %v2069 = vrot.slane %v2067, 4
      %v2070 = vshll.u32 %v1953, 16
      %v2072 = vrot.slane %v2070, 5
      %v2073 = vor.u32 %v2069, %v2072
      %v2074 = vrot.slane %v2073, 4
      %v2076 = vshll.u32 %v1977, 16
      %v2078 = vrot.slane %v2076, 5
      %v2079 = vsel %vm1981, %v2074, %v2078
      %v2081 = vshrl.u32 %v1954, 16
      %v2083 = vrot.slane %v2081, 4
      %v2084 = vshll.u32 %v1954, 16
      %v2086 = vrot.slane %v2084, 5
      %v2087 = vor.u32 %v2083, %v2086
      %v2088 = vrot.slane %v2087, 4
      %v2090 = vshll.u32 %v1978, 16
      %v2092 = vrot.slane %v2090, 5
      %v2093 = vsel %vm1981, %v2088, %v2092
      %s2094 = scalar_lea.vmem %s3, 64
      %v2095 = vld [vmem:[%s2094] sm:$0xf]
      %v2096 = vld [vmem:[%s2094 + $0x4] sm:$0xf]
      %v2097 = vld [vmem:[%s2094 + $0x8] sm:$0xf]
      %v2098 = vld [vmem:[%s2094 + $0xc] sm:$0xf]
      %v2099 = vld [vmem:[%s2094 + $0x10] sm:$0xf]
      %v2100 = vld [vmem:[%s2094 + $0x14] sm:$0xf]
      %v2101 = vld [vmem:[%s2094 + $0x18] sm:$0xf]
      %v2102 = vld [vmem:[%s2094 + $0x1c] sm:$0xf]
      %v2103 = vld [vmem:[%s2094 + $0x20] sm:$0xf]
      %v2104 = vld [vmem:[%s2094 + $0x24] sm:$0xf]
      %v2105 = vld [vmem:[%s2094 + $0x28] sm:$0xf]
      %v2106 = vld [vmem:[%s2094 + $0x2c] sm:$0xf]
      %v2107 = vld [vmem:[%s2094 + $0x30] sm:$0xf]
      %v2108 = vld [vmem:[%s2094 + $0x34] sm:$0xf]
      %v2109 = vld [vmem:[%s2094 + $0x38] sm:$0xf]
      %v2110 = vld [vmem:[%s2094 + $0x3c] sm:$0xf]
      %v2111 = vunpack.c.l.b16 %v1995
      %v2112 = vunpack.c.l.b16 %v2009
      %v2113 = vunpack.c.l.b16 %v2023
      %v2114 = vunpack.c.l.b16 %v2037
      %v2115 = vunpack.c.l.b16 %v2051
      %v2116 = vunpack.c.l.b16 %v2065
      %v2117 = vunpack.c.l.b16 %v2079
      %v2118 = vunpack.c.l.b16 %v2093
      %v2119 = vpack.c.b16 %v2112, %v2111
      %v2120 = vpack.c.b16 %v2114, %v2113
      %v2121 = vpack.c.b16 %v2116, %v2115
      %v2122 = vpack.c.b16 %v2118, %v2117
      %v2143 = vunpack.c.l.b16 %v2095
      %v2144 = vunpack.c.l.b16 %v2096
      %v2145 = vunpack.c.l.b16 %v2097
      %v2146 = vunpack.c.l.b16 %v2098
      %v2147 = vunpack.c.l.b16 %v2099
      %v2148 = vunpack.c.l.b16 %v2100
      %v2149 = vunpack.c.l.b16 %v2101
      %v2150 = vunpack.c.l.b16 %v2102
      %v2151 = vunpack.c.l.b16 %v2103
      %v2152 = vunpack.c.l.b16 %v2104
      %v2153 = vunpack.c.l.b16 %v2105
      %v2154 = vunpack.c.l.b16 %v2106
      %v2155 = vunpack.c.l.b16 %v2107
      %v2156 = vunpack.c.l.b16 %v2108
      %v2157 = vunpack.c.l.b16 %v2109
      %v2158 = vunpack.c.l.b16 %v2110
      %v2159 = vpack.c.b16 %v2144, %v2143
      %v2160 = vpack.c.b16 %v2146, %v2145
      %v2161 = vpack.c.b16 %v2148, %v2147
      %v2162 = vpack.c.b16 %v2150, %v2149
      %v2163 = vpack.c.b16 %v2152, %v2151
      %v2164 = vpack.c.b16 %v2154, %v2153
      %v2165 = vpack.c.b16 %v2156, %v2155
      %v2166 = vpack.c.b16 %v2158, %v2157
      %2175 = vmatprep.subr.bf16.mxu0 0
      %2176 = vmatpush1.bf16.msra.mxu0 %v2159
      %2177 = vmatprep.subr.bf16.mxu0 0
      %2178 = vmatpush1.bf16.msra.mxu0 %v2160
      %2179 = vmatprep.subr.bf16.mxu0 0
      %2180 = vmatpush1.bf16.msra.mxu0 %v2161
      %2181 = vmatprep.subr.bf16.mxu0 0
      %2182 = vmatpush1.bf16.msra.mxu0 %v2162
      %2183 = vmatprep.subr.bf16.mxu0 0
      %2184 = vmatpush1.bf16.msra.mxu0 %v2163
      %2185 = vmatprep.subr.bf16.mxu0 0
      %2186 = vmatpush1.bf16.msra.mxu0 %v2164
      %2187 = vmatprep.subr.bf16.mxu0 0
      %2188 = vmatpush1.bf16.msra.mxu0 %v2165
      %2189 = vmatprep.subr.bf16.mxu0 0
      %2190 = vmatpush1.bf16.msra.mxu0 %v2166
      %2191 = vmatprep.subr.bf16.mxu0 0
      %2192 = vmatpush1.bf16.msra.mxu0 0
      %2193 = vmatprep.subr.bf16.mxu0 0
      %2194 = vmatpush1.bf16.msra.mxu0 0
      %2195 = vmatprep.subr.bf16.mxu0 0
      %2196 = vmatpush1.bf16.msra.mxu0 0
      %2197 = vmatprep.subr.bf16.mxu0 0
      %2198 = vmatpush1.bf16.msra.mxu0 0
      %2199 = vmatprep.subr.bf16.mxu0 0
      %2200 = vmatpush1.bf16.msra.mxu0 0
      %2201 = vmatprep.subr.bf16.mxu0 0
      %2202 = vmatpush1.bf16.msra.mxu0 0
      %2203 = vmatprep.subr.bf16.mxu0 0
      %2204 = vmatpush1.bf16.msra.mxu0 0
      %2205 = vmatprep.subr.bf16.mxu0 0
      %2206 = vmatpush1.bf16.msra.mxu0 0
      %2207 = vmatprep.mubr.bf16.mxu0 0
      %2208 = vmatmul.mubr.bf16.gmra.mrb[0].mxu0 %v2119
      %v2209 = vpop.f32.mrb[0].mxu0
      %v2210 = vadd.f32 0.0, %v2209
      %v2211 = vpop.f32.mrb[0].mxu0
      %v2212 = vpop.f32.mrb[0].mxu0
      %v2213 = vadd.f32 0.0, %v2212
      %v2214 = vpop.f32.mrb[0].mxu0
      %2215 = vmatprep.mubr.bf16.mxu0 0
      %2216 = vmatmul.mubr.bf16.gmra.mrb[0].mxu0 %v2120
      %v2217 = vpop.f32.mrb[0].mxu0
      %v2218 = vadd.f32 0.0, %v2217
      %v2219 = vpop.f32.mrb[0].mxu0
      %v2220 = vpop.f32.mrb[0].mxu0
      %v2221 = vadd.f32 0.0, %v2220
      %v2222 = vpop.f32.mrb[0].mxu0
      %2223 = vmatprep.mubr.bf16.mxu0 0
      %2224 = vmatmul.mubr.bf16.gmra.mrb[0].mxu0 %v2121
      %v2225 = vpop.f32.mrb[0].mxu0
      %v2226 = vadd.f32 0.0, %v2225
      %v2227 = vpop.f32.mrb[0].mxu0
      %v2228 = vpop.f32.mrb[0].mxu0
      %v2229 = vadd.f32 0.0, %v2228
      %v2230 = vpop.f32.mrb[0].mxu0
      %2231 = vmatprep.mubr.bf16.mxu0 0
      %2232 = vmatmul.mubr.bf16.gmra.mrb[0].mxu0 %v2122
      %v2233 = vpop.f32.mrb[0].mxu0
      %v2234 = vadd.f32 0.0, %v2233
      %v2235 = vpop.f32.mrb[0].mxu0
      %v2236 = vpop.f32.mrb[0].mxu0
      %v2237 = vadd.f32 0.0, %v2236
      %v2238 = vpop.f32.mrb[0].mxu0
      %2239 = vdwg.mxu0
      %v2248 = vunpack.c.l.b16 %v1947
      %v2249 = vunpack.c.l.b16 %v1948
      %v2250 = vunpack.c.l.b16 %v1949
      %v2251 = vunpack.c.l.b16 %v1950
      %v2252 = vunpack.c.l.b16 %v1951
      %v2253 = vunpack.c.l.b16 %v1952
      %v2254 = vunpack.c.l.b16 %v1953
      %v2255 = vunpack.c.l.b16 %v1954
      %v2256 = vpack.c.b16 %v2249, %v2248
      %v2257 = vpack.c.b16 %v2251, %v2250
      %v2258 = vpack.c.b16 %v2253, %v2252
      %v2259 = vpack.c.b16 %v2255, %v2254
      %v2280 = vunpack.c.l.b16 %v1955
      %v2281 = vunpack.c.l.b16 %v1956
      %v2282 = vunpack.c.l.b16 %v1957
      %v2283 = vunpack.c.l.b16 %v1958
      %v2284 = vunpack.c.l.b16 %v1959
      %v2285 = vunpack.c.l.b16 %v1960
      %v2286 = vunpack.c.l.b16 %v1961
      %v2287 = vunpack.c.l.b16 %v1962
      %v2288 = vunpack.c.l.b16 %v1963
      %v2289 = vunpack.c.l.b16 %v1964
      %v2290 = vunpack.c.l.b16 %v1965
      %v2291 = vunpack.c.l.b16 %v1966
      %v2292 = vunpack.c.l.b16 %v1967
      %v2293 = vunpack.c.l.b16 %v1968
      %v2294 = vunpack.c.l.b16 %v1969
      %v2295 = vunpack.c.l.b16 %v1970
      %v2296 = vpack.c.b16 %v2281, %v2280
      %v2297 = vpack.c.b16 %v2283, %v2282
      %v2298 = vpack.c.b16 %v2285, %v2284
      %v2299 = vpack.c.b16 %v2287, %v2286
      %v2300 = vpack.c.b16 %v2289, %v2288
      %v2301 = vpack.c.b16 %v2291, %v2290
      %v2302 = vpack.c.b16 %v2293, %v2292
      %v2303 = vpack.c.b16 %v2295, %v2294
      %2312 = vmatprep.subr.bf16.mxu0 0
      %2313 = vmatpush1.bf16.msra.mxu0 %v2296
      %2314 = vmatprep.subr.bf16.mxu0 0
      %2315 = vmatpush1.bf16.msra.mxu0 %v2297
      %2316 = vmatprep.subr.bf16.mxu0 0
      %2317 = vmatpush1.bf16.msra.mxu0 %v2298
      %2318 = vmatprep.subr.bf16.mxu0 0
      %2319 = vmatpush1.bf16.msra.mxu0 %v2299
      %2320 = vmatprep.subr.bf16.mxu0 0
      %2321 = vmatpush1.bf16.msra.mxu0 %v2300
      %2322 = vmatprep.subr.bf16.mxu0 0
      %2323 = vmatpush1.bf16.msra.mxu0 %v2301
      %2324 = vmatprep.subr.bf16.mxu0 0
      %2325 = vmatpush1.bf16.msra.mxu0 %v2302
      %2326 = vmatprep.subr.bf16.mxu0 0
      %2327 = vmatpush1.bf16.msra.mxu0 %v2303
      %2328 = vmatprep.subr.bf16.mxu0 0
      %2329 = vmatpush1.bf16.msra.mxu0 0
      %2330 = vmatprep.subr.bf16.mxu0 0
      %2331 = vmatpush1.bf16.msra.mxu0 0
      %2332 = vmatprep.subr.bf16.mxu0 0
      %2333 = vmatpush1.bf16.msra.mxu0 0
      %2334 = vmatprep.subr.bf16.mxu0 0
      %2335 = vmatpush1.bf16.msra.mxu0 0
      %2336 = vmatprep.subr.bf16.mxu0 0
      %2337 = vmatpush1.bf16.msra.mxu0 0
      %2338 = vmatprep.subr.bf16.mxu0 0
      %2339 = vmatpush1.bf16.msra.mxu0 0
      %2340 = vmatprep.subr.bf16.mxu0 0
      %2341 = vmatpush1.bf16.msra.mxu0 0
      %2342 = vmatprep.subr.bf16.mxu0 0
      %2343 = vmatpush1.bf16.msra.mxu0 0
      %2344 = vmatprep.mubr.bf16.mxu0 0
      %2345 = vmatmul.mubr.bf16.gmra.mrb[0].mxu0 %v2256
      %v2346 = vpop.f32.mrb[0].mxu0
      %v2347 = vadd.f32 %v2210, %v2346
      %v2348 = vpop.f32.mrb[0].mxu0
      %v2349 = vpop.f32.mrb[0].mxu0
      %v2350 = vadd.f32 %v2213, %v2349
      %v2351 = vpop.f32.mrb[0].mxu0
      %2352 = vmatprep.mubr.bf16.mxu0 0
      %2353 = vmatmul.mubr.bf16.gmra.mrb[0].mxu0 %v2257
      %v2354 = vpop.f32.mrb[0].mxu0
      %v2355 = vadd.f32 %v2218, %v2354
      %v2356 = vpop.f32.mrb[0].mxu0
      %v2357 = vpop.f32.mrb[0].mxu0
      %v2358 = vadd.f32 %v2221, %v2357
      %v2359 = vpop.f32.mrb[0].mxu0
      %2360 = vmatprep.mubr.bf16.mxu0 0
      %2361 = vmatmul.mubr.bf16.gmra.mrb[0].mxu0 %v2258
      %v2362 = vpop.f32.mrb[0].mxu0
      %v2363 = vadd.f32 %v2226, %v2362
      %v2364 = vpop.f32.mrb[0].mxu0
      %v2365 = vpop.f32.mrb[0].mxu0
      %v2366 = vadd.f32 %v2229, %v2365
      %v2367 = vpop.f32.mrb[0].mxu0
      %2368 = vmatprep.mubr.bf16.mxu0 0
      %2369 = vmatmul.mubr.bf16.gmra.mrb[0].mxu0 %v2259
      %v2370 = vpop.f32.mrb[0].mxu0
      %v2371 = vadd.f32 %v2234, %v2370
      %v2372 = vpop.f32.mrb[0].mxu0
      %v2373 = vpop.f32.mrb[0].mxu0
      %v2374 = vadd.f32 %v2237, %v2373
      %v2375 = vpop.f32.mrb[0].mxu0
      %2376 = vdwg.mxu0
      %v2377 = vld [vmem:[%s1946] sm:$0xe]
      %v2378 = vld [vmem:[%s1946 + $0x8] sm:$0xe]
      %v2379 = vld [vmem:[%s1946 + $0x10] sm:$0xe]
      %v2380 = vld [vmem:[%s1946 + $0x18] sm:$0xe]
      %v2381 = vld [vmem:[%s1946 + $0x20] sm:$0xe]
      %v2382 = vld [vmem:[%s1946 + $0x28] sm:$0xe]
      %v2383 = vld [vmem:[%s1946 + $0x30] sm:$0xe]
      %v2384 = vld [vmem:[%s1946 + $0x38] sm:$0xe]
      %vm2401 = vcmask 1042432
      %vm2402 = vcmask 1046532
      %vm2403 = vmor %vm2401, %vm2402
      %v2404 = vrot.slane %v2377, 5
      %v2405 = vrot.slane %v2404, 4
      %v2406 = vrot.slane %v1971, 5
      %v2407 = vsel %vm2403, %v2405, %v2406
      %v2408 = vrot.slane %v2378, 5
      %v2409 = vrot.slane %v2408, 4
      %v2410 = vrot.slane %v1972, 5
      %v2411 = vsel %vm2403, %v2409, %v2410
      %v2412 = vrot.slane %v2379, 5
      %v2413 = vrot.slane %v2412, 4
      %v2414 = vrot.slane %v1973, 5
      %v2415 = vsel %vm2403, %v2413, %v2414
      %v2416 = vrot.slane %v2380, 5
      %v2417 = vrot.slane %v2416, 4
      %v2418 = vrot.slane %v1974, 5
      %v2419 = vsel %vm2403, %v2417, %v2418
      %v2420 = vrot.slane %v2381, 5
      %v2421 = vrot.slane %v2420, 4
      %v2422 = vrot.slane %v1975, 5
      %v2423 = vsel %vm2403, %v2421, %v2422
      %v2424 = vrot.slane %v2382, 5
      %v2425 = vrot.slane %v2424, 4
      %v2426 = vrot.slane %v1976, 5
      %v2427 = vsel %vm2403, %v2425, %v2426
      %v2428 = vrot.slane %v2383, 5
      %v2429 = vrot.slane %v2428, 4
      %v2430 = vrot.slane %v1977, 5
      %v2431 = vsel %vm2403, %v2429, %v2430
      %v2432 = vrot.slane %v2384, 5
      %v2433 = vrot.slane %v2432, 4
      %v2434 = vrot.slane %v1978, 5
      %v2435 = vsel %vm2403, %v2433, %v2434
      %s2436 = scalar_lea.vmem %s3, 128
      %v2437 = vld [vmem:[%s2436] sm:$0xf]
      %v2438 = vld [vmem:[%s2436 + $0x4] sm:$0xf]
      %v2439 = vld [vmem:[%s2436 + $0x8] sm:$0xf]
      %v2440 = vld [vmem:[%s2436 + $0xc] sm:$0xf]
      %v2441 = vld [vmem:[%s2436 + $0x10] sm:$0xf]
      %v2442 = vld [vmem:[%s2436 + $0x14] sm:$0xf]
      %v2443 = vld [vmem:[%s2436 + $0x18] sm:$0xf]
      %v2444 = vld [vmem:[%s2436 + $0x1c] sm:$0xf]
      %v2445 = vld [vmem:[%s2436 + $0x20] sm:$0xf]
      %v2446 = vld [vmem:[%s2436 + $0x24] sm:$0xf]
      %v2447 = vld [vmem:[%s2436 + $0x28] sm:$0xf]
      %v2448 = vld [vmem:[%s2436 + $0x2c] sm:$0xf]
      %v2449 = vld [vmem:[%s2436 + $0x30] sm:$0xf]
      %v2450 = vld [vmem:[%s2436 + $0x34] sm:$0xf]
      %v2451 = vld [vmem:[%s2436 + $0x38] sm:$0xf]
      %v2452 = vld [vmem:[%s2436 + $0x3c] sm:$0xf]
      %v2453 = vunpack.c.l.b16 %v2407
      %v2454 = vunpack.c.l.b16 %v2411
      %v2455 = vunpack.c.l.b16 %v2415
      %v2456 = vunpack.c.l.b16 %v2419
      %v2457 = vunpack.c.l.b16 %v2423
      %v2458 = vunpack.c.l.b16 %v2427
      %v2459 = vunpack.c.l.b16 %v2431
      %v2460 = vunpack.c.l.b16 %v2435
      %v2461 = vpack.c.b16 %v2454, %v2453
      %v2462 = vpack.c.b16 %v2456, %v2455
      %v2463 = vpack.c.b16 %v2458, %v2457
      %v2464 = vpack.c.b16 %v2460, %v2459
      %v2485 = vunpack.c.l.b16 %v2437
      %v2486 = vunpack.c.l.b16 %v2438
      %v2487 = vunpack.c.l.b16 %v2439
      %v2488 = vunpack.c.l.b16 %v2440
      %v2489 = vunpack.c.l.b16 %v2441
      %v2490 = vunpack.c.l.b16 %v2442
      %v2491 = vunpack.c.l.b16 %v2443
      %v2492 = vunpack.c.l.b16 %v2444
      %v2493 = vunpack.c.l.b16 %v2445
      %v2494 = vunpack.c.l.b16 %v2446
      %v2495 = vunpack.c.l.b16 %v2447
      %v2496 = vunpack.c.l.b16 %v2448
      %v2497 = vunpack.c.l.b16 %v2449
      %v2498 = vunpack.c.l.b16 %v2450
      %v2499 = vunpack.c.l.b16 %v2451
      %v2500 = vunpack.c.l.b16 %v2452
      %v2501 = vpack.c.b16 %v2486, %v2485
      %v2502 = vpack.c.b16 %v2488, %v2487
      %v2503 = vpack.c.b16 %v2490, %v2489
      %v2504 = vpack.c.b16 %v2492, %v2491
      %v2505 = vpack.c.b16 %v2494, %v2493
      %v2506 = vpack.c.b16 %v2496, %v2495
      %v2507 = vpack.c.b16 %v2498, %v2497
      %v2508 = vpack.c.b16 %v2500, %v2499
      %2517 = vmatprep.subr.bf16.mxu0 0
      %2518 = vmatpush1.bf16.msra.mxu0 %v2501
      %2519 = vmatprep.subr.bf16.mxu0 0
      %2520 = vmatpush1.bf16.msra.mxu0 %v2502
      %2521 = vmatprep.subr.bf16.mxu0 0
      %2522 = vmatpush1.bf16.msra.mxu0 %v2503
      %2523 = vmatprep.subr.bf16.mxu0 0
      %2524 = vmatpush1.bf16.msra.mxu0 %v2504
      %2525 = vmatprep.subr.bf16.mxu0 0
      %2526 = vmatpush1.bf16.msra.mxu0 %v2505
      %2527 = vmatprep.subr.bf16.mxu0 0
      %2528 = vmatpush1.bf16.msra.mxu0 %v2506
      %2529 = vmatprep.subr.bf16.mxu0 0
      %2530 = vmatpush1.bf16.msra.mxu0 %v2507
      %2531 = vmatprep.subr.bf16.mxu0 0
      %2532 = vmatpush1.bf16.msra.mxu0 %v2508
      %2533 = vmatprep.subr.bf16.mxu0 0
      %2534 = vmatpush1.bf16.msra.mxu0 0
      %2535 = vmatprep.subr.bf16.mxu0 0
      %2536 = vmatpush1.bf16.msra.mxu0 0
      %2537 = vmatprep.subr.bf16.mxu0 0
      %2538 = vmatpush1.bf16.msra.mxu0 0
      %2539 = vmatprep.subr.bf16.mxu0 0
      %2540 = vmatpush1.bf16.msra.mxu0 0
      %2541 = vmatprep.subr.bf16.mxu0 0
      %2542 = vmatpush1.bf16.msra.mxu0 0
      %2543 = vmatprep.subr.bf16.mxu0 0
      %2544 = vmatpush1.bf16.msra.mxu0 0
      %2545 = vmatprep.subr.bf16.mxu0 0
      %2546 = vmatpush1.bf16.msra.mxu0 0
      %2547 = vmatprep.subr.bf16.mxu0 0
      %2548 = vmatpush1.bf16.msra.mxu0 0
      %2549 = vmatprep.mubr.bf16.mxu0 0
      %2550 = vmatmul.mubr.bf16.gmra.mrb[0].mxu0 %v2461
      %v2551 = vpop.f32.mrb[0].mxu0
      %v2552 = vadd.f32 0.0, %v2551
      %v2553 = vpop.f32.mrb[0].mxu0
      %v2554 = vpop.f32.mrb[0].mxu0
      %v2555 = vadd.f32 0.0, %v2554
      %v2556 = vpop.f32.mrb[0].mxu0
      %2557 = vmatprep.mubr.bf16.mxu0 0
      %2558 = vmatmul.mubr.bf16.gmra.mrb[0].mxu0 %v2462
      %v2559 = vpop.f32.mrb[0].mxu0
      %v2560 = vadd.f32 0.0, %v2559
      %v2561 = vpop.f32.mrb[0].mxu0
      %v2562 = vpop.f32.mrb[0].mxu0
      %v2563 = vadd.f32 0.0, %v2562
      %v2564 = vpop.f32.mrb[0].mxu0
      %2565 = vmatprep.mubr.bf16.mxu0 0
      %2566 = vmatmul.mubr.bf16.gmra.mrb[0].mxu0 %v2463
      %v2567 = vpop.f32.mrb[0].mxu0
      %v2568 = vadd.f32 0.0, %v2567
      %v2569 = vpop.f32.mrb[0].mxu0
      %v2570 = vpop.f32.mrb[0].mxu0
      %v2571 = vadd.f32 0.0, %v2570
      %v2572 = vpop.f32.mrb[0].mxu0
      %2573 = vmatprep.mubr.bf16.mxu0 0
      %2574 = vmatmul.mubr.bf16.gmra.mrb[0].mxu0 %v2464
      %v2575 = vpop.f32.mrb[0].mxu0
      %v2576 = vadd.f32 0.0, %v2575
      %v2577 = vpop.f32.mrb[0].mxu0
      %v2578 = vpop.f32.mrb[0].mxu0
      %v2579 = vadd.f32 0.0, %v2578
      %v2580 = vpop.f32.mrb[0].mxu0
      %2581 = vdwg.mxu0
      %v2582 = vadd.f32 %v2347, %v2552
      %v2583 = vadd.f32 %v2350, %v2555
      %v2584 = vadd.f32 %v2355, %v2560
      %v2585 = vadd.f32 %v2358, %v2563
      %v2586 = vadd.f32 %v2363, %v2568
      %v2587 = vadd.f32 %v2366, %v2571
      %v2588 = vadd.f32 %v2371, %v2576
      %v2589 = vadd.f32 %v2374, %v2579
      %v2590 = vld [vmem:[%s1927] sm:$0xf]
      %v2591 = vld [vmem:[%s1927 + $0x8] sm:$0xf]
      %v2592 = vld [vmem:[%s1927 + $0x10] sm:$0xf]
      %v2593 = vld [vmem:[%s1927 + $0x18] sm:$0xf]
      %v2594 = vld [vmem:[%s1927 + $0x20] sm:$0xf]
      %v2595 = vld [vmem:[%s1927 + $0x28] sm:$0xf]
      %v2596 = vld [vmem:[%s1927 + $0x30] sm:$0xf]
      %v2597 = vld [vmem:[%s1927 + $0x38] sm:$0xf]
      %s2598 = scalar_lea.vmem %s3, 192
      %v2599 = vld [vmem:[%s2598] sm:$0xf]
      %v2600 = vld [vmem:[%s2598 + $0x4] sm:$0xf]
      %v2601 = vld [vmem:[%s2598 + $0x8] sm:$0xf]
      %v2602 = vld [vmem:[%s2598 + $0xc] sm:$0xf]
      %v2603 = vld [vmem:[%s2598 + $0x10] sm:$0xf]
      %v2604 = vld [vmem:[%s2598 + $0x14] sm:$0xf]
      %v2605 = vld [vmem:[%s2598 + $0x18] sm:$0xf]
      %v2606 = vld [vmem:[%s2598 + $0x1c] sm:$0xf]
      %v2607 = vld [vmem:[%s2598 + $0x20] sm:$0xf]
      %v2608 = vld [vmem:[%s2598 + $0x24] sm:$0xf]
      %v2609 = vld [vmem:[%s2598 + $0x28] sm:$0xf]
      %v2610 = vld [vmem:[%s2598 + $0x2c] sm:$0xf]
      %v2611 = vld [vmem:[%s2598 + $0x30] sm:$0xf]
      %v2612 = vld [vmem:[%s2598 + $0x34] sm:$0xf]
      %v2613 = vld [vmem:[%s2598 + $0x38] sm:$0xf]
      %v2614 = vld [vmem:[%s2598 + $0x3c] sm:$0xf]
      %v2623 = vunpack.c.l.b16 %v2590
      %v2624 = vunpack.c.l.b16 %v2591
      %v2625 = vunpack.c.l.b16 %v2592
      %v2626 = vunpack.c.l.b16 %v2593
      %v2627 = vunpack.c.l.b16 %v2594
      %v2628 = vunpack.c.l.b16 %v2595
      %v2629 = vunpack.c.l.b16 %v2596
      %v2630 = vunpack.c.l.b16 %v2597
      %v2631 = vpack.c.b16 %v2624, %v2623
      %v2632 = vpack.c.b16 %v2626, %v2625
      %v2633 = vpack.c.b16 %v2628, %v2627
      %v2634 = vpack.c.b16 %v2630, %v2629
      %v2655 = vunpack.c.l.b16 %v2599
      %v2656 = vunpack.c.l.b16 %v2600
      %v2657 = vunpack.c.l.b16 %v2601
      %v2658 = vunpack.c.l.b16 %v2602
      %v2659 = vunpack.c.l.b16 %v2603
      %v2660 = vunpack.c.l.b16 %v2604
      %v2661 = vunpack.c.l.b16 %v2605
      %v2662 = vunpack.c.l.b16 %v2606
      %v2663 = vunpack.c.l.b16 %v2607
      %v2664 = vunpack.c.l.b16 %v2608
      %v2665 = vunpack.c.l.b16 %v2609
      %v2666 = vunpack.c.l.b16 %v2610
      %v2667 = vunpack.c.l.b16 %v2611
      %v2668 = vunpack.c.l.b16 %v2612
      %v2669 = vunpack.c.l.b16 %v2613
      %v2670 = vunpack.c.l.b16 %v2614
      %v2671 = vpack.c.b16 %v2656, %v2655
      %v2672 = vpack.c.b16 %v2658, %v2657
      %v2673 = vpack.c.b16 %v2660, %v2659
      %v2674 = vpack.c.b16 %v2662, %v2661
      %v2675 = vpack.c.b16 %v2664, %v2663
      %v2676 = vpack.c.b16 %v2666, %v2665
      %v2677 = vpack.c.b16 %v2668, %v2667
      %v2678 = vpack.c.b16 %v2670, %v2669
      %2687 = vmatprep.subr.bf16.mxu0 0
      %2688 = vmatpush1.bf16.msra.mxu0 %v2671
      %2689 = vmatprep.subr.bf16.mxu0 0
      %2690 = vmatpush1.bf16.msra.mxu0 %v2672
      %2691 = vmatprep.subr.bf16.mxu0 0
      %2692 = vmatpush1.bf16.msra.mxu0 %v2673
      %2693 = vmatprep.subr.bf16.mxu0 0
      %2694 = vmatpush1.bf16.msra.mxu0 %v2674
      %2695 = vmatprep.subr.bf16.mxu0 0
      %2696 = vmatpush1.bf16.msra.mxu0 %v2675
      %2697 = vmatprep.subr.bf16.mxu0 0
      %2698 = vmatpush1.bf16.msra.mxu0 %v2676
      %2699 = vmatprep.subr.bf16.mxu0 0
      %2700 = vmatpush1.bf16.msra.mxu0 %v2677
      %2701 = vmatprep.subr.bf16.mxu0 0
      %2702 = vmatpush1.bf16.msra.mxu0 %v2678
      %2703 = vmatprep.subr.bf16.mxu0 0
      %2704 = vmatpush1.bf16.msra.mxu0 0
      %2705 = vmatprep.subr.bf16.mxu0 0
      %2706 = vmatpush1.bf16.msra.mxu0 0
      %2707 = vmatprep.subr.bf16.mxu0 0
      %2708 = vmatpush1.bf16.msra.mxu0 0
      %2709 = vmatprep.subr.bf16.mxu0 0
      %2710 = vmatpush1.bf16.msra.mxu0 0
      %2711 = vmatprep.subr.bf16.mxu0 0
      %2712 = vmatpush1.bf16.msra.mxu0 0
      %2713 = vmatprep.subr.bf16.mxu0 0
      %2714 = vmatpush1.bf16.msra.mxu0 0
      %2715 = vmatprep.subr.bf16.mxu0 0
      %2716 = vmatpush1.bf16.msra.mxu0 0
      %2717 = vmatprep.subr.bf16.mxu0 0
      %2718 = vmatpush1.bf16.msra.mxu0 0
      %2719 = vmatprep.mubr.bf16.mxu0 0
      %2720 = vmatmul.mubr.bf16.gmra.mrb[0].mxu0 %v2631
      %v2721 = vpop.f32.mrb[0].mxu0
      %v2722 = vadd.f32 0.0, %v2721
      %v2723 = vpop.f32.mrb[0].mxu0
      %v2724 = vpop.f32.mrb[0].mxu0
      %v2725 = vadd.f32 0.0, %v2724
      %v2726 = vpop.f32.mrb[0].mxu0
      %2727 = vmatprep.mubr.bf16.mxu0 0
      %2728 = vmatmul.mubr.bf16.gmra.mrb[0].mxu0 %v2632
      %v2729 = vpop.f32.mrb[0].mxu0
      %v2730 = vadd.f32 0.0, %v2729
      %v2731 = vpop.f32.mrb[0].mxu0
      %v2732 = vpop.f32.mrb[0].mxu0
      %v2733 = vadd.f32 0.0, %v2732
      %v2734 = vpop.f32.mrb[0].mxu0
      %2735 = vmatprep.mubr.bf16.mxu0 0
      %2736 = vmatmul.mubr.bf16.gmra.mrb[0].mxu0 %v2633
      %v2737 = vpop.f32.mrb[0].mxu0
      %v2738 = vadd.f32 0.0, %v2737
      %v2739 = vpop.f32.mrb[0].mxu0
      %v2740 = vpop.f32.mrb[0].mxu0
      %v2741 = vadd.f32 0.0, %v2740
      %v2742 = vpop.f32.mrb[0].mxu0
      %2743 = vmatprep.mubr.bf16.mxu0 0
      %2744 = vmatmul.mubr.bf16.gmra.mrb[0].mxu0 %v2634
      %v2745 = vpop.f32.mrb[0].mxu0
      %v2746 = vadd.f32 0.0, %v2745
      %v2747 = vpop.f32.mrb[0].mxu0
      %v2748 = vpop.f32.mrb[0].mxu0
      %v2749 = vadd.f32 0.0, %v2748
      %v2750 = vpop.f32.mrb[0].mxu0
      %2751 = vdwg.mxu0
      %v2752 = vadd.f32 %v2582, %v2722
      %v2753 = vadd.f32 %v2583, %v2725
      %v2754 = vadd.f32 %v2584, %v2730
      %v2755 = vadd.f32 %v2585, %v2733
      %v2756 = vadd.f32 %v2586, %v2738
      %v2757 = vadd.f32 %v2587, %v2741
      %v2758 = vadd.f32 %v2588, %v2746
      %v2759 = vadd.f32 %v2589, %v2749
      %v2760 = vld [vmem:[%s1927] sm:$0xf]
      %v2761 = vld [vmem:[%s1927 + $0x4] sm:$0x1]
      %v2762 = vld [vmem:[%s1927 + $0x8] sm:$0xf]
      %v2763 = vld [vmem:[%s1927 + $0xc] sm:$0x1]
      %v2764 = vld [vmem:[%s1927 + $0x10] sm:$0xf]
      %v2765 = vld [vmem:[%s1927 + $0x14] sm:$0x1]
      %v2766 = vld [vmem:[%s1927 + $0x18] sm:$0xf]
      %v2767 = vld [vmem:[%s1927 + $0x1c] sm:$0x1]
      %v2768 = vld [vmem:[%s1927 + $0x20] sm:$0xf]
      %v2769 = vld [vmem:[%s1927 + $0x24] sm:$0x1]
      %v2770 = vld [vmem:[%s1927 + $0x28] sm:$0xf]
      %v2771 = vld [vmem:[%s1927 + $0x2c] sm:$0x1]
      %v2772 = vld [vmem:[%s1927 + $0x30] sm:$0xf]
      %v2773 = vld [vmem:[%s1927 + $0x34] sm:$0x1]
      %v2774 = vld [vmem:[%s1927 + $0x38] sm:$0xf]
      %v2775 = vld [vmem:[%s1927 + $0x3c] sm:$0x1]
      %v2777 = vshrl.u32 %v2760, 16
      %v2779 = vrot.slane %v2777, 4
      %v2780 = vshll.u32 %v2760, 16
      %v2782 = vrot.slane %v2780, 5
      %v2783 = vor.u32 %v2779, %v2782
      %v2784 = vrot.slane %v2783, 4
      %v2786 = vshll.u32 %v2761, 16
      %v2788 = vrot.slane %v2786, 5
      %v2789 = vsel %vm1981, %v2784, %v2788
      %v2791 = vshrl.u32 %v2762, 16
      %v2793 = vrot.slane %v2791, 4
      %v2794 = vshll.u32 %v2762, 16
      %v2796 = vrot.slane %v2794, 5
      %v2797 = vor.u32 %v2793, %v2796
      %v2798 = vrot.slane %v2797, 4
      %v2800 = vshll.u32 %v2763, 16
      %v2802 = vrot.slane %v2800, 5
      %v2803 = vsel %vm1981, %v2798, %v2802
      %v2805 = vshrl.u32 %v2764, 16
      %v2807 = vrot.slane %v2805, 4
      %v2808 = vshll.u32 %v2764, 16
      %v2810 = vrot.slane %v2808, 5
      %v2811 = vor.u32 %v2807, %v2810
      %v2812 = vrot.slane %v2811, 4
      %v2814 = vshll.u32 %v2765, 16
      %v2816 = vrot.slane %v2814, 5
      %v2817 = vsel %vm1981, %v2812, %v2816
      %v2819 = vshrl.u32 %v2766, 16
      %v2821 = vrot.slane %v2819, 4
      %v2822 = vshll.u32 %v2766, 16
      %v2824 = vrot.slane %v2822, 5
      %v2825 = vor.u32 %v2821, %v2824
      %v2826 = vrot.slane %v2825, 4
      %v2828 = vshll.u32 %v2767, 16
      %v2830 = vrot.slane %v2828, 5
      %v2831 = vsel %vm1981, %v2826, %v2830
      %v2833 = vshrl.u32 %v2768, 16
      %v2835 = vrot.slane %v2833, 4
      %v2836 = vshll.u32 %v2768, 16
      %v2838 = vrot.slane %v2836, 5
      %v2839 = vor.u32 %v2835, %v2838
      %v2840 = vrot.slane %v2839, 4
      %v2842 = vshll.u32 %v2769, 16
      %v2844 = vrot.slane %v2842, 5
      %v2845 = vsel %vm1981, %v2840, %v2844
      %v2847 = vshrl.u32 %v2770, 16
      %v2849 = vrot.slane %v2847, 4
      %v2850 = vshll.u32 %v2770, 16
      %v2852 = vrot.slane %v2850, 5
      %v2853 = vor.u32 %v2849, %v2852
      %v2854 = vrot.slane %v2853, 4
      %v2856 = vshll.u32 %v2771, 16
      %v2858 = vrot.slane %v2856, 5
      %v2859 = vsel %vm1981, %v2854, %v2858
      %v2861 = vshrl.u32 %v2772, 16
      %v2863 = vrot.slane %v2861, 4
      %v2864 = vshll.u32 %v2772, 16
      %v2866 = vrot.slane %v2864, 5
      %v2867 = vor.u32 %v2863, %v2866
      %v2868 = vrot.slane %v2867, 4
      %v2870 = vshll.u32 %v2773, 16
      %v2872 = vrot.slane %v2870, 5
      %v2873 = vsel %vm1981, %v2868, %v2872
      %v2875 = vshrl.u32 %v2774, 16
      %v2877 = vrot.slane %v2875, 4
      %v2878 = vshll.u32 %v2774, 16
      %v2880 = vrot.slane %v2878, 5
      %v2881 = vor.u32 %v2877, %v2880
      %v2882 = vrot.slane %v2881, 4
      %v2884 = vshll.u32 %v2775, 16
      %v2886 = vrot.slane %v2884, 5
      %v2887 = vsel %vm1981, %v2882, %v2886
      %s2888 = scalar_lea.vmem %s3, 256
      %v2889 = vld [vmem:[%s2888] sm:$0xf]
      %v2890 = vld [vmem:[%s2888 + $0x4] sm:$0xf]
      %v2891 = vld [vmem:[%s2888 + $0x8] sm:$0xf]
      %v2892 = vld [vmem:[%s2888 + $0xc] sm:$0xf]
      %v2893 = vld [vmem:[%s2888 + $0x10] sm:$0xf]
      %v2894 = vld [vmem:[%s2888 + $0x14] sm:$0xf]
      %v2895 = vld [vmem:[%s2888 + $0x18] sm:$0xf]
      %v2896 = vld [vmem:[%s2888 + $0x1c] sm:$0xf]
      %v2897 = vld [vmem:[%s2888 + $0x20] sm:$0xf]
      %v2898 = vld [vmem:[%s2888 + $0x24] sm:$0xf]
      %v2899 = vld [vmem:[%s2888 + $0x28] sm:$0xf]
      %v2900 = vld [vmem:[%s2888 + $0x2c] sm:$0xf]
      %v2901 = vld [vmem:[%s2888 + $0x30] sm:$0xf]
      %v2902 = vld [vmem:[%s2888 + $0x34] sm:$0xf]
      %v2903 = vld [vmem:[%s2888 + $0x38] sm:$0xf]
      %v2904 = vld [vmem:[%s2888 + $0x3c] sm:$0xf]
      %v2905 = vunpack.c.l.b16 %v2789
      %v2906 = vunpack.c.l.b16 %v2803
      %v2907 = vunpack.c.l.b16 %v2817
      %v2908 = vunpack.c.l.b16 %v2831
      %v2909 = vunpack.c.l.b16 %v2845
      %v2910 = vunpack.c.l.b16 %v2859
      %v2911 = vunpack.c.l.b16 %v2873
      %v2912 = vunpack.c.l.b16 %v2887
      %v2913 = vpack.c.b16 %v2906, %v2905
      %v2914 = vpack.c.b16 %v2908, %v2907
      %v2915 = vpack.c.b16 %v2910, %v2909
      %v2916 = vpack.c.b16 %v2912, %v2911
      %v2937 = vunpack.c.l.b16 %v2889
      %v2938 = vunpack.c.l.b16 %v2890
      %v2939 = vunpack.c.l.b16 %v2891
      %v2940 = vunpack.c.l.b16 %v2892
      %v2941 = vunpack.c.l.b16 %v2893
      %v2942 = vunpack.c.l.b16 %v2894
      %v2943 = vunpack.c.l.b16 %v2895
      %v2944 = vunpack.c.l.b16 %v2896
      %v2945 = vunpack.c.l.b16 %v2897
      %v2946 = vunpack.c.l.b16 %v2898
      %v2947 = vunpack.c.l.b16 %v2899
      %v2948 = vunpack.c.l.b16 %v2900
      %v2949 = vunpack.c.l.b16 %v2901
      %v2950 = vunpack.c.l.b16 %v2902
      %v2951 = vunpack.c.l.b16 %v2903
      %v2952 = vunpack.c.l.b16 %v2904
      %v2953 = vpack.c.b16 %v2938, %v2937
      %v2954 = vpack.c.b16 %v2940, %v2939
      %v2955 = vpack.c.b16 %v2942, %v2941
      %v2956 = vpack.c.b16 %v2944, %v2943
      %v2957 = vpack.c.b16 %v2946, %v2945
      %v2958 = vpack.c.b16 %v2948, %v2947
      %v2959 = vpack.c.b16 %v2950, %v2949
      %v2960 = vpack.c.b16 %v2952, %v2951
      %2969 = vmatprep.subr.bf16.mxu0 0
      %2970 = vmatpush1.bf16.msra.mxu0 %v2953
      %2971 = vmatprep.subr.bf16.mxu0 0
      %2972 = vmatpush1.bf16.msra.mxu0 %v2954
      %2973 = vmatprep.subr.bf16.mxu0 0
      %2974 = vmatpush1.bf16.msra.mxu0 %v2955
      %2975 = vmatprep.subr.bf16.mxu0 0
      %2976 = vmatpush1.bf16.msra.mxu0 %v2956
      %2977 = vmatprep.subr.bf16.mxu0 0
      %2978 = vmatpush1.bf16.msra.mxu0 %v2957
      %2979 = vmatprep.subr.bf16.mxu0 0
      %2980 = vmatpush1.bf16.msra.mxu0 %v2958
      %2981 = vmatprep.subr.bf16.mxu0 0
      %2982 = vmatpush1.bf16.msra.mxu0 %v2959
      %2983 = vmatprep.subr.bf16.mxu0 0
      %2984 = vmatpush1.bf16.msra.mxu0 %v2960
      %2985 = vmatprep.subr.bf16.mxu0 0
      %2986 = vmatpush1.bf16.msra.mxu0 0
      %2987 = vmatprep.subr.bf16.mxu0 0
      %2988 = vmatpush1.bf16.msra.mxu0 0
      %2989 = vmatprep.subr.bf16.mxu0 0
      %2990 = vmatpush1.bf16.msra.mxu0 0
      %2991 = vmatprep.subr.bf16.mxu0 0
      %2992 = vmatpush1.bf16.msra.mxu0 0
      %2993 = vmatprep.subr.bf16.mxu0 0
      %2994 = vmatpush1.bf16.msra.mxu0 0
      %2995 = vmatprep.subr.bf16.mxu0 0
      %2996 = vmatpush1.bf16.msra.mxu0 0
      %2997 = vmatprep.subr.bf16.mxu0 0
      %2998 = vmatpush1.bf16.msra.mxu0 0
      %2999 = vmatprep.subr.bf16.mxu0 0
      %3000 = vmatpush1.bf16.msra.mxu0 0
      %3001 = vmatprep.mubr.bf16.mxu0 0
      %3002 = vmatmul.mubr.bf16.gmra.mrb[0].mxu0 %v2913
      %v3003 = vpop.f32.mrb[0].mxu0
      %v3004 = vadd.f32 0.0, %v3003
      %v3005 = vpop.f32.mrb[0].mxu0
      %v3006 = vpop.f32.mrb[0].mxu0
      %v3007 = vadd.f32 0.0, %v3006
      %v3008 = vpop.f32.mrb[0].mxu0
      %3009 = vmatprep.mubr.bf16.mxu0 0
      %3010 = vmatmul.mubr.bf16.gmra.mrb[0].mxu0 %v2914
      %v3011 = vpop.f32.mrb[0].mxu0
      %v3012 = vadd.f32 0.0, %v3011
      %v3013 = vpop.f32.mrb[0].mxu0
      %v3014 = vpop.f32.mrb[0].mxu0
      %v3015 = vadd.f32 0.0, %v3014
      %v3016 = vpop.f32.mrb[0].mxu0
      %3017 = vmatprep.mubr.bf16.mxu0 0
      %3018 = vmatmul.mubr.bf16.gmra.mrb[0].mxu0 %v2915
      %v3019 = vpop.f32.mrb[0].mxu0
      %v3020 = vadd.f32 0.0, %v3019
      %v3021 = vpop.f32.mrb[0].mxu0
      %v3022 = vpop.f32.mrb[0].mxu0
      %v3023 = vadd.f32 0.0, %v3022
      %v3024 = vpop.f32.mrb[0].mxu0
      %3025 = vmatprep.mubr.bf16.mxu0 0
      %3026 = vmatmul.mubr.bf16.gmra.mrb[0].mxu0 %v2916
      %v3027 = vpop.f32.mrb[0].mxu0
      %v3028 = vadd.f32 0.0, %v3027
      %v3029 = vpop.f32.mrb[0].mxu0
      %v3030 = vpop.f32.mrb[0].mxu0
      %v3031 = vadd.f32 0.0, %v3030
      %v3032 = vpop.f32.mrb[0].mxu0
      %3033 = vdwg.mxu0
      %v3034 = vadd.f32 %v2752, %v3004
      %v3035 = vadd.f32 %v2753, %v3007
      %v3036 = vadd.f32 %v2754, %v3012
      %v3037 = vadd.f32 %v2755, %v3015
      %v3038 = vadd.f32 %v2756, %v3020
      %v3039 = vadd.f32 %v2757, %v3023
      %v3040 = vadd.f32 %v2758, %v3028
      %v3041 = vadd.f32 %v2759, %v3031
      %v3042 = vld [vmem:[%s1927] sm:$0xe]
      %v3043 = vld [vmem:[%s1927 + $0x8] sm:$0xe]
      %v3044 = vld [vmem:[%s1927 + $0x10] sm:$0xe]
      %v3045 = vld [vmem:[%s1927 + $0x18] sm:$0xe]
      %v3046 = vld [vmem:[%s1927 + $0x20] sm:$0xe]
      %v3047 = vld [vmem:[%s1927 + $0x28] sm:$0xe]
      %v3048 = vld [vmem:[%s1927 + $0x30] sm:$0xe]
      %v3049 = vld [vmem:[%s1927 + $0x38] sm:$0xe]
      %v3066 = vrot.slane %v3042, 5
      %v3067 = vrot.slane %v3066, 4
      %v3068 = vrot.slane %v2761, 5
      %v3069 = vsel %vm2403, %v3067, %v3068
      %v3070 = vrot.slane %v3043, 5
      %v3071 = vrot.slane %v3070, 4
      %v3072 = vrot.slane %v2763, 5
      %v3073 = vsel %vm2403, %v3071, %v3072
      %v3074 = vrot.slane %v3044, 5
      %v3075 = vrot.slane %v3074, 4
      %v3076 = vrot.slane %v2765, 5
      %v3077 = vsel %vm2403, %v3075, %v3076
      %v3078 = vrot.slane %v3045, 5
      %v3079 = vrot.slane %v3078, 4
      %v3080 = vrot.slane %v2767, 5
      %v3081 = vsel %vm2403, %v3079, %v3080
      %v3082 = vrot.slane %v3046, 5
      %v3083 = vrot.slane %v3082, 4
      %v3084 = vrot.slane %v2769, 5
      %v3085 = vsel %vm2403, %v3083, %v3084
      %v3086 = vrot.slane %v3047, 5
      %v3087 = vrot.slane %v3086, 4
      %v3088 = vrot.slane %v2771, 5
      %v3089 = vsel %vm2403, %v3087, %v3088
      %v3090 = vrot.slane %v3048, 5
      %v3091 = vrot.slane %v3090, 4
      %v3092 = vrot.slane %v2773, 5
      %v3093 = vsel %vm2403, %v3091, %v3092
      %v3094 = vrot.slane %v3049, 5
      %v3095 = vrot.slane %v3094, 4
      %v3096 = vrot.slane %v2775, 5
      %v3097 = vsel %vm2403, %v3095, %v3096
      %s3098 = scalar_lea.vmem %s3, 320
      %v3099 = vld [vmem:[%s3098] sm:$0xf]
      %v3100 = vld [vmem:[%s3098 + $0x4] sm:$0xf]
      %v3101 = vld [vmem:[%s3098 + $0x8] sm:$0xf]
      %v3102 = vld [vmem:[%s3098 + $0xc] sm:$0xf]
      %v3103 = vld [vmem:[%s3098 + $0x10] sm:$0xf]
      %v3104 = vld [vmem:[%s3098 + $0x14] sm:$0xf]
      %v3105 = vld [vmem:[%s3098 + $0x18] sm:$0xf]
      %v3106 = vld [vmem:[%s3098 + $0x1c] sm:$0xf]
      %v3107 = vld [vmem:[%s3098 + $0x20] sm:$0xf]
      %v3108 = vld [vmem:[%s3098 + $0x24] sm:$0xf]
      %v3109 = vld [vmem:[%s3098 + $0x28] sm:$0xf]
      %v3110 = vld [vmem:[%s3098 + $0x2c] sm:$0xf]
      %v3111 = vld [vmem:[%s3098 + $0x30] sm:$0xf]
      %v3112 = vld [vmem:[%s3098 + $0x34] sm:$0xf]
      %v3113 = vld [vmem:[%s3098 + $0x38] sm:$0xf]
      %v3114 = vld [vmem:[%s3098 + $0x3c] sm:$0xf]
      %v3115 = vunpack.c.l.b16 %v3069
      %v3116 = vunpack.c.l.b16 %v3073
      %v3117 = vunpack.c.l.b16 %v3077
      %v3118 = vunpack.c.l.b16 %v3081
      %v3119 = vunpack.c.l.b16 %v3085
      %v3120 = vunpack.c.l.b16 %v3089
      %v3121 = vunpack.c.l.b16 %v3093
      %v3122 = vunpack.c.l.b16 %v3097
      %v3123 = vpack.c.b16 %v3116, %v3115
      %v3124 = vpack.c.b16 %v3118, %v3117
      %v3125 = vpack.c.b16 %v3120, %v3119
      %v3126 = vpack.c.b16 %v3122, %v3121
      %v3147 = vunpack.c.l.b16 %v3099
      %v3148 = vunpack.c.l.b16 %v3100
      %v3149 = vunpack.c.l.b16 %v3101
      %v3150 = vunpack.c.l.b16 %v3102
      %v3151 = vunpack.c.l.b16 %v3103
      %v3152 = vunpack.c.l.b16 %v3104
      %v3153 = vunpack.c.l.b16 %v3105
      %v3154 = vunpack.c.l.b16 %v3106
      %v3155 = vunpack.c.l.b16 %v3107
      %v3156 = vunpack.c.l.b16 %v3108
      %v3157 = vunpack.c.l.b16 %v3109
      %v3158 = vunpack.c.l.b16 %v3110
      %v3159 = vunpack.c.l.b16 %v3111
      %v3160 = vunpack.c.l.b16 %v3112
      %v3161 = vunpack.c.l.b16 %v3113
      %v3162 = vunpack.c.l.b16 %v3114
      %v3163 = vpack.c.b16 %v3148, %v3147
      %v3164 = vpack.c.b16 %v3150, %v3149
      %v3165 = vpack.c.b16 %v3152, %v3151
      %v3166 = vpack.c.b16 %v3154, %v3153
      %v3167 = vpack.c.b16 %v3156, %v3155
      %v3168 = vpack.c.b16 %v3158, %v3157
      %v3169 = vpack.c.b16 %v3160, %v3159
      %v3170 = vpack.c.b16 %v3162, %v3161
      %3179 = vmatprep.subr.bf16.mxu0 0
      %3180 = vmatpush1.bf16.msra.mxu0 %v3163
      %3181 = vmatprep.subr.bf16.mxu0 0
      %3182 = vmatpush1.bf16.msra.mxu0 %v3164
      %3183 = vmatprep.subr.bf16.mxu0 0
      %3184 = vmatpush1.bf16.msra.mxu0 %v3165
      %3185 = vmatprep.subr.bf16.mxu0 0
      %3186 = vmatpush1.bf16.msra.mxu0 %v3166
      %3187 = vmatprep.subr.bf16.mxu0 0
      %3188 = vmatpush1.bf16.msra.mxu0 %v3167
      %3189 = vmatprep.subr.bf16.mxu0 0
      %3190 = vmatpush1.bf16.msra.mxu0 %v3168
      %3191 = vmatprep.subr.bf16.mxu0 0
      %3192 = vmatpush1.bf16.msra.mxu0 %v3169
      %3193 = vmatprep.subr.bf16.mxu0 0
      %3194 = vmatpush1.bf16.msra.mxu0 %v3170
      %3195 = vmatprep.subr.bf16.mxu0 0
      %3196 = vmatpush1.bf16.msra.mxu0 0
      %3197 = vmatprep.subr.bf16.mxu0 0
      %3198 = vmatpush1.bf16.msra.mxu0 0
      %3199 = vmatprep.subr.bf16.mxu0 0
      %3200 = vmatpush1.bf16.msra.mxu0 0
      %3201 = vmatprep.subr.bf16.mxu0 0
      %3202 = vmatpush1.bf16.msra.mxu0 0
      %3203 = vmatprep.subr.bf16.mxu0 0
      %3204 = vmatpush1.bf16.msra.mxu0 0
      %3205 = vmatprep.subr.bf16.mxu0 0
      %3206 = vmatpush1.bf16.msra.mxu0 0
      %3207 = vmatprep.subr.bf16.mxu0 0
      %3208 = vmatpush1.bf16.msra.mxu0 0
      %3209 = vmatprep.subr.bf16.mxu0 0
      %3210 = vmatpush1.bf16.msra.mxu0 0
      %3211 = vmatprep.mubr.bf16.mxu0 0
      %3212 = vmatmul.mubr.bf16.gmra.mrb[0].mxu0 %v3123
      %v3213 = vpop.f32.mrb[0].mxu0
      %v3214 = vadd.f32 0.0, %v3213
      %v3215 = vpop.f32.mrb[0].mxu0
      %v3216 = vpop.f32.mrb[0].mxu0
      %v3217 = vadd.f32 0.0, %v3216
      %v3218 = vpop.f32.mrb[0].mxu0
      %3219 = vmatprep.mubr.bf16.mxu0 0
      %3220 = vmatmul.mubr.bf16.gmra.mrb[0].mxu0 %v3124
      %v3221 = vpop.f32.mrb[0].mxu0
      %v3222 = vadd.f32 0.0, %v3221
      %v3223 = vpop.f32.mrb[0].mxu0
      %v3224 = vpop.f32.mrb[0].mxu0
      %v3225 = vadd.f32 0.0, %v3224
      %v3226 = vpop.f32.mrb[0].mxu0
      %3227 = vmatprep.mubr.bf16.mxu0 0
      %3228 = vmatmul.mubr.bf16.gmra.mrb[0].mxu0 %v3125
      %v3229 = vpop.f32.mrb[0].mxu0
      %v3230 = vadd.f32 0.0, %v3229
      %v3231 = vpop.f32.mrb[0].mxu0
      %v3232 = vpop.f32.mrb[0].mxu0
      %v3233 = vadd.f32 0.0, %v3232
      %v3234 = vpop.f32.mrb[0].mxu0
      %3235 = vmatprep.mubr.bf16.mxu0 0
      %3236 = vmatmul.mubr.bf16.gmra.mrb[0].mxu0 %v3126
      %v3237 = vpop.f32.mrb[0].mxu0
      %v3238 = vadd.f32 0.0, %v3237
      %v3239 = vpop.f32.mrb[0].mxu0
      %v3240 = vpop.f32.mrb[0].mxu0
      %v3241 = vadd.f32 0.0, %v3240
      %v3242 = vpop.f32.mrb[0].mxu0
      %3243 = vdwg.mxu0
      %v3244 = vadd.f32 %v3034, %v3214
      %v3245 = vadd.f32 %v3035, %v3217
      %v3246 = vadd.f32 %v3036, %v3222
      %v3247 = vadd.f32 %v3037, %v3225
      %v3248 = vadd.f32 %v3038, %v3230
      %v3249 = vadd.f32 %v3039, %v3233
      %v3250 = vadd.f32 %v3040, %v3238
      %v3251 = vadd.f32 %v3041, %v3241
      %s3252 = sadd.s32 0, 2
      %s3253 = smul.u32 %s3252, 2
      %s3254 = smul.addr %s3253, 4
      %s3255 = scalar_lea.vmem [#allocation2], %s3254
      %v3256 = vld [vmem:[%s3255] sm:$0xf]
      %v3257 = vld [vmem:[%s3255 + $0x8] sm:$0xf]
      %v3258 = vld [vmem:[%s3255 + $0x10] sm:$0xf]
      %v3259 = vld [vmem:[%s3255 + $0x18] sm:$0xf]
      %v3260 = vld [vmem:[%s3255 + $0x20] sm:$0xf]
      %v3261 = vld [vmem:[%s3255 + $0x28] sm:$0xf]
      %v3262 = vld [vmem:[%s3255 + $0x30] sm:$0xf]
      %v3263 = vld [vmem:[%s3255 + $0x38] sm:$0xf]
      %s3264 = scalar_lea.vmem %s3, 384
      %v3265 = vld [vmem:[%s3264] sm:$0xf]
      %v3266 = vld [vmem:[%s3264 + $0x4] sm:$0xf]
      %v3267 = vld [vmem:[%s3264 + $0x8] sm:$0xf]
      %v3268 = vld [vmem:[%s3264 + $0xc] sm:$0xf]
      %v3269 = vld [vmem:[%s3264 + $0x10] sm:$0xf]
      %v3270 = vld [vmem:[%s3264 + $0x14] sm:$0xf]
      %v3271 = vld [vmem:[%s3264 + $0x18] sm:$0xf]
      %v3272 = vld [vmem:[%s3264 + $0x1c] sm:$0xf]
      %v3273 = vld [vmem:[%s3264 + $0x20] sm:$0xf]
      %v3274 = vld [vmem:[%s3264 + $0x24] sm:$0xf]
      %v3275 = vld [vmem:[%s3264 + $0x28] sm:$0xf]
      %v3276 = vld [vmem:[%s3264 + $0x2c] sm:$0xf]
      %v3277 = vld [vmem:[%s3264 + $0x30] sm:$0xf]
      %v3278 = vld [vmem:[%s3264 + $0x34] sm:$0xf]
      %v3279 = vld [vmem:[%s3264 + $0x38] sm:$0xf]
      %v3280 = vld [vmem:[%s3264 + $0x3c] sm:$0xf]
      %v3289 = vunpack.c.l.b16 %v3256
      %v3290 = vunpack.c.l.b16 %v3257
      %v3291 = vunpack.c.l.b16 %v3258
      %v3292 = vunpack.c.l.b16 %v3259
      %v3293 = vunpack.c.l.b16 %v3260
      %v3294 = vunpack.c.l.b16 %v3261
      %v3295 = vunpack.c.l.b16 %v3262
      %v3296 = vunpack.c.l.b16 %v3263
      %v3297 = vpack.c.b16 %v3290, %v3289
      %v3298 = vpack.c.b16 %v3292, %v3291
      %v3299 = vpack.c.b16 %v3294, %v3293
      %v3300 = vpack.c.b16 %v3296, %v3295
      %v3321 = vunpack.c.l.b16 %v3265
      %v3322 = vunpack.c.l.b16 %v3266
      %v3323 = vunpack.c.l.b16 %v3267
      %v3324 = vunpack.c.l.b16 %v3268
      %v3325 = vunpack.c.l.b16 %v3269
      %v3326 = vunpack.c.l.b16 %v3270
      %v3327 = vunpack.c.l.b16 %v3271
      %v3328 = vunpack.c.l.b16 %v3272
      %v3329 = vunpack.c.l.b16 %v3273
      %v3330 = vunpack.c.l.b16 %v3274
      %v3331 = vunpack.c.l.b16 %v3275
      %v3332 = vunpack.c.l.b16 %v3276
      %v3333 = vunpack.c.l.b16 %v3277
      %v3334 = vunpack.c.l.b16 %v3278
      %v3335 = vunpack.c.l.b16 %v3279
      %v3336 = vunpack.c.l.b16 %v3280
      %v3337 = vpack.c.b16 %v3322, %v3321
      %v3338 = vpack.c.b16 %v3324, %v3323
      %v3339 = vpack.c.b16 %v3326, %v3325
      %v3340 = vpack.c.b16 %v3328, %v3327
      %v3341 = vpack.c.b16 %v3330, %v3329
      %v3342 = vpack.c.b16 %v3332, %v3331
      %v3343 = vpack.c.b16 %v3334, %v3333
      %v3344 = vpack.c.b16 %v3336, %v3335
      %3353 = vmatprep.subr.bf16.mxu0 0
      %3354 = vmatpush1.bf16.msra.mxu0 %v3337
      %3355 = vmatprep.subr.bf16.mxu0 0
      %3356 = vmatpush1.bf16.msra.mxu0 %v3338
      %3357 = vmatprep.subr.bf16.mxu0 0
      %3358 = vmatpush1.bf16.msra.mxu0 %v3339
      %3359 = vmatprep.subr.bf16.mxu0 0
      %3360 = vmatpush1.bf16.msra.mxu0 %v3340
      %3361 = vmatprep.subr.bf16.mxu0 0
      %3362 = vmatpush1.bf16.msra.mxu0 %v3341
      %3363 = vmatprep.subr.bf16.mxu0 0
      %3364 = vmatpush1.bf16.msra.mxu0 %v3342
      %3365 = vmatprep.subr.bf16.mxu0 0
      %3366 = vmatpush1.bf16.msra.mxu0 %v3343
      %3367 = vmatprep.subr.bf16.mxu0 0
      %3368 = vmatpush1.bf16.msra.mxu0 %v3344
      %3369 = vmatprep.subr.bf16.mxu0 0
      %3370 = vmatpush1.bf16.msra.mxu0 0
      %3371 = vmatprep.subr.bf16.mxu0 0
      %3372 = vmatpush1.bf16.msra.mxu0 0
      %3373 = vmatprep.subr.bf16.mxu0 0
      %3374 = vmatpush1.bf16.msra.mxu0 0
      %3375 = vmatprep.subr.bf16.mxu0 0
      %3376 = vmatpush1.bf16.msra.mxu0 0
      %3377 = vmatprep.subr.bf16.mxu0 0
      %3378 = vmatpush1.bf16.msra.mxu0 0
      %3379 = vmatprep.subr.bf16.mxu0 0
      %3380 = vmatpush1.bf16.msra.mxu0 0
      %3381 = vmatprep.subr.bf16.mxu0 0
      %3382 = vmatpush1.bf16.msra.mxu0 0
      %3383 = vmatprep.subr.bf16.mxu0 0
      %3384 = vmatpush1.bf16.msra.mxu0 0
      %3385 = vmatprep.mubr.bf16.mxu0 0
      %3386 = vmatmul.mubr.bf16.gmra.mrb[0].mxu0 %v3297
      %v3387 = vpop.f32.mrb[0].mxu0
      %v3388 = vadd.f32 0.0, %v3387
      %v3389 = vpop.f32.mrb[0].mxu0
      %v3390 = vpop.f32.mrb[0].mxu0
      %v3391 = vadd.f32 0.0, %v3390
      %v3392 = vpop.f32.mrb[0].mxu0
      %3393 = vmatprep.mubr.bf16.mxu0 0
      %3394 = vmatmul.mubr.bf16.gmra.mrb[0].mxu0 %v3298
      %v3395 = vpop.f32.mrb[0].mxu0
      %v3396 = vadd.f32 0.0, %v3395
      %v3397 = vpop.f32.mrb[0].mxu0
      %v3398 = vpop.f32.mrb[0].mxu0
      %v3399 = vadd.f32 0.0, %v3398
      %v3400 = vpop.f32.mrb[0].mxu0
      %3401 = vmatprep.mubr.bf16.mxu0 0
      %3402 = vmatmul.mubr.bf16.gmra.mrb[0].mxu0 %v3299
      %v3403 = vpop.f32.mrb[0].mxu0
      %v3404 = vadd.f32 0.0, %v3403
      %v3405 = vpop.f32.mrb[0].mxu0
      %v3406 = vpop.f32.mrb[0].mxu0
      %v3407 = vadd.f32 0.0, %v3406
      %v3408 = vpop.f32.mrb[0].mxu0
      %3409 = vmatprep.mubr.bf16.mxu0 0
      %3410 = vmatmul.mubr.bf16.gmra.mrb[0].mxu0 %v3300
      %v3411 = vpop.f32.mrb[0].mxu0
      %v3412 = vadd.f32 0.0, %v3411
      %v3413 = vpop.f32.mrb[0].mxu0
      %v3414 = vpop.f32.mrb[0].mxu0
      %v3415 = vadd.f32 0.0, %v3414
      %v3416 = vpop.f32.mrb[0].mxu0
      %3417 = vdwg.mxu0
      %v3418 = vadd.f32 %v3244, %v3388
      %v3419 = vadd.f32 %v3245, %v3391
      %v3420 = vadd.f32 %v3246, %v3396
      %v3421 = vadd.f32 %v3247, %v3399
      %v3422 = vadd.f32 %v3248, %v3404
      %v3423 = vadd.f32 %v3249, %v3407
      %v3424 = vadd.f32 %v3250, %v3412
      %v3425 = vadd.f32 %v3251, %v3415
      %v3426 = vld [vmem:[%s3255] sm:$0xf]
      %v3427 = vld [vmem:[%s3255 + $0x4] sm:$0x1]
      %v3428 = vld [vmem:[%s3255 + $0x8] sm:$0xf]
      %v3429 = vld [vmem:[%s3255 + $0xc] sm:$0x1]
      %v3430 = vld [vmem:[%s3255 + $0x10] sm:$0xf]
      %v3431 = vld [vmem:[%s3255 + $0x14] sm:$0x1]
      %v3432 = vld [vmem:[%s3255 + $0x18] sm:$0xf]
      %v3433 = vld [vmem:[%s3255 + $0x1c] sm:$0x1]
      %v3434 = vld [vmem:[%s3255 + $0x20] sm:$0xf]
      %v3435 = vld [vmem:[%s3255 + $0x24] sm:$0x1]
      %v3436 = vld [vmem:[%s3255 + $0x28] sm:$0xf]
      %v3437 = vld [vmem:[%s3255 + $0x2c] sm:$0x1]
      %v3438 = vld [vmem:[%s3255 + $0x30] sm:$0xf]
      %v3439 = vld [vmem:[%s3255 + $0x34] sm:$0x1]
      %v3440 = vld [vmem:[%s3255 + $0x38] sm:$0xf]
      %v3441 = vld [vmem:[%s3255 + $0x3c] sm:$0x1]
      %v3443 = vshrl.u32 %v3426, 16
      %v3445 = vrot.slane %v3443, 4
      %v3446 = vshll.u32 %v3426, 16
      %v3448 = vrot.slane %v3446, 5
      %v3449 = vor.u32 %v3445, %v3448
      %v3450 = vrot.slane %v3449, 4
      %v3452 = vshll.u32 %v3427, 16
      %v3454 = vrot.slane %v3452, 5
      %v3455 = vsel %vm1981, %v3450, %v3454
      %v3457 = vshrl.u32 %v3428, 16
      %v3459 = vrot.slane %v3457, 4
      %v3460 = vshll.u32 %v3428, 16
      %v3462 = vrot.slane %v3460, 5
      %v3463 = vor.u32 %v3459, %v3462
      %v3464 = vrot.slane %v3463, 4
      %v3466 = vshll.u32 %v3429, 16
      %v3468 = vrot.slane %v3466, 5
      %v3469 = vsel %vm1981, %v3464, %v3468
      %v3471 = vshrl.u32 %v3430, 16
      %v3473 = vrot.slane %v3471, 4
      %v3474 = vshll.u32 %v3430, 16
      %v3476 = vrot.slane %v3474, 5
      %v3477 = vor.u32 %v3473, %v3476
      %v3478 = vrot.slane %v3477, 4
      %v3480 = vshll.u32 %v3431, 16
      %v3482 = vrot.slane %v3480, 5
      %v3483 = vsel %vm1981, %v3478, %v3482
      %v3485 = vshrl.u32 %v3432, 16
      %v3487 = vrot.slane %v3485, 4
      %v3488 = vshll.u32 %v3432, 16
      %v3490 = vrot.slane %v3488, 5
      %v3491 = vor.u32 %v3487, %v3490
      %v3492 = vrot.slane %v3491, 4
      %v3494 = vshll.u32 %v3433, 16
      %v3496 = vrot.slane %v3494, 5
      %v3497 = vsel %vm1981, %v3492, %v3496
      %v3499 = vshrl.u32 %v3434, 16
      %v3501 = vrot.slane %v3499, 4
      %v3502 = vshll.u32 %v3434, 16
      %v3504 = vrot.slane %v3502, 5
      %v3505 = vor.u32 %v3501, %v3504
      %v3506 = vrot.slane %v3505, 4
      %v3508 = vshll.u32 %v3435, 16
      %v3510 = vrot.slane %v3508, 5
      %v3511 = vsel %vm1981, %v3506, %v3510
      %v3513 = vshrl.u32 %v3436, 16
      %v3515 = vrot.slane %v3513, 4
      %v3516 = vshll.u32 %v3436, 16
      %v3518 = vrot.slane %v3516, 5
      %v3519 = vor.u32 %v3515, %v3518
      %v3520 = vrot.slane %v3519, 4
      %v3522 = vshll.u32 %v3437, 16
      %v3524 = vrot.slane %v3522, 5
      %v3525 = vsel %vm1981, %v3520, %v3524
      %v3527 = vshrl.u32 %v3438, 16
      %v3529 = vrot.slane %v3527, 4
      %v3530 = vshll.u32 %v3438, 16
      %v3532 = vrot.slane %v3530, 5
      %v3533 = vor.u32 %v3529, %v3532
      %v3534 = vrot.slane %v3533, 4
      %v3536 = vshll.u32 %v3439, 16
      %v3538 = vrot.slane %v3536, 5
      %v3539 = vsel %vm1981, %v3534, %v3538
      %v3541 = vshrl.u32 %v3440, 16
      %v3543 = vrot.slane %v3541, 4
      %v3544 = vshll.u32 %v3440, 16
      %v3546 = vrot.slane %v3544, 5
      %v3547 = vor.u32 %v3543, %v3546
      %v3548 = vrot.slane %v3547, 4
      %v3550 = vshll.u32 %v3441, 16
      %v3552 = vrot.slane %v3550, 5
      %v3553 = vsel %vm1981, %v3548, %v3552
      %s3554 = scalar_lea.vmem %s3, 448
      %v3555 = vld [vmem:[%s3554] sm:$0xf]
      %v3556 = vld [vmem:[%s3554 + $0x4] sm:$0xf]
      %v3557 = vld [vmem:[%s3554 + $0x8] sm:$0xf]
      %v3558 = vld [vmem:[%s3554 + $0xc] sm:$0xf]
      %v3559 = vld [vmem:[%s3554 + $0x10] sm:$0xf]
      %v3560 = vld [vmem:[%s3554 + $0x14] sm:$0xf]
      %v3561 = vld [vmem:[%s3554 + $0x18] sm:$0xf]
      %v3562 = vld [vmem:[%s3554 + $0x1c] sm:$0xf]
      %v3563 = vld [vmem:[%s3554 + $0x20] sm:$0xf]
      %v3564 = vld [vmem:[%s3554 + $0x24] sm:$0xf]
      %v3565 = vld [vmem:[%s3554 + $0x28] sm:$0xf]
      %v3566 = vld [vmem:[%s3554 + $0x2c] sm:$0xf]
      %v3567 = vld [vmem:[%s3554 + $0x30] sm:$0xf]
      %v3568 = vld [vmem:[%s3554 + $0x34] sm:$0xf]
      %v3569 = vld [vmem:[%s3554 + $0x38] sm:$0xf]
      %v3570 = vld [vmem:[%s3554 + $0x3c] sm:$0xf]
      %v3571 = vunpack.c.l.b16 %v3455
      %v3572 = vunpack.c.l.b16 %v3469
      %v3573 = vunpack.c.l.b16 %v3483
      %v3574 = vunpack.c.l.b16 %v3497
      %v3575 = vunpack.c.l.b16 %v3511
      %v3576 = vunpack.c.l.b16 %v3525
      %v3577 = vunpack.c.l.b16 %v3539
      %v3578 = vunpack.c.l.b16 %v3553
      %v3579 = vpack.c.b16 %v3572, %v3571
      %v3580 = vpack.c.b16 %v3574, %v3573
      %v3581 = vpack.c.b16 %v3576, %v3575
      %v3582 = vpack.c.b16 %v3578, %v3577
      %v3603 = vunpack.c.l.b16 %v3555
      %v3604 = vunpack.c.l.b16 %v3556
      %v3605 = vunpack.c.l.b16 %v3557
      %v3606 = vunpack.c.l.b16 %v3558
      %v3607 = vunpack.c.l.b16 %v3559
      %v3608 = vunpack.c.l.b16 %v3560
      %v3609 = vunpack.c.l.b16 %v3561
      %v3610 = vunpack.c.l.b16 %v3562
      %v3611 = vunpack.c.l.b16 %v3563
      %v3612 = vunpack.c.l.b16 %v3564
      %v3613 = vunpack.c.l.b16 %v3565
      %v3614 = vunpack.c.l.b16 %v3566
      %v3615 = vunpack.c.l.b16 %v3567
      %v3616 = vunpack.c.l.b16 %v3568
      %v3617 = vunpack.c.l.b16 %v3569
      %v3618 = vunpack.c.l.b16 %v3570
      %v3619 = vpack.c.b16 %v3604, %v3603
      %v3620 = vpack.c.b16 %v3606, %v3605
      %v3621 = vpack.c.b16 %v3608, %v3607
      %v3622 = vpack.c.b16 %v3610, %v3609
      %v3623 = vpack.c.b16 %v3612, %v3611
      %v3624 = vpack.c.b16 %v3614, %v3613
      %v3625 = vpack.c.b16 %v3616, %v3615
      %v3626 = vpack.c.b16 %v3618, %v3617
      %3635 = vmatprep.subr.bf16.mxu0 0
      %3636 = vmatpush1.bf16.msra.mxu0 %v3619
      %3637 = vmatprep.subr.bf16.mxu0 0
      %3638 = vmatpush1.bf16.msra.mxu0 %v3620
      %3639 = vmatprep.subr.bf16.mxu0 0
      %3640 = vmatpush1.bf16.msra.mxu0 %v3621
      %3641 = vmatprep.subr.bf16.mxu0 0
      %3642 = vmatpush1.bf16.msra.mxu0 %v3622
      %3643 = vmatprep.subr.bf16.mxu0 0
      %3644 = vmatpush1.bf16.msra.mxu0 %v3623
      %3645 = vmatprep.subr.bf16.mxu0 0
      %3646 = vmatpush1.bf16.msra.mxu0 %v3624
      %3647 = vmatprep.subr.bf16.mxu0 0
      %3648 = vmatpush1.bf16.msra.mxu0 %v3625
      %3649 = vmatprep.subr.bf16.mxu0 0
      %3650 = vmatpush1.bf16.msra.mxu0 %v3626
      %3651 = vmatprep.subr.bf16.mxu0 0
      %3652 = vmatpush1.bf16.msra.mxu0 0
      %3653 = vmatprep.subr.bf16.mxu0 0
      %3654 = vmatpush1.bf16.msra.mxu0 0
      %3655 = vmatprep.subr.bf16.mxu0 0
      %3656 = vmatpush1.bf16.msra.mxu0 0
      %3657 = vmatprep.subr.bf16.mxu0 0
      %3658 = vmatpush1.bf16.msra.mxu0 0
      %3659 = vmatprep.subr.bf16.mxu0 0
      %3660 = vmatpush1.bf16.msra.mxu0 0
      %3661 = vmatprep.subr.bf16.mxu0 0
      %3662 = vmatpush1.bf16.msra.mxu0 0
      %3663 = vmatprep.subr.bf16.mxu0 0
      %3664 = vmatpush1.bf16.msra.mxu0 0
      %3665 = vmatprep.subr.bf16.mxu0 0
      %3666 = vmatpush1.bf16.msra.mxu0 0
      %3667 = vmatprep.mubr.bf16.mxu0 0
      %3668 = vmatmul.mubr.bf16.gmra.mrb[0].mxu0 %v3579
      %v3669 = vpop.f32.mrb[0].mxu0
      %v3670 = vadd.f32 0.0, %v3669
      %v3671 = vpop.f32.mrb[0].mxu0
      %v3672 = vpop.f32.mrb[0].mxu0
      %v3673 = vadd.f32 0.0, %v3672
      %v3674 = vpop.f32.mrb[0].mxu0
      %3675 = vmatprep.mubr.bf16.mxu0 0
      %3676 = vmatmul.mubr.bf16.gmra.mrb[0].mxu0 %v3580
      %v3677 = vpop.f32.mrb[0].mxu0
      %v3678 = vadd.f32 0.0, %v3677
      %v3679 = vpop.f32.mrb[0].mxu0
      %v3680 = vpop.f32.mrb[0].mxu0
      %v3681 = vadd.f32 0.0, %v3680
      %v3682 = vpop.f32.mrb[0].mxu0
      %3683 = vmatprep.mubr.bf16.mxu0 0
      %3684 = vmatmul.mubr.bf16.gmra.mrb[0].mxu0 %v3581
      %v3685 = vpop.f32.mrb[0].mxu0
      %v3686 = vadd.f32 0.0, %v3685
      %v3687 = vpop.f32.mrb[0].mxu0
      %v3688 = vpop.f32.mrb[0].mxu0
      %v3689 = vadd.f32 0.0, %v3688
      %v3690 = vpop.f32.mrb[0].mxu0
      %3691 = vmatprep.mubr.bf16.mxu0 0
      %3692 = vmatmul.mubr.bf16.gmra.mrb[0].mxu0 %v3582
      %v3693 = vpop.f32.mrb[0].mxu0
      %v3694 = vadd.f32 0.0, %v3693
      %v3695 = vpop.f32.mrb[0].mxu0
      %v3696 = vpop.f32.mrb[0].mxu0
      %v3697 = vadd.f32 0.0, %v3696
      %v3698 = vpop.f32.mrb[0].mxu0
      %3699 = vdwg.mxu0
      %v3700 = vadd.f32 %v3418, %v3670
      %v3701 = vadd.f32 %v3419, %v3673
      %v3702 = vadd.f32 %v3420, %v3678
      %v3703 = vadd.f32 %v3421, %v3681
      %v3704 = vadd.f32 %v3422, %v3686
      %v3705 = vadd.f32 %v3423, %v3689
      %v3706 = vadd.f32 %v3424, %v3694
      %v3707 = vadd.f32 %v3425, %v3697
      %v3708 = vld [vmem:[%s3255] sm:$0xe]
      %v3709 = vld [vmem:[%s3255 + $0x8] sm:$0xe]
      %v3710 = vld [vmem:[%s3255 + $0x10] sm:$0xe]
      %v3711 = vld [vmem:[%s3255 + $0x18] sm:$0xe]
      %v3712 = vld [vmem:[%s3255 + $0x20] sm:$0xe]
      %v3713 = vld [vmem:[%s3255 + $0x28] sm:$0xe]
      %v3714 = vld [vmem:[%s3255 + $0x30] sm:$0xe]
      %v3715 = vld [vmem:[%s3255 + $0x38] sm:$0xe]
      %v3732 = vrot.slane %v3708, 5
      %v3733 = vrot.slane %v3732, 4
      %v3734 = vrot.slane %v3427, 5
      %v3735 = vsel %vm2403, %v3733, %v3734
      %v3736 = vrot.slane %v3709, 5
      %v3737 = vrot.slane %v3736, 4
      %v3738 = vrot.slane %v3429, 5
      %v3739 = vsel %vm2403, %v3737, %v3738
      %v3740 = vrot.slane %v3710, 5
      %v3741 = vrot.slane %v3740, 4
      %v3742 = vrot.slane %v3431, 5
      %v3743 = vsel %vm2403, %v3741, %v3742
      %v3744 = vrot.slane %v3711, 5
      %v3745 = vrot.slane %v3744, 4
      %v3746 = vrot.slane %v3433, 5
      %v3747 = vsel %vm2403, %v3745, %v3746
      %v3748 = vrot.slane %v3712, 5
      %v3749 = vrot.slane %v3748, 4
      %v3750 = vrot.slane %v3435, 5
      %v3751 = vsel %vm2403, %v3749, %v3750
      %v3752 = vrot.slane %v3713, 5
      %v3753 = vrot.slane %v3752, 4
      %v3754 = vrot.slane %v3437, 5
      %v3755 = vsel %vm2403, %v3753, %v3754
      %v3756 = vrot.slane %v3714, 5
      %v3757 = vrot.slane %v3756, 4
      %v3758 = vrot.slane %v3439, 5
      %v3759 = vsel %vm2403, %v3757, %v3758
      %v3760 = vrot.slane %v3715, 5
      %v3761 = vrot.slane %v3760, 4
      %v3762 = vrot.slane %v3441, 5
      %v3763 = vsel %vm2403, %v3761, %v3762
      %s3764 = scalar_lea.vmem %s3, 512
      %v3765 = vld [vmem:[%s3764] sm:$0xf]
      %v3766 = vld [vmem:[%s3764 + $0x4] sm:$0xf]
      %v3767 = vld [vmem:[%s3764 + $0x8] sm:$0xf]
      %v3768 = vld [vmem:[%s3764 + $0xc] sm:$0xf]
      %v3769 = vld [vmem:[%s3764 + $0x10] sm:$0xf]
      %v3770 = vld [vmem:[%s3764 + $0x14] sm:$0xf]
      %v3771 = vld [vmem:[%s3764 + $0x18] sm:$0xf]
      %v3772 = vld [vmem:[%s3764 + $0x1c] sm:$0xf]
      %v3773 = vld [vmem:[%s3764 + $0x20] sm:$0xf]
      %v3774 = vld [vmem:[%s3764 + $0x24] sm:$0xf]
      %v3775 = vld [vmem:[%s3764 + $0x28] sm:$0xf]
      %v3776 = vld [vmem:[%s3764 + $0x2c] sm:$0xf]
      %v3777 = vld [vmem:[%s3764 + $0x30] sm:$0xf]
      %v3778 = vld [vmem:[%s3764 + $0x34] sm:$0xf]
      %v3779 = vld [vmem:[%s3764 + $0x38] sm:$0xf]
      %v3780 = vld [vmem:[%s3764 + $0x3c] sm:$0xf]
      %v3781 = vunpack.c.l.b16 %v3735
      %v3782 = vunpack.c.l.b16 %v3739
      %v3783 = vunpack.c.l.b16 %v3743
      %v3784 = vunpack.c.l.b16 %v3747
      %v3785 = vunpack.c.l.b16 %v3751
      %v3786 = vunpack.c.l.b16 %v3755
      %v3787 = vunpack.c.l.b16 %v3759
      %v3788 = vunpack.c.l.b16 %v3763
      %v3789 = vpack.c.b16 %v3782, %v3781
      %v3790 = vpack.c.b16 %v3784, %v3783
      %v3791 = vpack.c.b16 %v3786, %v3785
      %v3792 = vpack.c.b16 %v3788, %v3787
      %v3813 = vunpack.c.l.b16 %v3765
      %v3814 = vunpack.c.l.b16 %v3766
      %v3815 = vunpack.c.l.b16 %v3767
      %v3816 = vunpack.c.l.b16 %v3768
      %v3817 = vunpack.c.l.b16 %v3769
      %v3818 = vunpack.c.l.b16 %v3770
      %v3819 = vunpack.c.l.b16 %v3771
      %v3820 = vunpack.c.l.b16 %v3772
      %v3821 = vunpack.c.l.b16 %v3773
      %v3822 = vunpack.c.l.b16 %v3774
      %v3823 = vunpack.c.l.b16 %v3775
      %v3824 = vunpack.c.l.b16 %v3776
      %v3825 = vunpack.c.l.b16 %v3777
      %v3826 = vunpack.c.l.b16 %v3778
      %v3827 = vunpack.c.l.b16 %v3779
      %v3828 = vunpack.c.l.b16 %v3780
      %v3829 = vpack.c.b16 %v3814, %v3813
      %v3830 = vpack.c.b16 %v3816, %v3815
      %v3831 = vpack.c.b16 %v3818, %v3817
      %v3832 = vpack.c.b16 %v3820, %v3819
      %v3833 = vpack.c.b16 %v3822, %v3821
      %v3834 = vpack.c.b16 %v3824, %v3823
      %v3835 = vpack.c.b16 %v3826, %v3825
      %v3836 = vpack.c.b16 %v3828, %v3827
      %3845 = vmatprep.subr.bf16.mxu0 0
      %3846 = vmatpush1.bf16.msra.mxu0 %v3829
      %3847 = vmatprep.subr.bf16.mxu0 0
      %3848 = vmatpush1.bf16.msra.mxu0 %v3830
      %3849 = vmatprep.subr.bf16.mxu0 0
      %3850 = vmatpush1.bf16.msra.mxu0 %v3831
      %3851 = vmatprep.subr.bf16.mxu0 0
      %3852 = vmatpush1.bf16.msra.mxu0 %v3832
      %3853 = vmatprep.subr.bf16.mxu0 0
      %3854 = vmatpush1.bf16.msra.mxu0 %v3833
      %3855 = vmatprep.subr.bf16.mxu0 0
      %3856 = vmatpush1.bf16.msra.mxu0 %v3834
      %3857 = vmatprep.subr.bf16.mxu0 0
      %3858 = vmatpush1.bf16.msra.mxu0 %v3835
      %3859 = vmatprep.subr.bf16.mxu0 0
      %3860 = vmatpush1.bf16.msra.mxu0 %v3836
      %3861 = vmatprep.subr.bf16.mxu0 0
      %3862 = vmatpush1.bf16.msra.mxu0 0
      %3863 = vmatprep.subr.bf16.mxu0 0
      %3864 = vmatpush1.bf16.msra.mxu0 0
      %3865 = vmatprep.subr.bf16.mxu0 0
      %3866 = vmatpush1.bf16.msra.mxu0 0
      %3867 = vmatprep.subr.bf16.mxu0 0
      %3868 = vmatpush1.bf16.msra.mxu0 0
      %3869 = vmatprep.subr.bf16.mxu0 0
      %3870 = vmatpush1.bf16.msra.mxu0 0
      %3871 = vmatprep.subr.bf16.mxu0 0
      %3872 = vmatpush1.bf16.msra.mxu0 0
      %3873 = vmatprep.subr.bf16.mxu0 0
      %3874 = vmatpush1.bf16.msra.mxu0 0
      %3875 = vmatprep.subr.bf16.mxu0 0
      %3876 = vmatpush1.bf16.msra.mxu0 0
      %3877 = vmatprep.mubr.bf16.mxu0 0
      %3878 = vmatmul.mubr.bf16.gmra.mrb[0].mxu0 %v3789
      %v3879 = vpop.f32.mrb[0].mxu0
      %v3880 = vadd.f32 0.0, %v3879
      %v3881 = vpop.f32.mrb[0].mxu0
      %v3882 = vpop.f32.mrb[0].mxu0
      %v3883 = vadd.f32 0.0, %v3882
      %v3884 = vpop.f32.mrb[0].mxu0
      %3885 = vmatprep.mubr.bf16.mxu0 0
      %3886 = vmatmul.mubr.bf16.gmra.mrb[0].mxu0 %v3790
      %v3887 = vpop.f32.mrb[0].mxu0
      %v3888 = vadd.f32 0.0, %v3887
      %v3889 = vpop.f32.mrb[0].mxu0
      %v3890 = vpop.f32.mrb[0].mxu0
      %v3891 = vadd.f32 0.0, %v3890
      %v3892 = vpop.f32.mrb[0].mxu0
      %3893 = vmatprep.mubr.bf16.mxu0 0
      %3894 = vmatmul.mubr.bf16.gmra.mrb[0].mxu0 %v3791
      %v3895 = vpop.f32.mrb[0].mxu0
      %v3896 = vadd.f32 0.0, %v3895
      %v3897 = vpop.f32.mrb[0].mxu0
      %v3898 = vpop.f32.mrb[0].mxu0
      %v3899 = vadd.f32 0.0, %v3898
      %v3900 = vpop.f32.mrb[0].mxu0
      %3901 = vmatprep.mubr.bf16.mxu0 0
      %3902 = vmatmul.mubr.bf16.gmra.mrb[0].mxu0 %v3792
      %v3903 = vpop.f32.mrb[0].mxu0
      %v3904 = vadd.f32 0.0, %v3903
      %v3905 = vpop.f32.mrb[0].mxu0
      %v3906 = vpop.f32.mrb[0].mxu0
      %v3907 = vadd.f32 0.0, %v3906
      %v3908 = vpop.f32.mrb[0].mxu0
      %3909 = vdwg.mxu0
      %v3910 = vadd.f32 %v3700, %v3880
      %v3911 = vadd.f32 %v3701, %v3883
      %v3912 = vadd.f32 %v3702, %v3888
      %v3913 = vadd.f32 %v3703, %v3891
      %v3914 = vadd.f32 %v3704, %v3896
      %v3915 = vadd.f32 %v3705, %v3899
      %v3916 = vadd.f32 %v3706, %v3904
      %v3917 = vadd.f32 %v3707, %v3907
      %v3918 = vld [vmem:[%s1409 + $0x1] sm:$0xff]
      %v3919 = vld [vmem:[%s1409 + $0x11] sm:$0xff]
      %v3920 = vld [vmem:[%s1409 + $0x21] sm:$0xff]
      %v3921 = vld [vmem:[%s1409 + $0x31] sm:$0xff]
      %v3922 = vld [vmem:[%s1409 + $0x41] sm:$0xff]
      %v3923 = vld [vmem:[%s1409 + $0x51] sm:$0xff]
      %v3924 = vld [vmem:[%s1409 + $0x61] sm:$0xff]
      %v3925 = vld [vmem:[%s1409 + $0x71] sm:$0xff]
      %v3927 = vlaneseq
      %v3928 = vshrl.u32 %v3927, 7
      %v3929 = vsub.s32 0, %v3928
      %v3930 = vrot.slane %v1944, %v3929
      %v3932 = vadd.f32 %v3910, %v3930
      %v3933 = vadd.f32 %v3911, %v3930
      %v3934 = vadd.f32 %v3912, %v3930
      %v3935 = vadd.f32 %v3913, %v3930
      %v3936 = vadd.f32 %v3914, %v3930
      %v3937 = vadd.f32 %v3915, %v3930
      %v3938 = vadd.f32 %v3916, %v3930
      %v3939 = vadd.f32 %v3917, %v3930
      %v3940 = vadd.f32 %v3932, %v3918
      %v3941 = vadd.f32 %v3933, %v3919
      %v3942 = vadd.f32 %v3934, %v3920
      %v3943 = vadd.f32 %v3935, %v3921
      %v3944 = vadd.f32 %v3936, %v3922
      %v3945 = vadd.f32 %v3937, %v3923
      %v3946 = vadd.f32 %v3938, %v3924
      %v3947 = vadd.f32 %v3939, %v3925
      %vm3948 = vcmp.gt.f32.partialorder %v3940, 0.0
      %vm3949 = vcmp.gt.f32.partialorder %v3941, 0.0
      %vm3950 = vcmp.gt.f32.partialorder %v3942, 0.0
      %vm3951 = vcmp.gt.f32.partialorder %v3943, 0.0
      %vm3952 = vcmp.gt.f32.partialorder %v3944, 0.0
      %vm3953 = vcmp.gt.f32.partialorder %v3945, 0.0
      %vm3954 = vcmp.gt.f32.partialorder %v3946, 0.0
      %vm3955 = vcmp.gt.f32.partialorder %v3947, 0.0
      %v3956 = vmul.f32 %v3940, 0.01
      %v3957 = vmul.f32 %v3941, 0.01
      %v3958 = vmul.f32 %v3942, 0.01
      %v3959 = vmul.f32 %v3943, 0.01
      %v3960 = vmul.f32 %v3944, 0.01
      %v3961 = vmul.f32 %v3945, 0.01
      %v3962 = vmul.f32 %v3946, 0.01
      %v3963 = vmul.f32 %v3947, 0.01
      %v3964 = vsel %vm3948, %v3940, %v3956
      %v3965 = vsel %vm3949, %v3941, %v3957
      %v3966 = vsel %vm3950, %v3942, %v3958
      %v3967 = vsel %vm3951, %v3943, %v3959
      %v3968 = vsel %vm3952, %v3944, %v3960
      %v3969 = vsel %vm3953, %v3945, %v3961
      %v3970 = vsel %vm3954, %v3946, %v3962
      %v3971 = vsel %vm3955, %v3947, %v3963
      %s3972 = smul.u32 0, 8
      %s3973 = scalar_lea.vmem %s224, %s3972
      %3974 = vst [vmem:[%s3973] sm:$0xff] %v3964
      %3975 = vst [vmem:[%s3973 + $0x8] sm:$0xff] %v3965
      %3976 = vst [vmem:[%s3973 + $0x10] sm:$0xff] %v3966
      %3977 = vst [vmem:[%s3973 + $0x18] sm:$0xff] %v3967
      %3978 = vst [vmem:[%s3973 + $0x20] sm:$0xff] %v3968
      %3979 = vst [vmem:[%s3973 + $0x28] sm:$0xff] %v3969
      %3980 = vst [vmem:[%s3973 + $0x30] sm:$0xff] %v3970
      %3981 = vst [vmem:[%s3973 + $0x38] sm:$0xff] %v3971
      %p3982 = scmp.lt.s32.totalorder %s16, 1
      %s3983 = scalar_select %p3982, %s16, 1
      %s3984 = smul.addr %s3983, 8
      %s3985 = smul.addr %s3984, 8
      %s3986 = scalar_lea.vmem %s5, %s3985
      // Predicated region
      $region41: #{resnet_conv_forward.1} parent=39 // pred_check
        %p3987 = pneg %p144
      $region42: #{resnet_conv_forward.1} parent=39 // pred_check_branch
        %3989 = sbr.rel (%p3987) target = $region44
      $region43: #{resnet_conv_forward.1} parent=39 // pred_region
        _
      $region44: #{resnet_conv_forward.1} parent=39 // pred_fallthru
        _
    $region40: #{resnet_conv_forward.1} parent=5 // pred_fallthru
      _
    %p3990 = scmp.le.s32.totalorder 2, %s11
    // Predicated region
    $region45: #{resnet_conv_forward.1} parent=5 // pred_check
      %p3991 = pneg %p3990
    $region46: #{resnet_conv_forward.1} parent=5 // pred_check_branch
      %3993 = sbr.rel (%p3991) target = $region48
    $region47: #{resnet_conv_forward.1} parent=5 // pred_region
      %s3994 = ssub.s32 %s11, 2
      // Predicated region
      $region49: #{resnet_conv_forward.1} parent=47 // pred_check
        %p3995 = pneg %p150
      $region50: #{resnet_conv_forward.1} parent=47 // pred_check_branch
        %3997 = sbr.rel (%p3995) target = $region52
      $region51: #{resnet_conv_forward.1} parent=47 // pred_region
        %p3998 = scmp.lt.s32.totalorder %s17, 1
        %s3999 = scalar_select %p3998, %s17, 1
        %s4000 = smul.addr %s3999, 8
        %s4001 = smul.addr %s4000, 8
        %s4002 = scalar_lea.vmem %s5, %s4001
      $region52: #{resnet_conv_forward.1} parent=47 // pred_fallthru
        _
    $region48: #{resnet_conv_forward.1} parent=5 // pred_fallthru
      _
  $region6: #{resnet_conv_forward.1} parent=0 // loop_footer
    %s15 = sadd.s32 1, %s11
  $region7: #{resnet_conv_forward.1} parent=0 // loop_footer_branch
    %10 = sbr.rel target = $region3
  $region8: #{resnet_conv_forward.1} parent=0 // loop_exit
    _

</llo_original>
